<compile_context>
chip_gen: v6e
topology: v6e:2x2x1
jax: 0.10.0
libtpu: 0.0.40
codegen_flags: <defaults>
</compile_context>

<pallas_src>
import functools

import jax
import jax.numpy as jnp
from jax.experimental import pallas as pl
from jax.experimental.pallas import tpu as pltpu


def _round_up(x, m):
    return ((x + m - 1) // m) * m


def luong_decoder_kernel(
    # scalar prefetch
    ids_ref,                     # (T, Bp) int32 token ids, SMEM
    # inputs
    emb_hbm,                     # (num_words, Hp) f32 embedding table, HBM (pl.ANY)
    h0_ref,                      # (Bp, Hp) f32 initial hidden (resident)
    enc_ref,                     # (Bp, Lp, Hp) f32 encoder states (resident)
    wi_ref,                      # (Hp, 3Hp) fused W_ih (resident)
    wh_ref,                      # (Hp, 3Hp) fused W_hh (resident)
    wcat_ref,                    # (2Hp, Hp) packed W_cat (resident)
    wout_ref,                    # (Hp, Vp) f32 W_out (resident)
    bias_ref,                    # (1, 7Hp+Vp) f32 packed [bi|bh|bcat|bout]
    # outputs
    out_ref,                     # (1, Bp, Vp) f32 per-step probs
    hid_ref,                     # (Bp, Hp) f32 final hidden (resident)
    # scratch
    emb_buf,                     # (2, Bp, Hp) f32 double-buffered embedded rows
    h_carry,                     # (Bp, Hp) f32 hidden-state carry
    copy_sem,                    # DMA semaphores (2, Bp)
    *, L_true, V_true,
):
    f32 = jnp.float32
    Bp, Hp = h_carry.shape
    Vp = out_ref.shape[2]
    t = pl.program_id(0)
    num_steps = pl.num_programs(0)

    def fetch_embeddings(step, slot):
        # Gather the Bp embedding rows for `step` into emb_buf[slot] (row DMAs).
        for b in range(Bp):
            pltpu.make_async_copy(
                emb_hbm.at[ids_ref[step, b]],
                emb_buf.at[slot, b],
                copy_sem.at[slot, b],
            ).start()

    def wait_embeddings(slot):
        for b in range(Bp):
            pltpu.make_async_copy(
                emb_hbm.at[0], emb_buf.at[slot, b], copy_sem.at[slot, b],
            ).wait()

    @pl.when(t == 0)
    def _():
        h_carry[...] = h0_ref[...]
        fetch_embeddings(0, 0)                      # cold-start fetch for step 0

    @pl.when(t + 1 < num_steps)
    def _():
        fetch_embeddings(t + 1, (t + 1) & 1)        # prefetch next step's rows

    # ---- packed biases: static slices at 128-lane boundaries ----
    bi = bias_ref[:, 0:3 * Hp]
    bh = bias_ref[:, 3 * Hp:6 * Hp]
    bcat = bias_ref[:, 6 * Hp:7 * Hp]
    bout = bias_ref[:, 7 * Hp:7 * Hp + Vp]

    h = h_carry[...]                                # (Bp, Hp) f32

    # ---- GRU cell (PyTorch gate order r, z, n), fused gate matmuls ----
    # gh first: it does not need the embedded input, so the embedding DMAs for
    # this step land underneath it.
    gh = jnp.dot(h.astype(wh_ref.dtype), wh_ref[...],
                 preferred_element_type=f32) + bh                   # (Bp, 3Hp)

    wait_embeddings(t & 1)
    x = emb_buf[t & 1]                                              # (Bp, Hp) f32

    gi = jnp.dot(x.astype(wi_ref.dtype), wi_ref[...],
                 preferred_element_type=f32) + bi                   # (Bp, 3Hp)

    r = jax.nn.sigmoid(gi[:, :Hp] + gh[:, :Hp])
    z = jax.nn.sigmoid(gi[:, Hp:2 * Hp] + gh[:, Hp:2 * Hp])
    n = jnp.tanh(gi[:, 2 * Hp:3 * Hp] + r * gh[:, 2 * Hp:3 * Hp])
    h_new = (1.0 - z) * n + z * h                                   # (Bp, Hp)

    # ---- Luong dot attention: VPU multiply + cross-lane reduce (no q=1 MXU pushes)
    enc = enc_ref[...]                                              # (Bp, Lp, Hp)
    scores = jnp.sum(enc * h_new[:, None, :], axis=-1)              # (Bp, Lp)
    Lp = scores.shape[-1]
    if L_true < Lp:                 # mask padded key positions out of the softmax
        l_ids = jax.lax.broadcasted_iota(jnp.int32, (1, Lp), 1)
        scores = jnp.where(l_ids < L_true, scores, -1e30)
    scores = scores - jnp.max(scores, axis=-1, keepdims=True)
    e = jnp.exp(scores)
    attn = e * pl.reciprocal(jnp.sum(e, axis=-1, keepdims=True), approx=True)

    context = jnp.sum(attn[:, :, None] * enc, axis=1)               # (Bp, Hp)

    # ---- concat-free Linear(2H -> H): two matmuls, shared f32 accumulation ----
    wc_dt = wcat_ref.dtype
    pre = (jnp.dot(h_new.astype(wc_dt), wcat_ref[0:Hp, :],
                   preferred_element_type=f32)
           + jnp.dot(context.astype(wc_dt), wcat_ref[Hp:2 * Hp, :],
                     preferred_element_type=f32)
           + bcat)
    concat_out = jnp.tanh(pre)                                      # (Bp, Hp)

    # ---- output projection (f32) + EXACT softmax over the vocab ----
    logits = jnp.dot(concat_out, wout_ref[...],
                     preferred_element_type=f32) + bout             # (Bp, Vp)
    if V_true < Vp:
        v_ids = jax.lax.broadcasted_iota(jnp.int32, (1, Vp), 1)
        logits = jnp.where(v_ids < V_true, logits, -1e30)
    logits = logits - jnp.max(logits, axis=-1, keepdims=True)
    el = jnp.exp(logits)
    out_ref[0] = el / jnp.sum(el, axis=-1, keepdims=True)

    h_carry[...] = h_new
    hid_ref[...] = h_new


class LuongAttnDecoderParams:
    """Raw parameters with the PyTorch module's shapes (deterministic init)."""

    def __init__(self, key, hidden_size, output_size, vocab_size):
        self.H = hidden_size
        self.V = output_size
        ks = jax.random.split(key, 9)
        s = 0.1
        H, V = hidden_size, output_size
        self.emb_table = jax.random.normal(ks[0], (vocab_size, H), jnp.float32) * s
        self.w_ih = jax.random.normal(ks[1], (3 * H, H), jnp.float32) * s
        self.w_hh = jax.random.normal(ks[2], (3 * H, H), jnp.float32) * s
        self.b_ih = jax.random.normal(ks[3], (3 * H,), jnp.float32) * s
        self.b_hh = jax.random.normal(ks[4], (3 * H,), jnp.float32) * s
        self.w_cat = jax.random.normal(ks[5], (H, 2 * H), jnp.float32) * s
        self.b_cat = jax.random.normal(ks[6], (H,), jnp.float32) * s
        self.w_out = jax.random.normal(ks[7], (V, H), jnp.float32) * s
        self.b_out = jax.random.normal(ks[8], (V,), jnp.float32) * s


class PreparedLuongDecoder:
    """Padded / fused / cast weight layouts, built ONCE (not per forward call).

    Padded gate-bias / weight lanes are exactly zero by construction (zeros()
    then .set of the valid slices) — the kernel's padding math relies on that.
    """

    def __init__(self, params, weight_dtype=jnp.bfloat16):
        H, V = params.H, params.V
        Hp, Vp = _round_up(H, 128), _round_up(V, 128)
        self.H, self.V, self.Hp, self.Vp = H, V, Hp, Vp

        # Embedding table padded on the feature axis; rows DMA-gathered in-kernel.
        self.emb_p = jnp.pad(params.emb_table, ((0, 0), (0, Hp - H)))

        # Fused GRU gate weights (Hp, 3Hp): gate g's HxH block at lanes [g*Hp, g*Hp+H).
        def fused_gate_weight(w):                 # w: (3H, H) PyTorch row-stacked gates
            out = jnp.zeros((Hp, 3 * Hp), jnp.float32)
            for g in range(3):
                out = out.at[:H, g * Hp:g * Hp + H].set(w[g * H:(g + 1) * H, :].T)
            return out.astype(weight_dtype)

        self.wi_p = fused_gate_weight(params.w_ih)
        self.wh_p = fused_gate_weight(params.w_hh)

        # Packed concat weight (2Hp, Hp): rows [0,Hp) hit h_new, rows [Hp,2Hp) hit context.
        wcat = jnp.zeros((2 * Hp, Hp), jnp.float32)
        wcat = wcat.at[:H, :H].set(params.w_cat[:, :H].T)
        wcat = wcat.at[Hp:Hp + H, :H].set(params.w_cat[:, H:].T)
        self.wcat_p = wcat.astype(weight_dtype)

        # Output projection kept f32 (final projection before the prob softmax).
        self.wout_p = jnp.zeros((Hp, Vp), jnp.float32).at[:H, :V].set(params.w_out.T)

        # All biases packed into one f32 operand: [bi (3Hp) | bh (3Hp) | bcat (Hp) | bout (Vp)]
        bias = jnp.zeros((1, 7 * Hp + Vp), jnp.float32)
        for g in range(3):
            bias = bias.at[0, g * Hp:g * Hp + H].set(params.b_ih[g * H:(g + 1) * H])
            bias = bias.at[0, 3 * Hp + g * Hp:3 * Hp + g * Hp + H].set(
                params.b_hh[g * H:(g + 1) * H])
        bias = bias.at[0, 6 * Hp:6 * Hp + H].set(params.b_cat)
        bias = bias.at[0, 7 * Hp:7 * Hp + V].set(params.b_out)
        self.bias_p = bias


def luong_decoder_decode(prep, input_steps, last_hidden, encoder_output):
    """Run T teacher-forced decode steps in ONE pallas_call (grid over time).

    input_steps:    (T, B) int32 token ids
    last_hidden:    (1, B, H) f32 initial GRU hidden state
    encoder_output: (L, B, H) f32
    returns: (probs (T, B, V), final hidden (1, B, H))
    """
    H, V, Hp, Vp = prep.H, prep.V, prep.Hp, prep.Vp
    T, B = input_steps.shape
    L = encoder_output.shape[0]
    Bp = _round_up(B, 8)
    Lp = _round_up(L, 8)

    # Per-call activation padding (weights were prepared/padded once).
    ids_p = jnp.pad(input_steps.astype(jnp.int32), ((0, 0), (0, Bp - B)))
    h0_p = jnp.pad(last_hidden[0], ((0, Bp - B), (0, Hp - H)))
    enc_p = jnp.pad(jnp.transpose(encoder_output, (1, 0, 2)),
                    ((0, Bp - B), (0, Lp - L), (0, Hp - H)))

    blocked = (h0_p, enc_p, prep.wi_p, prep.wh_p, prep.wcat_p, prep.wout_p, prep.bias_p)

    # VMEM budget from actual buffer sizes (double-buffer headroom), v7x-safe cap.
    vmem_bytes = 2 * sum(int(a.size) * a.dtype.itemsize for a in blocked)
    vmem_bytes += 4 * (Bp * Vp + Bp * Hp) * 4          # outputs (double-buffered)
    vmem_bytes += (2 * Bp * Hp + Bp * Hp) * 4          # scratch
    vmem_limit = int(min(48 * 1024 * 1024, max(4 * 1024 * 1024, vmem_bytes + (1 << 20))))

    grid_spec = pltpu.PrefetchScalarGridSpec(
        num_scalar_prefetch=1,
        grid=(T,),
        in_specs=[
            pl.BlockSpec(memory_space=pl.ANY),                       # emb table (HBM)
            pl.BlockSpec((Bp, Hp), lambda t, ids: (0, 0)),           # h0 (resident)
            pl.BlockSpec((Bp, Lp, Hp), lambda t, ids: (0, 0, 0)),    # encoder states
            pl.BlockSpec((Hp, 3 * Hp), lambda t, ids: (0, 0)),       # fused W_ih
            pl.BlockSpec((Hp, 3 * Hp), lambda t, ids: (0, 0)),       # fused W_hh
            pl.BlockSpec((2 * Hp, Hp), lambda t, ids: (0, 0)),       # packed W_cat
            pl.BlockSpec((Hp, Vp), lambda t, ids: (0, 0)),           # W_out (f32)
            pl.BlockSpec((1, 7 * Hp + Vp), lambda t, ids: (0, 0)),   # packed biases
        ],
        out_specs=(
            pl.BlockSpec((1, Bp, Vp), lambda t, ids: (t, 0, 0)),     # per-step probs
            pl.BlockSpec((Bp, Hp), lambda t, ids: (0, 0)),           # final hidden
        ),
        scratch_shapes=[
            pltpu.VMEM((2, Bp, Hp), jnp.float32),      # double-buffered embeddings
            pltpu.VMEM((Bp, Hp), jnp.float32),         # hidden-state carry
            pltpu.SemaphoreType.DMA((2, Bp)),          # per-row gather semaphores
        ],
    )

    out_p, hid_p = pl.pallas_call(
        functools.partial(luong_decoder_kernel, L_true=L, V_true=V),
        out_shape=(
            jax.ShapeDtypeStruct((T, Bp, Vp), jnp.float32),
            jax.ShapeDtypeStruct((Bp, Hp), jnp.float32),
        ),
        grid_spec=grid_spec,
        compiler_params=pltpu.CompilerParams(
            dimension_semantics=("arbitrary",),        # sequential: hidden carry
            vmem_limit_bytes=vmem_limit,
        ),
    )(ids_p, prep.emb_p, h0_p, enc_p, prep.wi_p, prep.wh_p, prep.wcat_p,
      prep.wout_p, prep.bias_p)

    probs = out_p[:, :B, :V]
    hidden = hid_p[:B, :H][None]                       # (1, B, H)
    return probs, hidden


def luong_decoder_forward(prep, input_step, last_hidden, encoder_output):
    """Single decode step, matching the PyTorch module's forward signature.

    input_step: (1, B) int32 -> (output (B, V) softmax probs, hidden (1, B, H)).
    """
    probs, hidden = luong_decoder_decode(prep, input_step, last_hidden, encoder_output)
    return probs[0], hidden


def _reference_decode(params, input_steps, last_hidden, encoder_output):
    """Pure-JAX f32 reference mirroring the PyTorch math, step by step."""
    H = params.H
    h = last_hidden[0]
    outs = []
    for t in range(input_steps.shape[0]):
        x = params.emb_table[input_steps[t]]
        gi = x @ params.w_ih.T + params.b_ih
        gh = h @ params.w_hh.T + params.b_hh
        r = jax.nn.sigmoid(gi[:, :H] + gh[:, :H])
        z = jax.nn.sigmoid(gi[:, H:2 * H] + gh[:, H:2 * H])
        n = jnp.tanh(gi[:, 2 * H:] + r * gh[:, 2 * H:])
        h = (1 - z) * n + z * h                                     # (B, H)
        scores = jnp.sum(h[None, :, :] * encoder_output, axis=2)    # (L, B)
        attn = jax.nn.softmax(scores.T, axis=1)                     # (B, L)
        context = jnp.einsum('bl,lbh->bh', attn, encoder_output)
        cat = jnp.concatenate([h, context], axis=1)
        co = jnp.tanh(cat @ params.w_cat.T + params.b_cat)
        outs.append(jax.nn.softmax(co @ params.w_out.T + params.b_out, axis=1))
    return jnp.stack(outs), h[None]


if __name__ == "__main__":
    # Small shapes consistent with the module: hidden=32, batch=4, seq=8, vocab=16
    hidden_size = 32
    batch = 4
    seq_len = 8
    vocab_size = 16          # voc.num_words -> embedding rows AND output_size
    num_steps = 5            # decode steps amortized in one pallas_call

    key = jax.random.PRNGKey(0)
    kp, k1, k2, k3 = jax.random.split(key, 4)
    params = LuongAttnDecoderParams(kp, hidden_size, vocab_size, vocab_size)
    prep = PreparedLuongDecoder(params)            # weight packing done ONCE

    input_steps = jax.random.randint(k1, (num_steps, batch), 0, vocab_size,
                                     dtype=jnp.int32)
    last_hidden = jax.random.normal(k2, (1, batch, hidden_size), jnp.float32)
    encoder_output = jax.random.normal(k3, (seq_len, batch, hidden_size), jnp.float32)

    # Multi-step decode: weights resident across the time grid.
    outs, hidden = luong_decoder_decode(prep, input_steps, last_hidden, encoder_output)
    outs = jax.block_until_ready(outs)
    hidden = jax.block_until_ready(hidden)

    # Single-step call matching the PyTorch forward signature.
    out1, hid1 = luong_decoder_forward(prep, input_steps[:1], last_hidden, encoder_output)
    out1 = jax.block_until_ready(out1)

    ref_outs, ref_hidden = _reference_decode(params, input_steps, last_hidden,
                                             encoder_output)

    assert outs.shape == (num_steps, batch, vocab_size)
    assert hidden.shape == (1, batch, hidden_size)
    assert out1.shape == (batch, vocab_size)
    # bf16 GRU/concat weights with f32 accumulation -> slightly loose tolerance.
    assert jnp.allclose(outs, ref_outs, atol=1e-2, rtol=1e-2), \
        float(jnp.max(jnp.abs(outs - ref_outs)))
    assert jnp.allclose(hidden, ref_hidden, atol=1e-2, rtol=1e-2), \
        float(jnp.max(jnp.abs(hidden - ref_hidden)))
    assert jnp.allclose(out1, ref_outs[0], atol=1e-2, rtol=1e-2), \
        float(jnp.max(jnp.abs(out1 - ref_outs[0])))
    # Exact divide on the vocab softmax -> rows sum to 1 at f32 precision.
    assert jnp.allclose(jnp.sum(outs, axis=-1), 1.0, atol=1e-5)

    print("KERNEL_OK")
</pallas_src>

<mosaic_0001>
module attributes {stable_mosaic.version = 11 : i64} {
  func.func @luong_decoder_kernel(%arg0: i32, %arg1: memref<5x8xi32, #tpu.memory_space<smem>>, %arg2: memref<16x128xf32, #tpu.memory_space<any>>, %arg3: memref<8x128xf32, #tpu.memory_space<vmem>>, %arg4: memref<8x8x128xf32, #tpu.memory_space<vmem>>, %arg5: memref<128x384xbf16, #tpu.memory_space<vmem>>, %arg6: memref<128x384xbf16, #tpu.memory_space<vmem>>, %arg7: memref<256x128xbf16, #tpu.memory_space<vmem>>, %arg8: memref<128x128xf32, #tpu.memory_space<vmem>>, %arg9: memref<1x1024xf32, #tpu.memory_space<vmem>>, %arg10: memref<1x8x128xf32, #tpu.memory_space<vmem>>, %arg11: memref<8x128xf32, #tpu.memory_space<vmem>>, %arg12: memref<2x8x128xf32, #tpu.memory_space<vmem>>, %arg13: memref<8x128xf32, #tpu.memory_space<vmem>>, %arg14: memref<2x8x!tpu.dma_semaphore, #tpu.memory_space<semaphore_mem>>) attributes {dimension_semantics = [#tpu.dimension_semantics<arbitrary>], iteration_bounds = array<i64: 5>, scalar_prefetch = 1 : i64, scratch_operands = 3 : i64, tpu.core_type = #tpu.core_type<tc>, window_params = [{}, {pipeline_mode = #tpu.pipeline_mode<synchronous>, transform_indices = @transform_1, window_bounds = array<i64: 8, 128>}, {pipeline_mode = #tpu.pipeline_mode<synchronous>, transform_indices = @transform_2, window_bounds = array<i64: 8, 8, 128>}, {pipeline_mode = #tpu.pipeline_mode<synchronous>, transform_indices = @transform_3, window_bounds = array<i64: 128, 384>}, {pipeline_mode = #tpu.pipeline_mode<synchronous>, transform_indices = @transform_4, window_bounds = array<i64: 128, 384>}, {pipeline_mode = #tpu.pipeline_mode<synchronous>, transform_indices = @transform_5, window_bounds = array<i64: 256, 128>}, {pipeline_mode = #tpu.pipeline_mode<synchronous>, transform_indices = @transform_6, window_bounds = array<i64: 128, 128>}, {pipeline_mode = #tpu.pipeline_mode<synchronous>, transform_indices = @transform_7, window_bounds = array<i64: 1, 1024>}, {transform_indices = @transform_8, window_bounds = array<i64: 1, 8, 128>}, {pipeline_mode = #tpu.pipeline_mode<synchronous>, transform_indices = @transform_9, window_bounds = array<i64: 8, 128>}]} {
    %c0_i32 = arith.constant 0 : i32
    %0 = arith.cmpi eq, %arg0, %c0_i32 : i32
    %1 = arith.extui %0 : i1 to i32
    %c0_i32_0 = arith.constant 0 : i32
    %2 = arith.cmpi ne, %1, %c0_i32_0 : i32
    scf.if %2 {
      %c0_80 = arith.constant 0 : index
      %c0_81 = arith.constant 0 : index
      %155 = vector.load %arg3[%c0_80, %c0_81] : memref<8x128xf32, #tpu.memory_space<vmem>>, vector<8x128xf32>
      %c0_82 = arith.constant 0 : index
      %c0_83 = arith.constant 0 : index
      %156 = vector.load %arg13[%c0_82, %c0_83] : memref<8x128xf32, #tpu.memory_space<vmem>>, vector<8x128xf32>
      tpu.vector_store %arg13[%c0_82, %c0_83], %155 {strides = array<i32>} : memref<8x128xf32, #tpu.memory_space<vmem>>, vector<8x128xf32>,
      %c0_84 = arith.constant 0 : index
      %c0_85 = arith.constant 0 : index
      %157 = memref.load %arg1[%c0_84, %c0_85] : memref<5x8xi32, #tpu.memory_space<smem>>
      %c0_i32_86 = arith.constant 0 : i32
      %c0_i32_87 = arith.constant 0 : i32
      %c0_i32_88 = arith.constant 0 : i32
      %c0_i32_89 = arith.constant 0 : i32
      %c0_i32_90 = arith.constant 0 : i32
      %158 = tpu.memref_slice %arg2[%157, %c0_i32_90] : memref<16x128xf32, #tpu.memory_space<any>> -> memref<1x128xf32, #tpu.memory_space<any>>
      %159 = tpu.memref_squeeze %158 : memref<1x128xf32, #tpu.memory_space<any>> -> memref<128xf32, #tpu.memory_space<any>>
      %c0_i32_91 = arith.constant 0 : i32
      %160 = tpu.memref_slice %arg12[%c0_i32_86, %c0_i32_87, %c0_i32_91] : memref<2x8x128xf32, #tpu.memory_space<vmem>> -> memref<1x1x128xf32, #tpu.memory_space<vmem>>
      %161 = tpu.memref_squeeze %160 : memref<1x1x128xf32, #tpu.memory_space<vmem>> -> memref<128xf32, #tpu.memory_space<vmem>>
      %162 = tpu.memref_slice %arg14[%c0_i32_88, %c0_i32_89] : memref<2x8x!tpu.dma_semaphore, #tpu.memory_space<semaphore_mem>> -> memref<1x1x!tpu.dma_semaphore, #tpu.memory_space<semaphore_mem>>
      %163 = tpu.memref_squeeze %162 : memref<1x1x!tpu.dma_semaphore, #tpu.memory_space<semaphore_mem>> -> memref<!tpu.dma_semaphore, #tpu.memory_space<semaphore_mem>>
      tpu.enqueue_dma source(%159 : memref<128xf32, #tpu.memory_space<any>>) target(%161 : memref<128xf32, #tpu.memory_space<vmem>>) target_semaphore(%163 : memref<!tpu.dma_semaphore, #tpu.memory_space<semaphore_mem>>)
      %c0_92 = arith.constant 0 : index
      %c1 = arith.constant 1 : index
      %164 = memref.load %arg1[%c0_92, %c1] : memref<5x8xi32, #tpu.memory_space<smem>>
      %c0_i32_93 = arith.constant 0 : i32
      %c1_i32_94 = arith.constant 1 : i32
      %c0_i32_95 = arith.constant 0 : i32
      %c1_i32_96 = arith.constant 1 : i32
      %c0_i32_97 = arith.constant 0 : i32
      %165 = tpu.memref_slice %arg2[%164, %c0_i32_97] : memref<16x128xf32, #tpu.memory_space<any>> -> memref<1x128xf32, #tpu.memory_space<any>>
      %166 = tpu.memref_squeeze %165 : memref<1x128xf32, #tpu.memory_space<any>> -> memref<128xf32, #tpu.memory_space<any>>
      %c0_i32_98 = arith.constant 0 : i32
      %167 = tpu.memref_slice %arg12[%c0_i32_93, %c1_i32_94, %c0_i32_98] : memref<2x8x128xf32, #tpu.memory_space<vmem>> -> memref<1x1x128xf32, #tpu.memory_space<vmem>>
      %168 = tpu.memref_squeeze %167 : memref<1x1x128xf32, #tpu.memory_space<vmem>> -> memref<128xf32, #tpu.memory_space<vmem>>
      %169 = tpu.memref_slice %arg14[%c0_i32_95, %c1_i32_96] : memref<2x8x!tpu.dma_semaphore, #tpu.memory_space<semaphore_mem>> -> memref<1x1x!tpu.dma_semaphore, #tpu.memory_space<semaphore_mem>>
      %170 = tpu.memref_squeeze %169 : memref<1x1x!tpu.dma_semaphore, #tpu.memory_space<semaphore_mem>> -> memref<!tpu.dma_semaphore, #tpu.memory_space<semaphore_mem>>
      tpu.enqueue_dma source(%166 : memref<128xf32, #tpu.memory_space<any>>) target(%168 : memref<128xf32, #tpu.memory_space<vmem>>) target_semaphore(%170 : memref<!tpu.dma_semaphore, #tpu.memory_space<semaphore_mem>>)
      %c0_99 = arith.constant 0 : index
      %c2 = arith.constant 2 : index
      %171 = memref.load %arg1[%c0_99, %c2] : memref<5x8xi32, #tpu.memory_space<smem>>
      %c0_i32_100 = arith.constant 0 : i32
      %c2_i32_101 = arith.constant 2 : i32
      %c0_i32_102 = arith.constant 0 : i32
      %c2_i32_103 = arith.constant 2 : i32
      %c0_i32_104 = arith.constant 0 : i32
      %172 = tpu.memref_slice %arg2[%171, %c0_i32_104] : memref<16x128xf32, #tpu.memory_space<any>> -> memref<1x128xf32, #tpu.memory_space<any>>
      %173 = tpu.memref_squeeze %172 : memref<1x128xf32, #tpu.memory_space<any>> -> memref<128xf32, #tpu.memory_space<any>>
      %c0_i32_105 = arith.constant 0 : i32
      %174 = tpu.memref_slice %arg12[%c0_i32_100, %c2_i32_101, %c0_i32_105] : memref<2x8x128xf32, #tpu.memory_space<vmem>> -> memref<1x1x128xf32, #tpu.memory_space<vmem>>
      %175 = tpu.memref_squeeze %174 : memref<1x1x128xf32, #tpu.memory_space<vmem>> -> memref<128xf32, #tpu.memory_space<vmem>>
      %176 = tpu.memref_slice %arg14[%c0_i32_102, %c2_i32_103] : memref<2x8x!tpu.dma_semaphore, #tpu.memory_space<semaphore_mem>> -> memref<1x1x!tpu.dma_semaphore, #tpu.memory_space<semaphore_mem>>
      %177 = tpu.memref_squeeze %176 : memref<1x1x!tpu.dma_semaphore, #tpu.memory_space<semaphore_mem>> -> memref<!tpu.dma_semaphore, #tpu.memory_space<semaphore_mem>>
      tpu.enqueue_dma source(%173 : memref<128xf32, #tpu.memory_space<any>>) target(%175 : memref<128xf32, #tpu.memory_space<vmem>>) target_semaphore(%177 : memref<!tpu.dma_semaphore, #tpu.memory_space<semaphore_mem>>)
      %c0_106 = arith.constant 0 : index
      %c3 = arith.constant 3 : index
      %178 = memref.load %arg1[%c0_106, %c3] : memref<5x8xi32, #tpu.memory_space<smem>>
      %c0_i32_107 = arith.constant 0 : i32
      %c3_i32_108 = arith.constant 3 : i32
      %c0_i32_109 = arith.constant 0 : i32
      %c3_i32_110 = arith.constant 3 : i32
      %c0_i32_111 = arith.constant 0 : i32
      %179 = tpu.memref_slice %arg2[%178, %c0_i32_111] : memref<16x128xf32, #tpu.memory_space<any>> -> memref<1x128xf32, #tpu.memory_space<any>>
      %180 = tpu.memref_squeeze %179 : memref<1x128xf32, #tpu.memory_space<any>> -> memref<128xf32, #tpu.memory_space<any>>
      %c0_i32_112 = arith.constant 0 : i32
      %181 = tpu.memref_slice %arg12[%c0_i32_107, %c3_i32_108, %c0_i32_112] : memref<2x8x128xf32, #tpu.memory_space<vmem>> -> memref<1x1x128xf32, #tpu.memory_space<vmem>>
      %182 = tpu.memref_squeeze %181 : memref<1x1x128xf32, #tpu.memory_space<vmem>> -> memref<128xf32, #tpu.memory_space<vmem>>
      %183 = tpu.memref_slice %arg14[%c0_i32_109, %c3_i32_110] : memref<2x8x!tpu.dma_semaphore, #tpu.memory_space<semaphore_mem>> -> memref<1x1x!tpu.dma_semaphore, #tpu.memory_space<semaphore_mem>>
      %184 = tpu.memref_squeeze %183 : memref<1x1x!tpu.dma_semaphore, #tpu.memory_space<semaphore_mem>> -> memref<!tpu.dma_semaphore, #tpu.memory_space<semaphore_mem>>
      tpu.enqueue_dma source(%180 : memref<128xf32, #tpu.memory_space<any>>) target(%182 : memref<128xf32, #tpu.memory_space<vmem>>) target_semaphore(%184 : memref<!tpu.dma_semaphore, #tpu.memory_space<semaphore_mem>>)
      %c0_113 = arith.constant 0 : index
      %c4 = arith.constant 4 : index
      %185 = memref.load %arg1[%c0_113, %c4] : memref<5x8xi32, #tpu.memory_space<smem>>
      %c0_i32_114 = arith.constant 0 : i32
      %c4_i32_115 = arith.constant 4 : i32
      %c0_i32_116 = arith.constant 0 : i32
      %c4_i32_117 = arith.constant 4 : i32
      %c0_i32_118 = arith.constant 0 : i32
      %186 = tpu.memref_slice %arg2[%185, %c0_i32_118] : memref<16x128xf32, #tpu.memory_space<any>> -> memref<1x128xf32, #tpu.memory_space<any>>
      %187 = tpu.memref_squeeze %186 : memref<1x128xf32, #tpu.memory_space<any>> -> memref<128xf32, #tpu.memory_space<any>>
      %c0_i32_119 = arith.constant 0 : i32
      %188 = tpu.memref_slice %arg12[%c0_i32_114, %c4_i32_115, %c0_i32_119] : memref<2x8x128xf32, #tpu.memory_space<vmem>> -> memref<1x1x128xf32, #tpu.memory_space<vmem>>
      %189 = tpu.memref_squeeze %188 : memref<1x1x128xf32, #tpu.memory_space<vmem>> -> memref<128xf32, #tpu.memory_space<vmem>>
      %190 = tpu.memref_slice %arg14[%c0_i32_116, %c4_i32_117] : memref<2x8x!tpu.dma_semaphore, #tpu.memory_space<semaphore_mem>> -> memref<1x1x!tpu.dma_semaphore, #tpu.memory_space<semaphore_mem>>
      %191 = tpu.memref_squeeze %190 : memref<1x1x!tpu.dma_semaphore, #tpu.memory_space<semaphore_mem>> -> memref<!tpu.dma_semaphore, #tpu.memory_space<semaphore_mem>>
      tpu.enqueue_dma source(%187 : memref<128xf32, #tpu.memory_space<any>>) target(%189 : memref<128xf32, #tpu.memory_space<vmem>>) target_semaphore(%191 : memref<!tpu.dma_semaphore, #tpu.memory_space<semaphore_mem>>)
      %c0_120 = arith.constant 0 : index
      %c5 = arith.constant 5 : index
      %192 = memref.load %arg1[%c0_120, %c5] : memref<5x8xi32, #tpu.memory_space<smem>>
      %c0_i32_121 = arith.constant 0 : i32
      %c5_i32_122 = arith.constant 5 : i32
      %c0_i32_123 = arith.constant 0 : i32
      %c5_i32_124 = arith.constant 5 : i32
      %c0_i32_125 = arith.constant 0 : i32
      %193 = tpu.memref_slice %arg2[%192, %c0_i32_125] : memref<16x128xf32, #tpu.memory_space<any>> -> memref<1x128xf32, #tpu.memory_space<any>>
      %194 = tpu.memref_squeeze %193 : memref<1x128xf32, #tpu.memory_space<any>> -> memref<128xf32, #tpu.memory_space<any>>
      %c0_i32_126 = arith.constant 0 : i32
      %195 = tpu.memref_slice %arg12[%c0_i32_121, %c5_i32_122, %c0_i32_126] : memref<2x8x128xf32, #tpu.memory_space<vmem>> -> memref<1x1x128xf32, #tpu.memory_space<vmem>>
      %196 = tpu.memref_squeeze %195 : memref<1x1x128xf32, #tpu.memory_space<vmem>> -> memref<128xf32, #tpu.memory_space<vmem>>
      %197 = tpu.memref_slice %arg14[%c0_i32_123, %c5_i32_124] : memref<2x8x!tpu.dma_semaphore, #tpu.memory_space<semaphore_mem>> -> memref<1x1x!tpu.dma_semaphore, #tpu.memory_space<semaphore_mem>>
      %198 = tpu.memref_squeeze %197 : memref<1x1x!tpu.dma_semaphore, #tpu.memory_space<semaphore_mem>> -> memref<!tpu.dma_semaphore, #tpu.memory_space<semaphore_mem>>
      tpu.enqueue_dma source(%194 : memref<128xf32, #tpu.memory_space<any>>) target(%196 : memref<128xf32, #tpu.memory_space<vmem>>) target_semaphore(%198 : memref<!tpu.dma_semaphore, #tpu.memory_space<semaphore_mem>>)
      %c0_127 = arith.constant 0 : index
      %c6 = arith.constant 6 : index
      %199 = memref.load %arg1[%c0_127, %c6] : memref<5x8xi32, #tpu.memory_space<smem>>
      %c0_i32_128 = arith.constant 0 : i32
      %c6_i32_129 = arith.constant 6 : i32
      %c0_i32_130 = arith.constant 0 : i32
      %c6_i32_131 = arith.constant 6 : i32
      %c0_i32_132 = arith.constant 0 : i32
      %200 = tpu.memref_slice %arg2[%199, %c0_i32_132] : memref<16x128xf32, #tpu.memory_space<any>> -> memref<1x128xf32, #tpu.memory_space<any>>
      %201 = tpu.memref_squeeze %200 : memref<1x128xf32, #tpu.memory_space<any>> -> memref<128xf32, #tpu.memory_space<any>>
      %c0_i32_133 = arith.constant 0 : i32
      %202 = tpu.memref_slice %arg12[%c0_i32_128, %c6_i32_129, %c0_i32_133] : memref<2x8x128xf32, #tpu.memory_space<vmem>> -> memref<1x1x128xf32, #tpu.memory_space<vmem>>
      %203 = tpu.memref_squeeze %202 : memref<1x1x128xf32, #tpu.memory_space<vmem>> -> memref<128xf32, #tpu.memory_space<vmem>>
      %204 = tpu.memref_slice %arg14[%c0_i32_130, %c6_i32_131] : memref<2x8x!tpu.dma_semaphore, #tpu.memory_space<semaphore_mem>> -> memref<1x1x!tpu.dma_semaphore, #tpu.memory_space<semaphore_mem>>
      %205 = tpu.memref_squeeze %204 : memref<1x1x!tpu.dma_semaphore, #tpu.memory_space<semaphore_mem>> -> memref<!tpu.dma_semaphore, #tpu.memory_space<semaphore_mem>>
      tpu.enqueue_dma source(%201 : memref<128xf32, #tpu.memory_space<any>>) target(%203 : memref<128xf32, #tpu.memory_space<vmem>>) target_semaphore(%205 : memref<!tpu.dma_semaphore, #tpu.memory_space<semaphore_mem>>)
      %c0_134 = arith.constant 0 : index
      %c7 = arith.constant 7 : index
      %206 = memref.load %arg1[%c0_134, %c7] : memref<5x8xi32, #tpu.memory_space<smem>>
      %c0_i32_135 = arith.constant 0 : i32
      %c7_i32_136 = arith.constant 7 : i32
      %c0_i32_137 = arith.constant 0 : i32
      %c7_i32_138 = arith.constant 7 : i32
      %c0_i32_139 = arith.constant 0 : i32
      %207 = tpu.memref_slice %arg2[%206, %c0_i32_139] : memref<16x128xf32, #tpu.memory_space<any>> -> memref<1x128xf32, #tpu.memory_space<any>>
      %208 = tpu.memref_squeeze %207 : memref<1x128xf32, #tpu.memory_space<any>> -> memref<128xf32, #tpu.memory_space<any>>
      %c0_i32_140 = arith.constant 0 : i32
      %209 = tpu.memref_slice %arg12[%c0_i32_135, %c7_i32_136, %c0_i32_140] : memref<2x8x128xf32, #tpu.memory_space<vmem>> -> memref<1x1x128xf32, #tpu.memory_space<vmem>>
      %210 = tpu.memref_squeeze %209 : memref<1x1x128xf32, #tpu.memory_space<vmem>> -> memref<128xf32, #tpu.memory_space<vmem>>
      %211 = tpu.memref_slice %arg14[%c0_i32_137, %c7_i32_138] : memref<2x8x!tpu.dma_semaphore, #tpu.memory_space<semaphore_mem>> -> memref<1x1x!tpu.dma_semaphore, #tpu.memory_space<semaphore_mem>>
      %212 = tpu.memref_squeeze %211 : memref<1x1x!tpu.dma_semaphore, #tpu.memory_space<semaphore_mem>> -> memref<!tpu.dma_semaphore, #tpu.memory_space<semaphore_mem>>
      tpu.enqueue_dma source(%208 : memref<128xf32, #tpu.memory_space<any>>) target(%210 : memref<128xf32, #tpu.memory_space<vmem>>) target_semaphore(%212 : memref<!tpu.dma_semaphore, #tpu.memory_space<semaphore_mem>>)
    } else {
    }
    %c1_i32 = arith.constant 1 : i32
    %3 = arith.addi %arg0, %c1_i32 : i32
    %c5_i32 = arith.constant 5 : i32
    %4 = arith.cmpi slt, %3, %c5_i32 : i32
    %5 = arith.extui %4 : i1 to i32
    %c0_i32_1 = arith.constant 0 : i32
    %6 = arith.cmpi ne, %5, %c0_i32_1 : i32
    scf.if %6 {
      %c1_i32_80 = arith.constant 1 : i32
      %155 = arith.addi %arg0, %c1_i32_80 : i32
      %c1_i32_81 = arith.constant 1 : i32
      %156 = arith.addi %arg0, %c1_i32_81 : i32
      %c1_i32_82 = arith.constant 1 : i32
      %157 = arith.andi %156, %c1_i32_82 : i32
      %158 = arith.index_cast %155 : i32 to index
      %c0_83 = arith.constant 0 : index
      %159 = memref.load %arg1[%158, %c0_83] : memref<5x8xi32, #tpu.memory_space<smem>>
      %c0_i32_84 = arith.constant 0 : i32
      %c0_i32_85 = arith.constant 0 : i32
      %c0_i32_86 = arith.constant 0 : i32
      %160 = tpu.memref_slice %arg2[%159, %c0_i32_86] : memref<16x128xf32, #tpu.memory_space<any>> -> memref<1x128xf32, #tpu.memory_space<any>>
      %161 = tpu.memref_squeeze %160 : memref<1x128xf32, #tpu.memory_space<any>> -> memref<128xf32, #tpu.memory_space<any>>
      %c0_i32_87 = arith.constant 0 : i32
      %162 = tpu.memref_slice %arg12[%157, %c0_i32_84, %c0_i32_87] : memref<2x8x128xf32, #tpu.memory_space<vmem>> -> memref<1x1x128xf32, #tpu.memory_space<vmem>>
      %163 = tpu.memref_squeeze %162 : memref<1x1x128xf32, #tpu.memory_space<vmem>> -> memref<128xf32, #tpu.memory_space<vmem>>
      %164 = tpu.memref_slice %arg14[%157, %c0_i32_85] : memref<2x8x!tpu.dma_semaphore, #tpu.memory_space<semaphore_mem>> -> memref<1x1x!tpu.dma_semaphore, #tpu.memory_space<semaphore_mem>>
      %165 = tpu.memref_squeeze %164 : memref<1x1x!tpu.dma_semaphore, #tpu.memory_space<semaphore_mem>> -> memref<!tpu.dma_semaphore, #tpu.memory_space<semaphore_mem>>
      tpu.enqueue_dma source(%161 : memref<128xf32, #tpu.memory_space<any>>) target(%163 : memref<128xf32, #tpu.memory_space<vmem>>) target_semaphore(%165 : memref<!tpu.dma_semaphore, #tpu.memory_space<semaphore_mem>>)
      %166 = arith.index_cast %155 : i32 to index
      %c1 = arith.constant 1 : index
      %167 = memref.load %arg1[%166, %c1] : memref<5x8xi32, #tpu.memory_space<smem>>
      %c1_i32_88 = arith.constant 1 : i32
      %c1_i32_89 = arith.constant 1 : i32
      %c0_i32_90 = arith.constant 0 : i32
      %168 = tpu.memref_slice %arg2[%167, %c0_i32_90] : memref<16x128xf32, #tpu.memory_space<any>> -> memref<1x128xf32, #tpu.memory_space<any>>
      %169 = tpu.memref_squeeze %168 : memref<1x128xf32, #tpu.memory_space<any>> -> memref<128xf32, #tpu.memory_space<any>>
      %c0_i32_91 = arith.constant 0 : i32
      %170 = tpu.memref_slice %arg12[%157, %c1_i32_88, %c0_i32_91] : memref<2x8x128xf32, #tpu.memory_space<vmem>> -> memref<1x1x128xf32, #tpu.memory_space<vmem>>
      %171 = tpu.memref_squeeze %170 : memref<1x1x128xf32, #tpu.memory_space<vmem>> -> memref<128xf32, #tpu.memory_space<vmem>>
      %172 = tpu.memref_slice %arg14[%157, %c1_i32_89] : memref<2x8x!tpu.dma_semaphore, #tpu.memory_space<semaphore_mem>> -> memref<1x1x!tpu.dma_semaphore, #tpu.memory_space<semaphore_mem>>
      %173 = tpu.memref_squeeze %172 : memref<1x1x!tpu.dma_semaphore, #tpu.memory_space<semaphore_mem>> -> memref<!tpu.dma_semaphore, #tpu.memory_space<semaphore_mem>>
      tpu.enqueue_dma source(%169 : memref<128xf32, #tpu.memory_space<any>>) target(%171 : memref<128xf32, #tpu.memory_space<vmem>>) target_semaphore(%173 : memref<!tpu.dma_semaphore, #tpu.memory_space<semaphore_mem>>)
      %174 = arith.index_cast %155 : i32 to index
      %c2 = arith.constant 2 : index
      %175 = memref.load %arg1[%174, %c2] : memref<5x8xi32, #tpu.memory_space<smem>>
      %c2_i32_92 = arith.constant 2 : i32
      %c2_i32_93 = arith.constant 2 : i32
      %c0_i32_94 = arith.constant 0 : i32
      %176 = tpu.memref_slice %arg2[%175, %c0_i32_94] : memref<16x128xf32, #tpu.memory_space<any>> -> memref<1x128xf32, #tpu.memory_space<any>>
      %177 = tpu.memref_squeeze %176 : memref<1x128xf32, #tpu.memory_space<any>> -> memref<128xf32, #tpu.memory_space<any>>
      %c0_i32_95 = arith.constant 0 : i32
      %178 = tpu.memref_slice %arg12[%157, %c2_i32_92, %c0_i32_95] : memref<2x8x128xf32, #tpu.memory_space<vmem>> -> memref<1x1x128xf32, #tpu.memory_space<vmem>>
      %179 = tpu.memref_squeeze %178 : memref<1x1x128xf32, #tpu.memory_space<vmem>> -> memref<128xf32, #tpu.memory_space<vmem>>
      %180 = tpu.memref_slice %arg14[%157, %c2_i32_93] : memref<2x8x!tpu.dma_semaphore, #tpu.memory_space<semaphore_mem>> -> memref<1x1x!tpu.dma_semaphore, #tpu.memory_space<semaphore_mem>>
      %181 = tpu.memref_squeeze %180 : memref<1x1x!tpu.dma_semaphore, #tpu.memory_space<semaphore_mem>> -> memref<!tpu.dma_semaphore, #tpu.memory_space<semaphore_mem>>
      tpu.enqueue_dma source(%177 : memref<128xf32, #tpu.memory_space<any>>) target(%179 : memref<128xf32, #tpu.memory_space<vmem>>) target_semaphore(%181 : memref<!tpu.dma_semaphore, #tpu.memory_space<semaphore_mem>>)
      %182 = arith.index_cast %155 : i32 to index
      %c3 = arith.constant 3 : index
      %183 = memref.load %arg1[%182, %c3] : memref<5x8xi32, #tpu.memory_space<smem>>
      %c3_i32_96 = arith.constant 3 : i32
      %c3_i32_97 = arith.constant 3 : i32
      %c0_i32_98 = arith.constant 0 : i32
      %184 = tpu.memref_slice %arg2[%183, %c0_i32_98] : memref<16x128xf32, #tpu.memory_space<any>> -> memref<1x128xf32, #tpu.memory_space<any>>
      %185 = tpu.memref_squeeze %184 : memref<1x128xf32, #tpu.memory_space<any>> -> memref<128xf32, #tpu.memory_space<any>>
      %c0_i32_99 = arith.constant 0 : i32
      %186 = tpu.memref_slice %arg12[%157, %c3_i32_96, %c0_i32_99] : memref<2x8x128xf32, #tpu.memory_space<vmem>> -> memref<1x1x128xf32, #tpu.memory_space<vmem>>
      %187 = tpu.memref_squeeze %186 : memref<1x1x128xf32, #tpu.memory_space<vmem>> -> memref<128xf32, #tpu.memory_space<vmem>>
      %188 = tpu.memref_slice %arg14[%157, %c3_i32_97] : memref<2x8x!tpu.dma_semaphore, #tpu.memory_space<semaphore_mem>> -> memref<1x1x!tpu.dma_semaphore, #tpu.memory_space<semaphore_mem>>
      %189 = tpu.memref_squeeze %188 : memref<1x1x!tpu.dma_semaphore, #tpu.memory_space<semaphore_mem>> -> memref<!tpu.dma_semaphore, #tpu.memory_space<semaphore_mem>>
      tpu.enqueue_dma source(%185 : memref<128xf32, #tpu.memory_space<any>>) target(%187 : memref<128xf32, #tpu.memory_space<vmem>>) target_semaphore(%189 : memref<!tpu.dma_semaphore, #tpu.memory_space<semaphore_mem>>)
      %190 = arith.index_cast %155 : i32 to index
      %c4 = arith.constant 4 : index
      %191 = memref.load %arg1[%190, %c4] : memref<5x8xi32, #tpu.memory_space<smem>>
      %c4_i32_100 = arith.constant 4 : i32
      %c4_i32_101 = arith.constant 4 : i32
      %c0_i32_102 = arith.constant 0 : i32
      %192 = tpu.memref_slice %arg2[%191, %c0_i32_102] : memref<16x128xf32, #tpu.memory_space<any>> -> memref<1x128xf32, #tpu.memory_space<any>>
      %193 = tpu.memref_squeeze %192 : memref<1x128xf32, #tpu.memory_space<any>> -> memref<128xf32, #tpu.memory_space<any>>
      %c0_i32_103 = arith.constant 0 : i32
      %194 = tpu.memref_slice %arg12[%157, %c4_i32_100, %c0_i32_103] : memref<2x8x128xf32, #tpu.memory_space<vmem>> -> memref<1x1x128xf32, #tpu.memory_space<vmem>>
      %195 = tpu.memref_squeeze %194 : memref<1x1x128xf32, #tpu.memory_space<vmem>> -> memref<128xf32, #tpu.memory_space<vmem>>
      %196 = tpu.memref_slice %arg14[%157, %c4_i32_101] : memref<2x8x!tpu.dma_semaphore, #tpu.memory_space<semaphore_mem>> -> memref<1x1x!tpu.dma_semaphore, #tpu.memory_space<semaphore_mem>>
      %197 = tpu.memref_squeeze %196 : memref<1x1x!tpu.dma_semaphore, #tpu.memory_space<semaphore_mem>> -> memref<!tpu.dma_semaphore, #tpu.memory_space<semaphore_mem>>
      tpu.enqueue_dma source(%193 : memref<128xf32, #tpu.memory_space<any>>) target(%195 : memref<128xf32, #tpu.memory_space<vmem>>) target_semaphore(%197 : memref<!tpu.dma_semaphore, #tpu.memory_space<semaphore_mem>>)
      %198 = arith.index_cast %155 : i32 to index
      %c5 = arith.constant 5 : index
      %199 = memref.load %arg1[%198, %c5] : memref<5x8xi32, #tpu.memory_space<smem>>
      %c5_i32_104 = arith.constant 5 : i32
      %c5_i32_105 = arith.constant 5 : i32
      %c0_i32_106 = arith.constant 0 : i32
      %200 = tpu.memref_slice %arg2[%199, %c0_i32_106] : memref<16x128xf32, #tpu.memory_space<any>> -> memref<1x128xf32, #tpu.memory_space<any>>
      %201 = tpu.memref_squeeze %200 : memref<1x128xf32, #tpu.memory_space<any>> -> memref<128xf32, #tpu.memory_space<any>>
      %c0_i32_107 = arith.constant 0 : i32
      %202 = tpu.memref_slice %arg12[%157, %c5_i32_104, %c0_i32_107] : memref<2x8x128xf32, #tpu.memory_space<vmem>> -> memref<1x1x128xf32, #tpu.memory_space<vmem>>
      %203 = tpu.memref_squeeze %202 : memref<1x1x128xf32, #tpu.memory_space<vmem>> -> memref<128xf32, #tpu.memory_space<vmem>>
      %204 = tpu.memref_slice %arg14[%157, %c5_i32_105] : memref<2x8x!tpu.dma_semaphore, #tpu.memory_space<semaphore_mem>> -> memref<1x1x!tpu.dma_semaphore, #tpu.memory_space<semaphore_mem>>
      %205 = tpu.memref_squeeze %204 : memref<1x1x!tpu.dma_semaphore, #tpu.memory_space<semaphore_mem>> -> memref<!tpu.dma_semaphore, #tpu.memory_space<semaphore_mem>>
      tpu.enqueue_dma source(%201 : memref<128xf32, #tpu.memory_space<any>>) target(%203 : memref<128xf32, #tpu.memory_space<vmem>>) target_semaphore(%205 : memref<!tpu.dma_semaphore, #tpu.memory_space<semaphore_mem>>)
      %206 = arith.index_cast %155 : i32 to index
      %c6 = arith.constant 6 : index
      %207 = memref.load %arg1[%206, %c6] : memref<5x8xi32, #tpu.memory_space<smem>>
      %c6_i32_108 = arith.constant 6 : i32
      %c6_i32_109 = arith.constant 6 : i32
      %c0_i32_110 = arith.constant 0 : i32
      %208 = tpu.memref_slice %arg2[%207, %c0_i32_110] : memref<16x128xf32, #tpu.memory_space<any>> -> memref<1x128xf32, #tpu.memory_space<any>>
      %209 = tpu.memref_squeeze %208 : memref<1x128xf32, #tpu.memory_space<any>> -> memref<128xf32, #tpu.memory_space<any>>
      %c0_i32_111 = arith.constant 0 : i32
      %210 = tpu.memref_slice %arg12[%157, %c6_i32_108, %c0_i32_111] : memref<2x8x128xf32, #tpu.memory_space<vmem>> -> memref<1x1x128xf32, #tpu.memory_space<vmem>>
      %211 = tpu.memref_squeeze %210 : memref<1x1x128xf32, #tpu.memory_space<vmem>> -> memref<128xf32, #tpu.memory_space<vmem>>
      %212 = tpu.memref_slice %arg14[%157, %c6_i32_109] : memref<2x8x!tpu.dma_semaphore, #tpu.memory_space<semaphore_mem>> -> memref<1x1x!tpu.dma_semaphore, #tpu.memory_space<semaphore_mem>>
      %213 = tpu.memref_squeeze %212 : memref<1x1x!tpu.dma_semaphore, #tpu.memory_space<semaphore_mem>> -> memref<!tpu.dma_semaphore, #tpu.memory_space<semaphore_mem>>
      tpu.enqueue_dma source(%209 : memref<128xf32, #tpu.memory_space<any>>) target(%211 : memref<128xf32, #tpu.memory_space<vmem>>) target_semaphore(%213 : memref<!tpu.dma_semaphore, #tpu.memory_space<semaphore_mem>>)
      %214 = arith.index_cast %155 : i32 to index
      %c7 = arith.constant 7 : index
      %215 = memref.load %arg1[%214, %c7] : memref<5x8xi32, #tpu.memory_space<smem>>
      %c7_i32_112 = arith.constant 7 : i32
      %c7_i32_113 = arith.constant 7 : i32
      %c0_i32_114 = arith.constant 0 : i32
      %216 = tpu.memref_slice %arg2[%215, %c0_i32_114] : memref<16x128xf32, #tpu.memory_space<any>> -> memref<1x128xf32, #tpu.memory_space<any>>
      %217 = tpu.memref_squeeze %216 : memref<1x128xf32, #tpu.memory_space<any>> -> memref<128xf32, #tpu.memory_space<any>>
      %c0_i32_115 = arith.constant 0 : i32
      %218 = tpu.memref_slice %arg12[%157, %c7_i32_112, %c0_i32_115] : memref<2x8x128xf32, #tpu.memory_space<vmem>> -> memref<1x1x128xf32, #tpu.memory_space<vmem>>
      %219 = tpu.memref_squeeze %218 : memref<1x1x128xf32, #tpu.memory_space<vmem>> -> memref<128xf32, #tpu.memory_space<vmem>>
      %220 = tpu.memref_slice %arg14[%157, %c7_i32_113] : memref<2x8x!tpu.dma_semaphore, #tpu.memory_space<semaphore_mem>> -> memref<1x1x!tpu.dma_semaphore, #tpu.memory_space<semaphore_mem>>
      %221 = tpu.memref_squeeze %220 : memref<1x1x!tpu.dma_semaphore, #tpu.memory_space<semaphore_mem>> -> memref<!tpu.dma_semaphore, #tpu.memory_space<semaphore_mem>>
      tpu.enqueue_dma source(%217 : memref<128xf32, #tpu.memory_space<any>>) target(%219 : memref<128xf32, #tpu.memory_space<vmem>>) target_semaphore(%221 : memref<!tpu.dma_semaphore, #tpu.memory_space<semaphore_mem>>)
    } else {
    }
    %c0 = arith.constant 0 : index
    %c0_2 = arith.constant 0 : index
    %7 = vector.load %arg9[%c0, %c0_2] : memref<1x1024xf32, #tpu.memory_space<vmem>>, vector<1x384xf32>
    %c0_3 = arith.constant 0 : index
    %c384 = arith.constant 384 : index
    %8 = vector.load %arg9[%c0_3, %c384] : memref<1x1024xf32, #tpu.memory_space<vmem>>, vector<1x384xf32>
    %c0_4 = arith.constant 0 : index
    %c768 = arith.constant 768 : index
    %9 = vector.load %arg9[%c0_4, %c768] : memref<1x1024xf32, #tpu.memory_space<vmem>>, vector<1x128xf32>
    %c0_5 = arith.constant 0 : index
    %c896 = arith.constant 896 : index
    %10 = vector.load %arg9[%c0_5, %c896] : memref<1x1024xf32, #tpu.memory_space<vmem>>, vector<1x128xf32>
    %c0_6 = arith.constant 0 : index
    %c0_7 = arith.constant 0 : index
    %11 = vector.load %arg13[%c0_6, %c0_7] : memref<8x128xf32, #tpu.memory_space<vmem>>, vector<8x128xf32>
    %12 = arith.truncf %11 : vector<8x128xf32> to vector<8x128xbf16>
    %c0_8 = arith.constant 0 : index
    %c0_9 = arith.constant 0 : index
    %13 = vector.load %arg6[%c0_8, %c0_9] : memref<128x384xbf16, #tpu.memory_space<vmem>>, vector<128x384xbf16>
    %cst = arith.constant dense<0.000000e+00> : vector<8x384xf32>
    %14 = tpu.matmul %12, %13, %cst {dimension_numbers = #tpu.dot_dimension_numbers<[1], [0], [0], [1], [0, 0, 1, 1], [], []>} : vector<8x128xbf16>, vector<128x384xbf16>, vector<8x384xf32> -> vector<8x384xf32>
    %15 = vector.broadcast %8 : vector<1x384xf32> to vector<8x384xf32>
    %16 = arith.addf %14, %15 : vector<8x384xf32>
    %c1_i32_10 = arith.constant 1 : i32
    %17 = arith.andi %arg0, %c1_i32_10 : i32
    %c0_i32_11 = arith.constant 0 : i32
    %c0_i32_12 = arith.constant 0 : i32
    %c0_i32_13 = arith.constant 0 : i32
    %c0_i32_14 = arith.constant 0 : i32
    %18 = tpu.memref_slice %arg2[%c0_i32_11, %c0_i32_14] : memref<16x128xf32, #tpu.memory_space<any>> -> memref<1x128xf32, #tpu.memory_space<any>>
    %19 = tpu.memref_squeeze %18 : memref<1x128xf32, #tpu.memory_space<any>> -> memref<128xf32, #tpu.memory_space<any>>
    %c0_i32_15 = arith.constant 0 : i32
    %20 = tpu.memref_slice %arg12[%17, %c0_i32_12, %c0_i32_15] : memref<2x8x128xf32, #tpu.memory_space<vmem>> -> memref<1x1x128xf32, #tpu.memory_space<vmem>>
    %21 = tpu.memref_squeeze %20 : memref<1x1x128xf32, #tpu.memory_space<vmem>> -> memref<128xf32, #tpu.memory_space<vmem>>
    %22 = tpu.memref_slice %arg14[%17, %c0_i32_13] : memref<2x8x!tpu.dma_semaphore, #tpu.memory_space<semaphore_mem>> -> memref<1x1x!tpu.dma_semaphore, #tpu.memory_space<semaphore_mem>>
    %23 = tpu.memref_squeeze %22 : memref<1x1x!tpu.dma_semaphore, #tpu.memory_space<semaphore_mem>> -> memref<!tpu.dma_semaphore, #tpu.memory_space<semaphore_mem>>
    tpu.wait_dma2 semaphore(%23 : memref<!tpu.dma_semaphore, #tpu.memory_space<semaphore_mem>>) src(%19 : memref<128xf32, #tpu.memory_space<any>>) dst(%21 : memref<128xf32, #tpu.memory_space<vmem>>)
    %c0_i32_16 = arith.constant 0 : i32
    %c1_i32_17 = arith.constant 1 : i32
    %c1_i32_18 = arith.constant 1 : i32
    %c0_i32_19 = arith.constant 0 : i32
    %24 = tpu.memref_slice %arg2[%c0_i32_16, %c0_i32_19] : memref<16x128xf32, #tpu.memory_space<any>> -> memref<1x128xf32, #tpu.memory_space<any>>
    %25 = tpu.memref_squeeze %24 : memref<1x128xf32, #tpu.memory_space<any>> -> memref<128xf32, #tpu.memory_space<any>>
    %c0_i32_20 = arith.constant 0 : i32
    %26 = tpu.memref_slice %arg12[%17, %c1_i32_17, %c0_i32_20] : memref<2x8x128xf32, #tpu.memory_space<vmem>> -> memref<1x1x128xf32, #tpu.memory_space<vmem>>
    %27 = tpu.memref_squeeze %26 : memref<1x1x128xf32, #tpu.memory_space<vmem>> -> memref<128xf32, #tpu.memory_space<vmem>>
    %28 = tpu.memref_slice %arg14[%17, %c1_i32_18] : memref<2x8x!tpu.dma_semaphore, #tpu.memory_space<semaphore_mem>> -> memref<1x1x!tpu.dma_semaphore, #tpu.memory_space<semaphore_mem>>
    %29 = tpu.memref_squeeze %28 : memref<1x1x!tpu.dma_semaphore, #tpu.memory_space<semaphore_mem>> -> memref<!tpu.dma_semaphore, #tpu.memory_space<semaphore_mem>>
    tpu.wait_dma2 semaphore(%29 : memref<!tpu.dma_semaphore, #tpu.memory_space<semaphore_mem>>) src(%25 : memref<128xf32, #tpu.memory_space<any>>) dst(%27 : memref<128xf32, #tpu.memory_space<vmem>>)
    %c0_i32_21 = arith.constant 0 : i32
    %c2_i32 = arith.constant 2 : i32
    %c2_i32_22 = arith.constant 2 : i32
    %c0_i32_23 = arith.constant 0 : i32
    %30 = tpu.memref_slice %arg2[%c0_i32_21, %c0_i32_23] : memref<16x128xf32, #tpu.memory_space<any>> -> memref<1x128xf32, #tpu.memory_space<any>>
    %31 = tpu.memref_squeeze %30 : memref<1x128xf32, #tpu.memory_space<any>> -> memref<128xf32, #tpu.memory_space<any>>
    %c0_i32_24 = arith.constant 0 : i32
    %32 = tpu.memref_slice %arg12[%17, %c2_i32, %c0_i32_24] : memref<2x8x128xf32, #tpu.memory_space<vmem>> -> memref<1x1x128xf32, #tpu.memory_space<vmem>>
    %33 = tpu.memref_squeeze %32 : memref<1x1x128xf32, #tpu.memory_space<vmem>> -> memref<128xf32, #tpu.memory_space<vmem>>
    %34 = tpu.memref_slice %arg14[%17, %c2_i32_22] : memref<2x8x!tpu.dma_semaphore, #tpu.memory_space<semaphore_mem>> -> memref<1x1x!tpu.dma_semaphore, #tpu.memory_space<semaphore_mem>>
    %35 = tpu.memref_squeeze %34 : memref<1x1x!tpu.dma_semaphore, #tpu.memory_space<semaphore_mem>> -> memref<!tpu.dma_semaphore, #tpu.memory_space<semaphore_mem>>
    tpu.wait_dma2 semaphore(%35 : memref<!tpu.dma_semaphore, #tpu.memory_space<semaphore_mem>>) src(%31 : memref<128xf32, #tpu.memory_space<any>>) dst(%33 : memref<128xf32, #tpu.memory_space<vmem>>)
    %c0_i32_25 = arith.constant 0 : i32
    %c3_i32 = arith.constant 3 : i32
    %c3_i32_26 = arith.constant 3 : i32
    %c0_i32_27 = arith.constant 0 : i32
    %36 = tpu.memref_slice %arg2[%c0_i32_25, %c0_i32_27] : memref<16x128xf32, #tpu.memory_space<any>> -> memref<1x128xf32, #tpu.memory_space<any>>
    %37 = tpu.memref_squeeze %36 : memref<1x128xf32, #tpu.memory_space<any>> -> memref<128xf32, #tpu.memory_space<any>>
    %c0_i32_28 = arith.constant 0 : i32
    %38 = tpu.memref_slice %arg12[%17, %c3_i32, %c0_i32_28] : memref<2x8x128xf32, #tpu.memory_space<vmem>> -> memref<1x1x128xf32, #tpu.memory_space<vmem>>
    %39 = tpu.memref_squeeze %38 : memref<1x1x128xf32, #tpu.memory_space<vmem>> -> memref<128xf32, #tpu.memory_space<vmem>>
    %40 = tpu.memref_slice %arg14[%17, %c3_i32_26] : memref<2x8x!tpu.dma_semaphore, #tpu.memory_space<semaphore_mem>> -> memref<1x1x!tpu.dma_semaphore, #tpu.memory_space<semaphore_mem>>
    %41 = tpu.memref_squeeze %40 : memref<1x1x!tpu.dma_semaphore, #tpu.memory_space<semaphore_mem>> -> memref<!tpu.dma_semaphore, #tpu.memory_space<semaphore_mem>>
    tpu.wait_dma2 semaphore(%41 : memref<!tpu.dma_semaphore, #tpu.memory_space<semaphore_mem>>) src(%37 : memref<128xf32, #tpu.memory_space<any>>) dst(%39 : memref<128xf32, #tpu.memory_space<vmem>>)
    %c0_i32_29 = arith.constant 0 : i32
    %c4_i32 = arith.constant 4 : i32
    %c4_i32_30 = arith.constant 4 : i32
    %c0_i32_31 = arith.constant 0 : i32
    %42 = tpu.memref_slice %arg2[%c0_i32_29, %c0_i32_31] : memref<16x128xf32, #tpu.memory_space<any>> -> memref<1x128xf32, #tpu.memory_space<any>>
    %43 = tpu.memref_squeeze %42 : memref<1x128xf32, #tpu.memory_space<any>> -> memref<128xf32, #tpu.memory_space<any>>
    %c0_i32_32 = arith.constant 0 : i32
    %44 = tpu.memref_slice %arg12[%17, %c4_i32, %c0_i32_32] : memref<2x8x128xf32, #tpu.memory_space<vmem>> -> memref<1x1x128xf32, #tpu.memory_space<vmem>>
    %45 = tpu.memref_squeeze %44 : memref<1x1x128xf32, #tpu.memory_space<vmem>> -> memref<128xf32, #tpu.memory_space<vmem>>
    %46 = tpu.memref_slice %arg14[%17, %c4_i32_30] : memref<2x8x!tpu.dma_semaphore, #tpu.memory_space<semaphore_mem>> -> memref<1x1x!tpu.dma_semaphore, #tpu.memory_space<semaphore_mem>>
    %47 = tpu.memref_squeeze %46 : memref<1x1x!tpu.dma_semaphore, #tpu.memory_space<semaphore_mem>> -> memref<!tpu.dma_semaphore, #tpu.memory_space<semaphore_mem>>
    tpu.wait_dma2 semaphore(%47 : memref<!tpu.dma_semaphore, #tpu.memory_space<semaphore_mem>>) src(%43 : memref<128xf32, #tpu.memory_space<any>>) dst(%45 : memref<128xf32, #tpu.memory_space<vmem>>)
    %c0_i32_33 = arith.constant 0 : i32
    %c5_i32_34 = arith.constant 5 : i32
    %c5_i32_35 = arith.constant 5 : i32
    %c0_i32_36 = arith.constant 0 : i32
    %48 = tpu.memref_slice %arg2[%c0_i32_33, %c0_i32_36] : memref<16x128xf32, #tpu.memory_space<any>> -> memref<1x128xf32, #tpu.memory_space<any>>
    %49 = tpu.memref_squeeze %48 : memref<1x128xf32, #tpu.memory_space<any>> -> memref<128xf32, #tpu.memory_space<any>>
    %c0_i32_37 = arith.constant 0 : i32
    %50 = tpu.memref_slice %arg12[%17, %c5_i32_34, %c0_i32_37] : memref<2x8x128xf32, #tpu.memory_space<vmem>> -> memref<1x1x128xf32, #tpu.memory_space<vmem>>
    %51 = tpu.memref_squeeze %50 : memref<1x1x128xf32, #tpu.memory_space<vmem>> -> memref<128xf32, #tpu.memory_space<vmem>>
    %52 = tpu.memref_slice %arg14[%17, %c5_i32_35] : memref<2x8x!tpu.dma_semaphore, #tpu.memory_space<semaphore_mem>> -> memref<1x1x!tpu.dma_semaphore, #tpu.memory_space<semaphore_mem>>
    %53 = tpu.memref_squeeze %52 : memref<1x1x!tpu.dma_semaphore, #tpu.memory_space<semaphore_mem>> -> memref<!tpu.dma_semaphore, #tpu.memory_space<semaphore_mem>>
    tpu.wait_dma2 semaphore(%53 : memref<!tpu.dma_semaphore, #tpu.memory_space<semaphore_mem>>) src(%49 : memref<128xf32, #tpu.memory_space<any>>) dst(%51 : memref<128xf32, #tpu.memory_space<vmem>>)
    %c0_i32_38 = arith.constant 0 : i32
    %c6_i32 = arith.constant 6 : i32
    %c6_i32_39 = arith.constant 6 : i32
    %c0_i32_40 = arith.constant 0 : i32
    %54 = tpu.memref_slice %arg2[%c0_i32_38, %c0_i32_40] : memref<16x128xf32, #tpu.memory_space<any>> -> memref<1x128xf32, #tpu.memory_space<any>>
    %55 = tpu.memref_squeeze %54 : memref<1x128xf32, #tpu.memory_space<any>> -> memref<128xf32, #tpu.memory_space<any>>
    %c0_i32_41 = arith.constant 0 : i32
    %56 = tpu.memref_slice %arg12[%17, %c6_i32, %c0_i32_41] : memref<2x8x128xf32, #tpu.memory_space<vmem>> -> memref<1x1x128xf32, #tpu.memory_space<vmem>>
    %57 = tpu.memref_squeeze %56 : memref<1x1x128xf32, #tpu.memory_space<vmem>> -> memref<128xf32, #tpu.memory_space<vmem>>
    %58 = tpu.memref_slice %arg14[%17, %c6_i32_39] : memref<2x8x!tpu.dma_semaphore, #tpu.memory_space<semaphore_mem>> -> memref<1x1x!tpu.dma_semaphore, #tpu.memory_space<semaphore_mem>>
    %59 = tpu.memref_squeeze %58 : memref<1x1x!tpu.dma_semaphore, #tpu.memory_space<semaphore_mem>> -> memref<!tpu.dma_semaphore, #tpu.memory_space<semaphore_mem>>
    tpu.wait_dma2 semaphore(%59 : memref<!tpu.dma_semaphore, #tpu.memory_space<semaphore_mem>>) src(%55 : memref<128xf32, #tpu.memory_space<any>>) dst(%57 : memref<128xf32, #tpu.memory_space<vmem>>)
    %c0_i32_42 = arith.constant 0 : i32
    %c7_i32 = arith.constant 7 : i32
    %c7_i32_43 = arith.constant 7 : i32
    %c0_i32_44 = arith.constant 0 : i32
    %60 = tpu.memref_slice %arg2[%c0_i32_42, %c0_i32_44] : memref<16x128xf32, #tpu.memory_space<any>> -> memref<1x128xf32, #tpu.memory_space<any>>
    %61 = tpu.memref_squeeze %60 : memref<1x128xf32, #tpu.memory_space<any>> -> memref<128xf32, #tpu.memory_space<any>>
    %c0_i32_45 = arith.constant 0 : i32
    %62 = tpu.memref_slice %arg12[%17, %c7_i32, %c0_i32_45] : memref<2x8x128xf32, #tpu.memory_space<vmem>> -> memref<1x1x128xf32, #tpu.memory_space<vmem>>
    %63 = tpu.memref_squeeze %62 : memref<1x1x128xf32, #tpu.memory_space<vmem>> -> memref<128xf32, #tpu.memory_space<vmem>>
    %64 = tpu.memref_slice %arg14[%17, %c7_i32_43] : memref<2x8x!tpu.dma_semaphore, #tpu.memory_space<semaphore_mem>> -> memref<1x1x!tpu.dma_semaphore, #tpu.memory_space<semaphore_mem>>
    %65 = tpu.memref_squeeze %64 : memref<1x1x!tpu.dma_semaphore, #tpu.memory_space<semaphore_mem>> -> memref<!tpu.dma_semaphore, #tpu.memory_space<semaphore_mem>>
    tpu.wait_dma2 semaphore(%65 : memref<!tpu.dma_semaphore, #tpu.memory_space<semaphore_mem>>) src(%61 : memref<128xf32, #tpu.memory_space<any>>) dst(%63 : memref<128xf32, #tpu.memory_space<vmem>>)
    %c1_i32_46 = arith.constant 1 : i32
    %66 = arith.andi %arg0, %c1_i32_46 : i32
    %67 = arith.index_cast %66 : i32 to index
    %c0_47 = arith.constant 0 : index
    %c0_48 = arith.constant 0 : index
    %68 = vector.load %arg12[%67, %c0_47, %c0_48] : memref<2x8x128xf32, #tpu.memory_space<vmem>>, vector<1x8x128xf32>
    %69 = vector.shape_cast %68 : vector<1x8x128xf32> to vector<8x128xf32>
    %70 = arith.truncf %69 : vector<8x128xf32> to vector<8x128xbf16>
    %c0_49 = arith.constant 0 : index
    %c0_50 = arith.constant 0 : index
    %71 = vector.load %arg5[%c0_49, %c0_50] : memref<128x384xbf16, #tpu.memory_space<vmem>>, vector<128x384xbf16>
    %cst_51 = arith.constant dense<0.000000e+00> : vector<8x384xf32>
    %72 = tpu.matmul %70, %71, %cst_51 {dimension_numbers = #tpu.dot_dimension_numbers<[1], [0], [0], [1], [0, 0, 1, 1], [], []>} : vector<8x128xbf16>, vector<128x384xbf16>, vector<8x384xf32> -> vector<8x384xf32>
    %73 = vector.broadcast %7 : vector<1x384xf32> to vector<8x384xf32>
    %74 = arith.addf %72, %73 : vector<8x384xf32>
    %75 = vector.extract_strided_slice %74 {offsets = [0, 0], sizes = [8, 128], strides = [1, 1]} : vector<8x384xf32> to vector<8x128xf32>
    %76 = vector.extract_strided_slice %16 {offsets = [0, 0], sizes = [8, 128], strides = [1, 1]} : vector<8x384xf32> to vector<8x128xf32>
    %77 = arith.addf %75, %76 : vector<8x128xf32>
    %78 = arith.negf %77 : vector<8x128xf32>
    %79 = math.exp %78 : vector<8x128xf32>
    %cst_52 = arith.constant 1.000000e+00 : f32
    %80 = vector.broadcast %cst_52 : f32 to vector<8x128xf32>
    %81 = arith.addf %80, %79 : vector<8x128xf32>
    %82 = arith.divf %80, %81 : vector<8x128xf32>
    %83 = vector.extract_strided_slice %74 {offsets = [0, 128], sizes = [8, 128], strides = [1, 1]} : vector<8x384xf32> to vector<8x128xf32>
    %84 = vector.extract_strided_slice %16 {offsets = [0, 128], sizes = [8, 128], strides = [1, 1]} : vector<8x384xf32> to vector<8x128xf32>
    %85 = arith.addf %83, %84 : vector<8x128xf32>
    %86 = arith.negf %85 : vector<8x128xf32>
    %87 = math.exp %86 : vector<8x128xf32>
    %cst_53 = arith.constant 1.000000e+00 : f32
    %88 = vector.broadcast %cst_53 : f32 to vector<8x128xf32>
    %89 = arith.addf %88, %87 : vector<8x128xf32>
    %90 = arith.divf %88, %89 : vector<8x128xf32>
    %91 = vector.extract_strided_slice %74 {offsets = [0, 256], sizes = [8, 128], strides = [1, 1]} : vector<8x384xf32> to vector<8x128xf32>
    %92 = vector.extract_strided_slice %16 {offsets = [0, 256], sizes = [8, 128], strides = [1, 1]} : vector<8x384xf32> to vector<8x128xf32>
    %93 = arith.mulf %82, %92 : vector<8x128xf32>
    %94 = arith.addf %91, %93 : vector<8x128xf32>
    %95 = math.tanh %94 : vector<8x128xf32>
    %cst_54 = arith.constant 1.000000e+00 : f32
    %96 = vector.broadcast %cst_54 : f32 to vector<8x128xf32>
    %97 = arith.subf %96, %90 : vector<8x128xf32>
    %98 = arith.mulf %97, %95 : vector<8x128xf32>
    %99 = arith.mulf %90, %11 : vector<8x128xf32>
    %100 = arith.addf %98, %99 : vector<8x128xf32>
    %c0_55 = arith.constant 0 : index
    %c0_56 = arith.constant 0 : index
    %c0_57 = arith.constant 0 : index
    %101 = vector.load %arg4[%c0_55, %c0_56, %c0_57] : memref<8x8x128xf32, #tpu.memory_space<vmem>>, vector<8x8x128xf32>
    %102 = vector.shape_cast %100 : vector<8x128xf32> to vector<8x1x128xf32>
    %103 = vector.broadcast %102 : vector<8x1x128xf32> to vector<8x8x128xf32>
    %104 = arith.mulf %101, %103 : vector<8x8x128xf32>
    %cst_58 = arith.constant dense<0.000000e+00> : vector<8x8xf32>
    %105 = vector.multi_reduction <add>, %104, %cst_58 [2] : vector<8x8x128xf32> to vector<8x8xf32>
    %cst_59 = arith.constant dense<0xFF800000> : vector<8xf32>
    %106 = vector.multi_reduction <maximumf>, %105, %cst_59 [1] : vector<8x8xf32> to vector<8xf32>
    %107 = vector.shape_cast %106 : vector<8xf32> to vector<8x1xf32>
    %108 = vector.broadcast %107 : vector<8x1xf32> to vector<8x8xf32>
    %109 = arith.subf %105, %108 : vector<8x8xf32>
    %110 = math.exp %109 : vector<8x8xf32>
    %cst_60 = arith.constant dense<0.000000e+00> : vector<8xf32>
    %111 = vector.multi_reduction <add>, %110, %cst_60 [1] : vector<8x8xf32> to vector<8xf32>
    %112 = vector.shape_cast %111 : vector<8xf32> to vector<8x1xf32>
    %113 = tpu.reciprocal %112 {approx = true} : vector<8x1xf32> -> vector<8x1xf32>
    %114 = vector.broadcast %113 : vector<8x1xf32> to vector<8x8xf32>
    %115 = arith.mulf %110, %114 : vector<8x8xf32>
    %116 = vector.shape_cast %115 : vector<8x8xf32> to vector<8x8x1xf32>
    %117 = vector.broadcast %116 : vector<8x8x1xf32> to vector<8x8x128xf32>
    %118 = arith.mulf %117, %101 : vector<8x8x128xf32>
    %cst_61 = arith.constant dense<0.000000e+00> : vector<8x128xf32>
    %119 = vector.multi_reduction <add>, %118, %cst_61 [1] : vector<8x8x128xf32> to vector<8x128xf32>
    %120 = arith.truncf %100 : vector<8x128xf32> to vector<8x128xbf16>
    %c0_62 = arith.constant 0 : index
    %c0_63 = arith.constant 0 : index
    %121 = vector.load %arg7[%c0_62, %c0_63] : memref<256x128xbf16, #tpu.memory_space<vmem>>, vector<128x128xbf16>
    %cst_64 = arith.constant dense<0.000000e+00> : vector<8x128xf32>
    %122 = tpu.matmul %120, %121, %cst_64 {dimension_numbers = #tpu.dot_dimension_numbers<[1], [0], [0], [1], [0, 0, 1, 1], [], []>} : vector<8x128xbf16>, vector<128x128xbf16>, vector<8x128xf32> -> vector<8x128xf32>
    %123 = arith.truncf %119 : vector<8x128xf32> to vector<8x128xbf16>
    %c128 = arith.constant 128 : index
    %c0_65 = arith.constant 0 : index
    %124 = vector.load %arg7[%c128, %c0_65] : memref<256x128xbf16, #tpu.memory_space<vmem>>, vector<128x128xbf16>
    %cst_66 = arith.constant dense<0.000000e+00> : vector<8x128xf32>
    %125 = tpu.matmul %123, %124, %cst_66 {dimension_numbers = #tpu.dot_dimension_numbers<[1], [0], [0], [1], [0, 0, 1, 1], [], []>} : vector<8x128xbf16>, vector<128x128xbf16>, vector<8x128xf32> -> vector<8x128xf32>
    %126 = arith.addf %122, %125 : vector<8x128xf32>
    %127 = vector.broadcast %9 : vector<1x128xf32> to vector<8x128xf32>
    %128 = arith.addf %126, %127 : vector<8x128xf32>
    %129 = math.tanh %128 : vector<8x128xf32>
    %c0_67 = arith.constant 0 : index
    %c0_68 = arith.constant 0 : index
    %130 = vector.load %arg8[%c0_67, %c0_68] : memref<128x128xf32, #tpu.memory_space<vmem>>, vector<128x128xf32>
    %cst_69 = arith.constant dense<0.000000e+00> : vector<8x128xf32>
    %131 = tpu.matmul %129, %130, %cst_69 {dimension_numbers = #tpu.dot_dimension_numbers<[1], [0], [0], [1], [0, 0, 1, 1], [], []>} : vector<8x128xf32>, vector<128x128xf32>, vector<8x128xf32> -> vector<8x128xf32>
    %132 = vector.broadcast %10 : vector<1x128xf32> to vector<8x128xf32>
    %133 = arith.addf %131, %132 : vector<8x128xf32>
    %134 = tpu.iota {dimensions = array<i32: 1>} : vector<1x128xi32>
    %c16_i32 = arith.constant 16 : i32
    %135 = vector.broadcast %c16_i32 : i32 to vector<1x128xi32>
    %136 = arith.cmpi slt, %134, %135 : vector<1x128xi32>
    %cst_70 = arith.constant -1.000000e+30 : f32
    %137 = vector.shape_cast %136 : vector<1x128xi1> to vector<1x128xi1>
    %138 = vector.broadcast %137 : vector<1x128xi1> to vector<8x128xi1>
    %139 = vector.broadcast %cst_70 : f32 to vector<8x128xf32>
    %140 = arith.select %138, %133, %139 : vector<8x128xi1>, vector<8x128xf32>
    %cst_71 = arith.constant dense<0xFF800000> : vector<8xf32>
    %141 = vector.multi_reduction <maximumf>, %140, %cst_71 [1] : vector<8x128xf32> to vector<8xf32>
    %142 = vector.shape_cast %141 : vector<8xf32> to vector<8x1xf32>
    %143 = vector.broadcast %142 : vector<8x1xf32> to vector<8x128xf32>
    %144 = arith.subf %140, %143 : vector<8x128xf32>
    %145 = math.exp %144 : vector<8x128xf32>
    %cst_72 = arith.constant dense<0.000000e+00> : vector<8xf32>
    %146 = vector.multi_reduction <add>, %145, %cst_72 [1] : vector<8x128xf32> to vector<8xf32>
    %147 = vector.shape_cast %146 : vector<8xf32> to vector<8x1xf32>
    %148 = vector.broadcast %147 : vector<8x1xf32> to vector<8x128xf32>
    %149 = arith.divf %145, %148 : vector<8x128xf32>
    %c0_73 = arith.constant 0 : index
    %c0_74 = arith.constant 0 : index
    %c0_75 = arith.constant 0 : index
    %150 = vector.load %arg10[%c0_73, %c0_74, %c0_75] : memref<1x8x128xf32, #tpu.memory_space<vmem>>, vector<1x8x128xf32>
    %151 = vector.shape_cast %150 : vector<1x8x128xf32> to vector<8x128xf32>
    %152 = vector.shape_cast %149 : vector<8x128xf32> to vector<1x8x128xf32>
    tpu.vector_store %arg10[%c0_73, %c0_74, %c0_75], %152 {strides = array<i32>} : memref<1x8x128xf32, #tpu.memory_space<vmem>>, vector<1x8x128xf32>,
    %c0_76 = arith.constant 0 : index
    %c0_77 = arith.constant 0 : index
    %153 = vector.load %arg13[%c0_76, %c0_77] : memref<8x128xf32, #tpu.memory_space<vmem>>, vector<8x128xf32>
    tpu.vector_store %arg13[%c0_76, %c0_77], %100 {strides = array<i32>} : memref<8x128xf32, #tpu.memory_space<vmem>>, vector<8x128xf32>,
    %c0_78 = arith.constant 0 : index
    %c0_79 = arith.constant 0 : index
    %154 = vector.load %arg11[%c0_78, %c0_79] : memref<8x128xf32, #tpu.memory_space<vmem>>, vector<8x128xf32>
    tpu.vector_store %arg11[%c0_78, %c0_79], %100 {strides = array<i32>} : memref<8x128xf32, #tpu.memory_space<vmem>>, vector<8x128xf32>,
    return
  }
  func.func @transform_1(%arg0: i32, %arg1: memref<5x8xi32, #tpu.memory_space<smem>>) -> (i32, i32) {
    %c0_i32 = arith.constant 0 : i32
    %c0_i32_0 = arith.constant 0 : i32
    %c0_i32_1 = arith.constant 0 : i32
    return %c0_i32, %c0_i32_0 : i32, i32
  }
  func.func @transform_2(%arg0: i32, %arg1: memref<5x8xi32, #tpu.memory_space<smem>>) -> (i32, i32, i32) {
    %c0_i32 = arith.constant 0 : i32
    %c0_i32_0 = arith.constant 0 : i32
    %c0_i32_1 = arith.constant 0 : i32
    %c0_i32_2 = arith.constant 0 : i32
    return %c0_i32, %c0_i32_0, %c0_i32_1 : i32, i32, i32
  }
  func.func @transform_3(%arg0: i32, %arg1: memref<5x8xi32, #tpu.memory_space<smem>>) -> (i32, i32) {
    %c0_i32 = arith.constant 0 : i32
    %c0_i32_0 = arith.constant 0 : i32
    %c0_i32_1 = arith.constant 0 : i32
    return %c0_i32, %c0_i32_0 : i32, i32
  }
  func.func @transform_4(%arg0: i32, %arg1: memref<5x8xi32, #tpu.memory_space<smem>>) -> (i32, i32) {
    %c0_i32 = arith.constant 0 : i32
    %c0_i32_0 = arith.constant 0 : i32
    %c0_i32_1 = arith.constant 0 : i32
    return %c0_i32, %c0_i32_0 : i32, i32
  }
  func.func @transform_5(%arg0: i32, %arg1: memref<5x8xi32, #tpu.memory_space<smem>>) -> (i32, i32) {
    %c0_i32 = arith.constant 0 : i32
    %c0_i32_0 = arith.constant 0 : i32
    %c0_i32_1 = arith.constant 0 : i32
    return %c0_i32, %c0_i32_0 : i32, i32
  }
  func.func @transform_6(%arg0: i32, %arg1: memref<5x8xi32, #tpu.memory_space<smem>>) -> (i32, i32) {
    %c0_i32 = arith.constant 0 : i32
    %c0_i32_0 = arith.constant 0 : i32
    %c0_i32_1 = arith.constant 0 : i32
    return %c0_i32, %c0_i32_0 : i32, i32
  }
  func.func @transform_7(%arg0: i32, %arg1: memref<5x8xi32, #tpu.memory_space<smem>>) -> (i32, i32) {
    %c0_i32 = arith.constant 0 : i32
    %c0_i32_0 = arith.constant 0 : i32
    %c0_i32_1 = arith.constant 0 : i32
    return %c0_i32, %c0_i32_0 : i32, i32
  }
  func.func @transform_8(%arg0: i32, %arg1: memref<5x8xi32, #tpu.memory_space<smem>>) -> (i32, i32, i32) {
    %c0_i32 = arith.constant 0 : i32
    %c0_i32_0 = arith.constant 0 : i32
    %c0_i32_1 = arith.constant 0 : i32
    return %arg0, %c0_i32, %c0_i32_0 : i32, i32, i32
  }
  func.func @transform_9(%arg0: i32, %arg1: memref<5x8xi32, #tpu.memory_space<smem>>) -> (i32, i32) {
    %c0_i32 = arith.constant 0 : i32
    %c0_i32_0 = arith.constant 0 : i32
    %c0_i32_1 = arith.constant 0 : i32
    return %c0_i32, %c0_i32_0 : i32, i32
  }
}

</mosaic_0001>

<llo_original>
// kernel: tpu_custom_call.1
$region0: #{tpu_custom_call.1}
  #allocation0 [shape = 'u32[]', space=smem, size = 0x4, offset = 0x4, fixed_abs, tag = 'smem constant byte address 0x4 - core index']
  #allocation1 [shape = 'u32[144,128]{1,0:T(1,128)}', space=vmem, size = 0x12000, scoped, tag = 'internal scratch']
  #allocation2 [shape = 'f32[2,8,128]{2,1,0:T(8,128)}', space=vmem, size = 0x2000, scoped, tag = 'scratch operand']
  #allocation3 [shape = 'f32[8,128]{1,0:T(8,128)}', space=vmem, size = 0x1000, scoped, tag = 'scratch operand']
  #allocation4 [shape = 's32[16]{0}', space=sflag, size = 0x40, scoped, tag = 'scratch operand']
  #allocation5 [shape = 's32[1]{0}', space=sflag, size = 0x4, scoped, tag = 'scoped memory for tpu_custom_call.1']
  #allocation6 [shape = 'u8[4096]{0}', space=smem, size = 0x1000, scoped, tag = 'prefetched SMEM operand 0']
  #allocation21 [shape = 's32[]', space=sflag, size = 0x4, offset = 0, fixed_abs, tag = 'sflag constant byte address 0x0 - dummy sync flag']
  #allocation22 [shape = 's32[]', space=sflag, size = 0x4, offset = 0, fixed_abs, tag = 'sflag constant byte address 0x0 - dummy sync flag']
  #allocation23 [shape = 'u32[]', space=smem, size = 0x4, offset = 0x44, fixed_abs, tag = 'smem constant byte address 0x44 - assertion arg 0']
  #allocation24 [shape = 'u32[]', space=smem, size = 0x4, offset = 0x48, fixed_abs, tag = 'smem constant byte address 0x48 - assertion arg 1']
  #allocation25 [shape = 's32[]', space=sflag, size = 0x4, offset = 0, fixed_abs, tag = 'sflag constant byte address 0x0 - dummy sync flag']
  #allocation26 [shape = 's32[]', space=sflag, size = 0x4, offset = 0, fixed_abs, tag = 'sflag constant byte address 0x0 - dummy sync flag']
  #allocation27 [shape = 's32[]', space=sflag, size = 0x4, offset = 0, fixed_abs, tag = 'sflag constant byte address 0x0 - dummy sync flag']
  #allocation28 [shape = 's32[]', space=sflag, size = 0x4, offset = 0, fixed_abs, tag = 'sflag constant byte address 0x0 - dummy sync flag']
  #allocation29 [shape = 's32[]', space=sflag, size = 0x4, offset = 0, fixed_abs, tag = 'sflag constant byte address 0x0 - dummy sync flag']
  #allocation30 [shape = 's32[]', space=sflag, size = 0x4, offset = 0, fixed_abs, tag = 'sflag constant byte address 0x0 - dummy sync flag']
  #allocation31 [shape = 's32[]', space=sflag, size = 0x4, offset = 0, fixed_abs, tag = 'sflag constant byte address 0x0 - dummy sync flag']
  #allocation32 [shape = 's32[]', space=sflag, size = 0x4, offset = 0, fixed_abs, tag = 'sflag constant byte address 0x0 - dummy sync flag']
  #allocation33 [shape = 's32[]', space=sflag, size = 0x4, offset = 0, fixed_abs, tag = 'sflag constant byte address 0x0 - dummy sync flag']
  #allocation34 [shape = 's32[]', space=sflag, size = 0x4, offset = 0, fixed_abs, tag = 'sflag constant byte address 0x0 - dummy sync flag']
  #allocation35 [shape = 's32[]', space=sflag, size = 0x4, offset = 0, fixed_abs, tag = 'sflag constant byte address 0x0 - dummy sync flag']
  #allocation36 [shape = 's32[]', space=sflag, size = 0x4, offset = 0, fixed_abs, tag = 'sflag constant byte address 0x0 - dummy sync flag']
  #allocation37 [shape = 's32[]', space=sflag, size = 0x4, offset = 0, fixed_abs, tag = 'sflag constant byte address 0x0 - dummy sync flag']
  #allocation38 [shape = 's32[]', space=sflag, size = 0x4, offset = 0, fixed_abs, tag = 'sflag constant byte address 0x0 - dummy sync flag']
  #allocation39 [shape = 's32[]', space=sflag, size = 0x4, offset = 0, fixed_abs, tag = 'sflag constant byte address 0x0 - dummy sync flag']
  #allocation40 [shape = 's32[]', space=sflag, size = 0x4, offset = 0, fixed_abs, tag = 'sflag constant byte address 0x0 - dummy sync flag']
  #allocation41 [shape = 's32[]', space=sflag, size = 0x4, offset = 0, fixed_abs, tag = 'sflag constant byte address 0x0 - dummy sync flag']
  #allocation42 [shape = 's32[]', space=sflag, size = 0x4, offset = 0, fixed_abs, tag = 'sflag constant byte address 0x0 - dummy sync flag']
  #allocation43 [shape = 's32[]', space=sflag, size = 0x4, offset = 0, fixed_abs, tag = 'sflag constant byte address 0x0 - dummy sync flag']
  #allocation44 [shape = 's32[]', space=sflag, size = 0x4, offset = 0, fixed_abs, tag = 'sflag constant byte address 0x0 - dummy sync flag']
  #allocation45 [shape = 's32[]', space=sflag, size = 0x4, offset = 0, fixed_abs, tag = 'sflag constant byte address 0x0 - dummy sync flag']
  #allocation46 [shape = 's32[]', space=sflag, size = 0x4, offset = 0, fixed_abs, tag = 'sflag constant byte address 0x0 - dummy sync flag']
  #allocation47 [shape = 's32[]', space=sflag, size = 0x4, offset = 0, fixed_abs, tag = 'sflag constant byte address 0x0 - dummy sync flag']
  #allocation48 [shape = 's32[]', space=sflag, size = 0x4, offset = 0, fixed_abs, tag = 'sflag constant byte address 0x0 - dummy sync flag']
  #allocation49 [shape = 's32[]', space=sflag, size = 0x4, offset = 0, fixed_abs, tag = 'sflag constant byte address 0x0 - dummy sync flag']
  #allocation50 [shape = 's32[]', space=sflag, size = 0x4, offset = 0, fixed_abs, tag = 'sflag constant byte address 0x0 - dummy sync flag']
  #allocation51 [shape = 's32[]', space=sflag, size = 0x4, offset = 0, fixed_abs, tag = 'sflag constant byte address 0x0 - dummy sync flag']
  #allocation52 [shape = 's32[]', space=sflag, size = 0x4, offset = 0, fixed_abs, tag = 'sflag constant byte address 0x0 - dummy sync flag']
  #allocation53 [shape = 's32[]', space=sflag, size = 0x4, offset = 0, fixed_abs, tag = 'sflag constant byte address 0x0 - dummy sync flag']
  #allocation54 [shape = 's32[]', space=sflag, size = 0x4, offset = 0, fixed_abs, tag = 'sflag constant byte address 0x0 - dummy sync flag']
  %s0 = inlined_call_operand.hbm [shape: s32[5,8], index: 0, kind: input, shape index: {}]
  %s1 = inlined_call_operand.hbm [shape: f32[16,128], index: 1, kind: input, shape index: {}]
  %s2 = inlined_call_operand.hbm [shape: f32[8,128], index: 2, kind: input, shape index: {}]
  %s3 = inlined_call_operand.hbm [shape: f32[8,8,128], index: 3, kind: input, shape index: {}]
  %s4 = inlined_call_operand.hbm [shape: bf16[128,384], index: 4, kind: input, shape index: {}]
  %s5 = inlined_call_operand.hbm [shape: bf16[128,384], index: 5, kind: input, shape index: {}]
  %s6 = inlined_call_operand.hbm [shape: bf16[256,128], index: 6, kind: input, shape index: {}]
  %s7 = inlined_call_operand.hbm [shape: f32[128,128], index: 7, kind: input, shape index: {}]
  %s8 = inlined_call_operand.vmem [shape: f32[1,1024], index: 8, kind: input, shape index: {}]
  %s9 = inlined_call_operand.hbm [shape: f32[5,8,128], index: 9, kind: output, shape index: {0}]
  %s10 = inlined_call_operand.hbm [shape: f32[8,128], index: 10, kind: output, shape index: {1}]
  %11 = xla_tuple %s9, %s10
  %s12 = sld [smem:[#allocation0]]
  $region165: #{tpu_custom_call.1} parent=0
    _
  %s14 = ssub.s32 1, %s12
  %s15 = scalar_select 0, %s14, %s12
  %17 = dma.hbm_to_smem %s0, 128, [#allocation6], [#allocation5]
  %18 = dma.done [#allocation5], 128
  %19 = sfence
  $region1: #{tpu_custom_call.1} parent=0
    #allocation7 [shape = 'u8[4096]{0}', space=vmem, size = 0x1000, scoped, tag = 'input window, operand 2, single buffered']
    #allocation8 [shape = 's32[2]{0}', space=sflag, size = 0x8, scoped, tag = 'scoped memory for tpu_custom_call.1']
    #allocation9 [shape = 's32[2]{0}', space=sflag, size = 0x8, scoped, tag = 'scoped memory for tpu_custom_call.1']
    #allocation10 [shape = 'u8[32768]{0}', space=vmem, size = 0x8000, scoped, tag = 'input window, operand 3, single buffered']
    #allocation11 [shape = 's32[1]{0}', space=sflag, size = 0x4, scoped, tag = 'scoped memory for tpu_custom_call.1']
    #allocation12 [shape = 'u8[98304]{0}', space=vmem, size = 0x18000, scoped, tag = 'input window, operand 4, single buffered']
    #allocation13 [shape = 'u8[98304]{0}', space=vmem, size = 0x18000, scoped, tag = 'input window, operand 5, single buffered']
    #allocation14 [shape = 's32[1]{0}', space=sflag, size = 0x4, scoped, tag = 'scoped memory for tpu_custom_call.1']
    #allocation15 [shape = 'u8[65536]{0}', space=vmem, size = 0x10000, scoped, tag = 'input window, operand 6, single buffered']
    #allocation16 [shape = 'u8[65536]{0}', space=vmem, size = 0x10000, scoped, tag = 'input window, operand 7, single buffered']
    #allocation17 [shape = 's32[1]{0}', space=sflag, size = 0x4, scoped, tag = 'scoped memory for tpu_custom_call.1']
    #allocation18 [shape = 'u8[8192]{0}', space=vmem, size = 0x2000, scoped, tag = 'output window, operand 0']
    #allocation19 [shape = 'u8[4096]{0}', space=vmem, size = 0x1000, scoped, tag = 'output window, operand 1, single buffered']
    #allocation20 [shape = 's32[1]{0}', space=sflag, size = 0x4, scoped, tag = 'scoped memory for tpu_custom_call.1']
    %20 = vsyncpa [#allocation8], 0
    %21 = vsyncpa [#allocation11], 0
    %22 = vsyncpa [#allocation14], 0
    %23 = vsyncpa [#allocation17], 0
    %24 = vsyncpa [#allocation9], 0
    %s25 = scalar_lea.sflag [#allocation9], 1
    %26 = vsyncpa %s25, 0
    %27 = vsyncpa [#allocation20], 0
    loop: start=0, step=1, limit=7
    $region2: #{tpu_custom_call.1} parent=1 // loop_pre_header
      _
    $region3: #{tpu_custom_call.1} parent=1 // loop_header
      %s29 = sphi 0, %s33
      %p30 = scmp.ge.s32.totalorder %s29, 7
      %s37 = sphi 0, %s37
      %s39 = sphi 0, %s37
      %s40 = sphi 0, %s39
      %s54 = sphi 0, %s40
      %s58 = sphi 0, %s58
      %s60 = sphi 0, %s58
      %s61 = sphi 0, %s60
      %s75 = sphi 0, %s61
      %s79 = sphi 0, %s79
      %s81 = sphi 0, %s79
      %s82 = sphi 0, %s81
      %s96 = sphi 0, %s82
      %s100 = sphi 0, %s100
      %s102 = sphi 0, %s100
      %s103 = sphi 0, %s102
      %s117 = sphi 0, %s103
      %s121 = sphi 0, %s121
      %s123 = sphi 0, %s121
      %s124 = sphi 0, %s123
      %s138 = sphi 0, %s124
      %s142 = sphi 0, %s142
      %s144 = sphi 0, %s142
      %s145 = sphi 0, %s144
      %s159 = sphi 0, %s145
      %s163 = sphi 0, %s163
      %s165 = sphi 0, %s163
      %s166 = sphi 0, %s165
      %s180 = sphi 0, %s166
      %s186 = sphi 0, %s188
      %s189 = sphi 0, %s186
      %s190 = sphi 0, %s189
      %s206 = sphi 0, %s190
      %s210 = sphi 0, %s210
      %s212 = sphi 0, %s210
      %s213 = sphi 0, %s212
      %s227 = sphi 0, %s213
    $region4: #{tpu_custom_call.1} parent=1 // loop_header_branch
      %32 = sbr.rel (%p30) target = $region8
    $region5: #{tpu_custom_call.1} parent=1 // loop_body
      %s34 = ssub.s32 %s29, 1
      %s35 = ssub.s32 %s29, 2
      %s36 = sadd.s32 %s29, 1
      %s38 = sadd.s32 %s37, 1
      %p41 = scmp.eq.s32.totalorder %s29, 4
      %p42 = scmp.ne.s32.totalorder %s37, %s39
      %p43 = scmp.eq.s32.totalorder %s29, 0
      %p44 = por %p42, %p43
      %p45 = scmp.ne.s32.totalorder %s37, %s39
      %p46 = scmp.eq.s32.totalorder %s34, 4
      %p47 = por %p45, %p46
      %p48 = scmp.ne.s32.totalorder %s39, %s40
      %p49 = scmp.eq.s32.totalorder %s34, 0
      %p50 = por %p48, %p49
      %p51 = scmp.ne.s32.totalorder %s39, %s40
      %p52 = scmp.eq.s32.totalorder %s35, 4
      %p53 = por %p51, %p52
      %p55 = scmp.ne.s32.totalorder %s40, %s54
      %p56 = scmp.eq.s32.totalorder %s35, 0
      %p57 = por %p55, %p56
      %s59 = sadd.s32 %s58, 1
      %p62 = scmp.eq.s32.totalorder %s29, 4
      %p63 = scmp.ne.s32.totalorder %s58, %s60
      %p64 = scmp.eq.s32.totalorder %s29, 0
      %p65 = por %p63, %p64
      %p66 = scmp.ne.s32.totalorder %s58, %s60
      %p67 = scmp.eq.s32.totalorder %s34, 4
      %p68 = por %p66, %p67
      %p69 = scmp.ne.s32.totalorder %s60, %s61
      %p70 = scmp.eq.s32.totalorder %s34, 0
      %p71 = por %p69, %p70
      %p72 = scmp.ne.s32.totalorder %s60, %s61
      %p73 = scmp.eq.s32.totalorder %s35, 4
      %p74 = por %p72, %p73
      %p76 = scmp.ne.s32.totalorder %s61, %s75
      %p77 = scmp.eq.s32.totalorder %s35, 0
      %p78 = por %p76, %p77
      %s80 = sadd.s32 %s79, 1
      %p83 = scmp.eq.s32.totalorder %s29, 4
      %p84 = scmp.ne.s32.totalorder %s79, %s81
      %p85 = scmp.eq.s32.totalorder %s29, 0
      %p86 = por %p84, %p85
      %p87 = scmp.ne.s32.totalorder %s79, %s81
      %p88 = scmp.eq.s32.totalorder %s34, 4
      %p89 = por %p87, %p88
      %p90 = scmp.ne.s32.totalorder %s81, %s82
      %p91 = scmp.eq.s32.totalorder %s34, 0
      %p92 = por %p90, %p91
      %p93 = scmp.ne.s32.totalorder %s81, %s82
      %p94 = scmp.eq.s32.totalorder %s35, 4
      %p95 = por %p93, %p94
      %p97 = scmp.ne.s32.totalorder %s82, %s96
      %p98 = scmp.eq.s32.totalorder %s35, 0
      %p99 = por %p97, %p98
      %s101 = sadd.s32 %s100, 1
      %p104 = scmp.eq.s32.totalorder %s29, 4
      %p105 = scmp.ne.s32.totalorder %s100, %s102
      %p106 = scmp.eq.s32.totalorder %s29, 0
      %p107 = por %p105, %p106
      %p108 = scmp.ne.s32.totalorder %s100, %s102
      %p109 = scmp.eq.s32.totalorder %s34, 4
      %p110 = por %p108, %p109
      %p111 = scmp.ne.s32.totalorder %s102, %s103
      %p112 = scmp.eq.s32.totalorder %s34, 0
      %p113 = por %p111, %p112
      %p114 = scmp.ne.s32.totalorder %s102, %s103
      %p115 = scmp.eq.s32.totalorder %s35, 4
      %p116 = por %p114, %p115
      %p118 = scmp.ne.s32.totalorder %s103, %s117
      %p119 = scmp.eq.s32.totalorder %s35, 0
      %p120 = por %p118, %p119
      %s122 = sadd.s32 %s121, 1
      %p125 = scmp.eq.s32.totalorder %s29, 4
      %p126 = scmp.ne.s32.totalorder %s121, %s123
      %p127 = scmp.eq.s32.totalorder %s29, 0
      %p128 = por %p126, %p127
      %p129 = scmp.ne.s32.totalorder %s121, %s123
      %p130 = scmp.eq.s32.totalorder %s34, 4
      %p131 = por %p129, %p130
      %p132 = scmp.ne.s32.totalorder %s123, %s124
      %p133 = scmp.eq.s32.totalorder %s34, 0
      %p134 = por %p132, %p133
      %p135 = scmp.ne.s32.totalorder %s123, %s124
      %p136 = scmp.eq.s32.totalorder %s35, 4
      %p137 = por %p135, %p136
      %p139 = scmp.ne.s32.totalorder %s124, %s138
      %p140 = scmp.eq.s32.totalorder %s35, 0
      %p141 = por %p139, %p140
      %s143 = sadd.s32 %s142, 1
      %p146 = scmp.eq.s32.totalorder %s29, 4
      %p147 = scmp.ne.s32.totalorder %s142, %s144
      %p148 = scmp.eq.s32.totalorder %s29, 0
      %p149 = por %p147, %p148
      %p150 = scmp.ne.s32.totalorder %s142, %s144
      %p151 = scmp.eq.s32.totalorder %s34, 4
      %p152 = por %p150, %p151
      %p153 = scmp.ne.s32.totalorder %s144, %s145
      %p154 = scmp.eq.s32.totalorder %s34, 0
      %p155 = por %p153, %p154
      %p156 = scmp.ne.s32.totalorder %s144, %s145
      %p157 = scmp.eq.s32.totalorder %s35, 4
      %p158 = por %p156, %p157
      %p160 = scmp.ne.s32.totalorder %s145, %s159
      %p161 = scmp.eq.s32.totalorder %s35, 0
      %p162 = por %p160, %p161
      %s164 = sadd.s32 %s163, 1
      %p167 = scmp.eq.s32.totalorder %s29, 4
      %p168 = scmp.ne.s32.totalorder %s163, %s165
      %p169 = scmp.eq.s32.totalorder %s29, 0
      %p170 = por %p168, %p169
      %p171 = scmp.ne.s32.totalorder %s163, %s165
      %p172 = scmp.eq.s32.totalorder %s34, 4
      %p173 = por %p171, %p172
      %p174 = scmp.ne.s32.totalorder %s165, %s166
      %p175 = scmp.eq.s32.totalorder %s34, 0
      %p176 = por %p174, %p175
      %p177 = scmp.ne.s32.totalorder %s165, %s166
      %p178 = scmp.eq.s32.totalorder %s35, 4
      %p179 = por %p177, %p178
      %p181 = scmp.ne.s32.totalorder %s166, %s180
      %p182 = scmp.eq.s32.totalorder %s35, 0
      %p183 = por %p181, %p182
      %s184 = ssub.s32 %s29, %s36
      %p185 = scmp.eq.s32.totalorder %s184, 0
      %s187 = sadd.s32 %s186, 1
      %s188 = scalar_select %p185, %s186, %s187
      %p191 = pneg %p185
      %p192 = scmp.eq.s32.totalorder %s29, 4
      %p193 = por %p191, %p192
      %p194 = scmp.ne.s32.totalorder %s186, %s189
      %p195 = scmp.eq.s32.totalorder %s29, 0
      %p196 = por %p194, %p195
      %p197 = scmp.ne.s32.totalorder %s186, %s189
      %p198 = scmp.eq.s32.totalorder %s34, 4
      %p199 = por %p197, %p198
      %p200 = scmp.ne.s32.totalorder %s189, %s190
      %p201 = scmp.eq.s32.totalorder %s34, 0
      %p202 = por %p200, %p201
      %p203 = scmp.ne.s32.totalorder %s189, %s190
      %p204 = scmp.eq.s32.totalorder %s35, 4
      %p205 = por %p203, %p204
      %p207 = scmp.ne.s32.totalorder %s190, %s206
      %p208 = scmp.eq.s32.totalorder %s35, 0
      %p209 = por %p207, %p208
      %s211 = sadd.s32 %s210, 1
      %p214 = scmp.eq.s32.totalorder %s29, 4
      %p215 = scmp.ne.s32.totalorder %s210, %s212
      %p216 = scmp.eq.s32.totalorder %s29, 0
      %p217 = por %p215, %p216
      %p218 = scmp.ne.s32.totalorder %s210, %s212
      %p219 = scmp.eq.s32.totalorder %s34, 4
      %p220 = por %p218, %p219
      %p221 = scmp.ne.s32.totalorder %s212, %s213
      %p222 = scmp.eq.s32.totalorder %s34, 0
      %p223 = por %p221, %p222
      %p224 = scmp.ne.s32.totalorder %s212, %s213
      %p225 = scmp.eq.s32.totalorder %s35, 4
      %p226 = por %p224, %p225
      %p228 = scmp.ne.s32.totalorder %s213, %s227
      %p229 = scmp.eq.s32.totalorder %s35, 0
      %p230 = por %p228, %p229
      %p231 = scmp.le.s32.totalorder 1, %s29
      %p232 = scmp.lt.s32.totalorder %s29, 6
      %p233 = pnand %p231, %p232
      %p234 = pneg %p233
      // Predicated region
      $region9: #{tpu_custom_call.1} parent=5 // pred_check
        _
      $region10: #{tpu_custom_call.1} parent=5 // pred_check_branch
        %236 = sbr.rel (%p233) target = $region12
      $region11: #{tpu_custom_call.1} parent=5 // pred_region
        %s237 = ssub.s32 %s29, 1
        // Predicated region
        $region13: #{tpu_custom_call.1} parent=11 // pred_check
          %p238 = pneg %p50
        $region14: #{tpu_custom_call.1} parent=11 // pred_check_branch
          %240 = sbr.rel (%p238) target = $region16
        $region15: #{tpu_custom_call.1} parent=11 // pred_region
          %s242 = ssub.s32 128, 128
          %243 = vsyncadd [#allocation8], %s242
          %s245 = sshll.u32 [#allocation7], 4
          %s246 = int_to_ptr.vmem [resolvable:$true] %s245
          %248 = dma.hbm_to_vmem [thread:$0]  %s2, 128, %s246, [#allocation8]
        $region16: #{tpu_custom_call.1} parent=11 // pred_fallthru
          _
        // Predicated region
        $region17: #{tpu_custom_call.1} parent=11 // pred_check
          %p249 = pneg %p71
        $region18: #{tpu_custom_call.1} parent=11 // pred_check_branch
          %251 = sbr.rel (%p249) target = $region20
        $region19: #{tpu_custom_call.1} parent=11 // pred_region
          %s253 = ssub.s32 1024, 1024
          %254 = vsyncadd [#allocation11], %s253
          %s255 = sshll.u32 [#allocation10], 4
          %s256 = int_to_ptr.vmem [resolvable:$true] %s255
          %261 = dma.hbm_to_vmem [thread:$0]  %s3, 1024, %s256, [#allocation11], 128, 128, 8
        $region20: #{tpu_custom_call.1} parent=11 // pred_fallthru
          _
        // Predicated region
        $region21: #{tpu_custom_call.1} parent=11 // pred_check
          %p262 = pneg %p92
        $region22: #{tpu_custom_call.1} parent=11 // pred_check_branch
          %264 = sbr.rel (%p262) target = $region24
        $region23: #{tpu_custom_call.1} parent=11 // pred_region
          %s266 = ssub.s32 3072, 3072
          %267 = vsyncadd [#allocation11], %s266
          %s268 = sshll.u32 [#allocation12], 4
          %s269 = int_to_ptr.vmem [resolvable:$true] %s268
          %274 = dma.hbm_to_vmem [thread:$0]  %s4, 3072, %s269, [#allocation11], 192, 192, 12
        $region24: #{tpu_custom_call.1} parent=11 // pred_fallthru
          _
        // Predicated region
        $region25: #{tpu_custom_call.1} parent=11 // pred_check
          %p275 = pneg %p113
        $region26: #{tpu_custom_call.1} parent=11 // pred_check_branch
          %277 = sbr.rel (%p275) target = $region28
        $region27: #{tpu_custom_call.1} parent=11 // pred_region
          %s279 = ssub.s32 3072, 3072
          %280 = vsyncadd [#allocation14], %s279
          %s281 = sshll.u32 [#allocation13], 4
          %s282 = int_to_ptr.vmem [resolvable:$true] %s281
          %287 = dma.hbm_to_vmem [thread:$0]  %s5, 3072, %s282, [#allocation14], 192, 192, 12
        $region28: #{tpu_custom_call.1} parent=11 // pred_fallthru
          _
        // Predicated region
        $region29: #{tpu_custom_call.1} parent=11 // pred_check
          %p288 = pneg %p134
        $region30: #{tpu_custom_call.1} parent=11 // pred_check_branch
          %290 = sbr.rel (%p288) target = $region32
        $region31: #{tpu_custom_call.1} parent=11 // pred_region
          %s292 = ssub.s32 2048, 2048
          %293 = vsyncadd [#allocation14], %s292
          %s294 = sshll.u32 [#allocation15], 4
          %s295 = int_to_ptr.vmem [resolvable:$true] %s294
          %300 = dma.hbm_to_vmem [thread:$0]  %s6, 2048, %s295, [#allocation14], 64, 64, 4
        $region32: #{tpu_custom_call.1} parent=11 // pred_fallthru
          _
        // Predicated region
        $region33: #{tpu_custom_call.1} parent=11 // pred_check
          %p301 = pneg %p155
        $region34: #{tpu_custom_call.1} parent=11 // pred_check_branch
          %303 = sbr.rel (%p301) target = $region36
        $region35: #{tpu_custom_call.1} parent=11 // pred_region
          %s305 = ssub.s32 2048, 2048
          %306 = vsyncadd [#allocation17], %s305
          %s307 = sshll.u32 [#allocation16], 4
          %s308 = int_to_ptr.vmem [resolvable:$true] %s307
          %313 = dma.hbm_to_vmem [thread:$0]  %s7, 2048, %s308, [#allocation17], 128, 128, 8
        $region36: #{tpu_custom_call.1} parent=11 // pred_fallthru
          _
        // Predicated region
        $region37: #{tpu_custom_call.1} parent=11 // pred_check
          %p314 = pneg %p176
        $region38: #{tpu_custom_call.1} parent=11 // pred_check_branch
          %316 = sbr.rel (%p314) target = $region40
        $region39: #{tpu_custom_call.1} parent=11 // pred_region
          _
        $region40: #{tpu_custom_call.1} parent=11 // pred_fallthru
          _
      $region12: #{tpu_custom_call.1} parent=5 // pred_fallthru
        _
      %p317 = scmp.lt.s32.totalorder %s29, 5
      // Predicated region
      $region41: #{tpu_custom_call.1} parent=5 // pred_check
        %p318 = pneg %p317
      $region42: #{tpu_custom_call.1} parent=5 // pred_check_branch
        %320 = sbr.rel (%p318) target = $region44
      $region43: #{tpu_custom_call.1} parent=5 // pred_region
        _
      $region44: #{tpu_custom_call.1} parent=5 // pred_fallthru
        _
      %p321 = scmp.le.s32.totalorder 1, %s29
      %p322 = scmp.lt.s32.totalorder %s29, 6
      %p323 = pnand %p321, %p322
      %p324 = pneg %p323
      // Predicated region
      $region45: #{tpu_custom_call.1} parent=5 // pred_check
        _
      $region46: #{tpu_custom_call.1} parent=5 // pred_check_branch
        %326 = sbr.rel (%p323) target = $region48
      $region47: #{tpu_custom_call.1} parent=5 // pred_region
        %s327 = ssub.s32 %s29, 1
        // Predicated region
        $region49: #{tpu_custom_call.1} parent=47 // pred_check
          %p328 = pneg %p50
        $region50: #{tpu_custom_call.1} parent=47 // pred_check_branch
          %330 = sbr.rel (%p328) target = $region52
        $region51: #{tpu_custom_call.1} parent=47 // pred_region
          %331 = dma.done [#allocation8], 128
        $region52: #{tpu_custom_call.1} parent=47 // pred_fallthru
          _
        // Predicated region
        $region53: #{tpu_custom_call.1} parent=47 // pred_check
          %p332 = pneg %p71
        $region54: #{tpu_custom_call.1} parent=47 // pred_check_branch
          %334 = sbr.rel (%p332) target = $region56
        $region55: #{tpu_custom_call.1} parent=47 // pred_region
          %335 = dma.done [#allocation11], 1024
        $region56: #{tpu_custom_call.1} parent=47 // pred_fallthru
          _
        // Predicated region
        $region57: #{tpu_custom_call.1} parent=47 // pred_check
          %p336 = pneg %p92
        $region58: #{tpu_custom_call.1} parent=47 // pred_check_branch
          %338 = sbr.rel (%p336) target = $region60
        $region59: #{tpu_custom_call.1} parent=47 // pred_region
          %339 = dma.done [#allocation11], 3072
        $region60: #{tpu_custom_call.1} parent=47 // pred_fallthru
          _
        // Predicated region
        $region61: #{tpu_custom_call.1} parent=47 // pred_check
          %p340 = pneg %p113
        $region62: #{tpu_custom_call.1} parent=47 // pred_check_branch
          %342 = sbr.rel (%p340) target = $region64
        $region63: #{tpu_custom_call.1} parent=47 // pred_region
          %343 = dma.done [#allocation14], 3072
        $region64: #{tpu_custom_call.1} parent=47 // pred_fallthru
          _
        // Predicated region
        $region65: #{tpu_custom_call.1} parent=47 // pred_check
          %p344 = pneg %p134
        $region66: #{tpu_custom_call.1} parent=47 // pred_check_branch
          %346 = sbr.rel (%p344) target = $region68
        $region67: #{tpu_custom_call.1} parent=47 // pred_region
          %347 = dma.done [#allocation14], 2048
        $region68: #{tpu_custom_call.1} parent=47 // pred_fallthru
          _
        // Predicated region
        $region69: #{tpu_custom_call.1} parent=47 // pred_check
          %p348 = pneg %p155
        $region70: #{tpu_custom_call.1} parent=47 // pred_check_branch
          %350 = sbr.rel (%p348) target = $region72
        $region71: #{tpu_custom_call.1} parent=47 // pred_region
          %351 = dma.done [#allocation17], 2048
        $region72: #{tpu_custom_call.1} parent=47 // pred_fallthru
          _
        %p352 = pneg %p50
        %p353 = pneg %p47
        %p354 = pneg %p71
        %p355 = pneg %p68
        %p356 = pneg %p92
        %p357 = pneg %p89
        %p358 = pneg %p113
        %p359 = pneg %p110
        %p360 = pneg %p134
        %p361 = pneg %p131
        %p362 = pneg %p155
        %p363 = pneg %p152
        %p364 = pneg %p176
        %p365 = pneg %p173
        %p366 = pneg %p202
        %p367 = pneg %p199
        %s368 = sand.u32 %s189, 1
        %s369 = scalar_lea.sflag [#allocation9], %s368
        %s370 = sand.u32 %s189, 1
        %s371 = smul.addr %s370, 8
        %s372 = scalar_lea.vmem [#allocation18], %s371
        %p373 = pneg %p223
        %p374 = pneg %p220
        %p376 = scmp.eq.s32.totalorder %s34, 0
        // Predicated region
        $region73: #{tpu_custom_call.1} parent=47 // pred_check
          %p377 = pneg %p376
        $region74: #{tpu_custom_call.1} parent=47 // pred_check_branch
          %379 = sbr.rel (%p377) target = $region76
        $region75: #{tpu_custom_call.1} parent=47 // pred_region
          %v380 = vld [vmem:[#allocation7] sm:$0xff]
          %381 = vst [vmem:[#allocation3] sm:$0xff] %v380
          %s382 = sld [smem:[#allocation6]]
          %s383 = smul.addr %s382, 16
          %s384 = scalar_lea.hbm %s1, %s383
          // Predicated region
          $region77: #{tpu_custom_call.1} parent=75 // pred_check
            _
          $region78: #{tpu_custom_call.1} parent=75 // pred_check_branch
            %386 = sbr.rel target = $region80
          $region79: #{tpu_custom_call.1} parent=75 // pred_region
            %387 = sst [smem:[#allocation23]] [#allocation22]
            %388 = sst [smem:[#allocation24]] [#allocation21]
          $region80: #{tpu_custom_call.1} parent=75 // pred_fallthru
            _
          %390 = shalt.err (0)
          %s392 = sshll.u32 [#allocation2], 4
          %s393 = int_to_ptr.vmem [resolvable:$true] %s392
          %395 = dma.hbm_to_vmem [thread:$0]  %s384, 16, %s393, [#allocation4]
          %s396 = sld [smem:[#allocation6 + $0x1]]
          %s397 = smul.addr %s396, 16
          %s398 = scalar_lea.hbm %s1, %s397
          %s399 = scalar_lea.vmem [#allocation2], 1
          %s400 = scalar_lea.sflag [#allocation4], 1
          // Predicated region
          $region81: #{tpu_custom_call.1} parent=75 // pred_check
            _
          $region82: #{tpu_custom_call.1} parent=75 // pred_check_branch
            %402 = sbr.rel target = $region84
          $region83: #{tpu_custom_call.1} parent=75 // pred_region
            %403 = sst [smem:[#allocation23]] [#allocation26]
            %404 = sst [smem:[#allocation24]] [#allocation25]
          $region84: #{tpu_custom_call.1} parent=75 // pred_fallthru
            _
          %406 = shalt.err (0)
          %s408 = sshll.u32 %s399, 4
          %s409 = int_to_ptr.vmem [resolvable:$true] %s408
          %411 = dma.hbm_to_vmem [thread:$0]  %s398, 16, %s409, %s400
          %s412 = sld [smem:[#allocation6 + $0x2]]
          %s413 = smul.addr %s412, 16
          %s414 = scalar_lea.hbm %s1, %s413
          %s415 = scalar_lea.vmem [#allocation2], 2
          %s416 = scalar_lea.sflag [#allocation4], 2
          // Predicated region
          $region85: #{tpu_custom_call.1} parent=75 // pred_check
            _
          $region86: #{tpu_custom_call.1} parent=75 // pred_check_branch
            %418 = sbr.rel target = $region88
          $region87: #{tpu_custom_call.1} parent=75 // pred_region
            %419 = sst [smem:[#allocation23]] [#allocation28]
            %420 = sst [smem:[#allocation24]] [#allocation27]
          $region88: #{tpu_custom_call.1} parent=75 // pred_fallthru
            _
          %422 = shalt.err (0)
          %s424 = sshll.u32 %s415, 4
          %s425 = int_to_ptr.vmem [resolvable:$true] %s424
          %427 = dma.hbm_to_vmem [thread:$0]  %s414, 16, %s425, %s416
          %s428 = sld [smem:[#allocation6 + $0x3]]
          %s429 = smul.addr %s428, 16
          %s430 = scalar_lea.hbm %s1, %s429
          %s431 = scalar_lea.vmem [#allocation2], 3
          %s432 = scalar_lea.sflag [#allocation4], 3
          // Predicated region
          $region89: #{tpu_custom_call.1} parent=75 // pred_check
            _
          $region90: #{tpu_custom_call.1} parent=75 // pred_check_branch
            %434 = sbr.rel target = $region92
          $region91: #{tpu_custom_call.1} parent=75 // pred_region
            %435 = sst [smem:[#allocation23]] [#allocation30]
            %436 = sst [smem:[#allocation24]] [#allocation29]
          $region92: #{tpu_custom_call.1} parent=75 // pred_fallthru
            _
          %438 = shalt.err (0)
          %s440 = sshll.u32 %s431, 4
          %s441 = int_to_ptr.vmem [resolvable:$true] %s440
          %443 = dma.hbm_to_vmem [thread:$0]  %s430, 16, %s441, %s432
          %s444 = sld [smem:[#allocation6 + $0x4]]
          %s445 = smul.addr %s444, 16
          %s446 = scalar_lea.hbm %s1, %s445
          %s447 = scalar_lea.vmem [#allocation2], 4
          %s448 = scalar_lea.sflag [#allocation4], 4
          // Predicated region
          $region93: #{tpu_custom_call.1} parent=75 // pred_check
            _
          $region94: #{tpu_custom_call.1} parent=75 // pred_check_branch
            %450 = sbr.rel target = $region96
          $region95: #{tpu_custom_call.1} parent=75 // pred_region
            %451 = sst [smem:[#allocation23]] [#allocation32]
            %452 = sst [smem:[#allocation24]] [#allocation31]
          $region96: #{tpu_custom_call.1} parent=75 // pred_fallthru
            _
          %454 = shalt.err (0)
          %s456 = sshll.u32 %s447, 4
          %s457 = int_to_ptr.vmem [resolvable:$true] %s456
          %459 = dma.hbm_to_vmem [thread:$0]  %s446, 16, %s457, %s448
          %s460 = sld [smem:[#allocation6 + $0x5]]
          %s461 = smul.addr %s460, 16
          %s462 = scalar_lea.hbm %s1, %s461
          %s463 = scalar_lea.vmem [#allocation2], 5
          %s464 = scalar_lea.sflag [#allocation4], 5
          // Predicated region
          $region97: #{tpu_custom_call.1} parent=75 // pred_check
            _
          $region98: #{tpu_custom_call.1} parent=75 // pred_check_branch
            %466 = sbr.rel target = $region100
          $region99: #{tpu_custom_call.1} parent=75 // pred_region
            %467 = sst [smem:[#allocation23]] [#allocation34]
            %468 = sst [smem:[#allocation24]] [#allocation33]
          $region100: #{tpu_custom_call.1} parent=75 // pred_fallthru
            _
          %470 = shalt.err (0)
          %s472 = sshll.u32 %s463, 4
          %s473 = int_to_ptr.vmem [resolvable:$true] %s472
          %475 = dma.hbm_to_vmem [thread:$0]  %s462, 16, %s473, %s464
          %s476 = sld [smem:[#allocation6 + $0x6]]
          %s477 = smul.addr %s476, 16
          %s478 = scalar_lea.hbm %s1, %s477
          %s479 = scalar_lea.vmem [#allocation2], 6
          %s480 = scalar_lea.sflag [#allocation4], 6
          // Predicated region
          $region101: #{tpu_custom_call.1} parent=75 // pred_check
            _
          $region102: #{tpu_custom_call.1} parent=75 // pred_check_branch
            %482 = sbr.rel target = $region104
          $region103: #{tpu_custom_call.1} parent=75 // pred_region
            %483 = sst [smem:[#allocation23]] [#allocation36]
            %484 = sst [smem:[#allocation24]] [#allocation35]
          $region104: #{tpu_custom_call.1} parent=75 // pred_fallthru
            _
          %486 = shalt.err (0)
          %s488 = sshll.u32 %s479, 4
          %s489 = int_to_ptr.vmem [resolvable:$true] %s488
          %491 = dma.hbm_to_vmem [thread:$0]  %s478, 16, %s489, %s480
          %s492 = sld [smem:[#allocation6 + $0x7]]
          %s493 = smul.addr %s492, 16
          %s494 = scalar_lea.hbm %s1, %s493
          %s495 = scalar_lea.vmem [#allocation2], 7
          %s496 = scalar_lea.sflag [#allocation4], 7
          // Predicated region
          $region105: #{tpu_custom_call.1} parent=75 // pred_check
            _
          $region106: #{tpu_custom_call.1} parent=75 // pred_check_branch
            %498 = sbr.rel target = $region108
          $region107: #{tpu_custom_call.1} parent=75 // pred_region
            %499 = sst [smem:[#allocation23]] [#allocation38]
            %500 = sst [smem:[#allocation24]] [#allocation37]
          $region108: #{tpu_custom_call.1} parent=75 // pred_fallthru
            _
          %502 = shalt.err (0)
          %s504 = sshll.u32 %s495, 4
          %s505 = int_to_ptr.vmem [resolvable:$true] %s504
          %507 = dma.hbm_to_vmem [thread:$0]  %s494, 16, %s505, %s496
        $region76: #{tpu_custom_call.1} parent=47 // pred_fallthru
          _
        %s508 = sadd.s32 %s34, 1
        %p509 = scmp.lt.s32.totalorder %s508, 5
        // Predicated region
        $region109: #{tpu_custom_call.1} parent=47 // pred_check
          %p510 = pneg %p509
        $region110: #{tpu_custom_call.1} parent=47 // pred_check_branch
          %512 = sbr.rel (%p510) target = $region112
        $region111: #{tpu_custom_call.1} parent=47 // pred_region
          %s513 = sand.u32 %s508, 1
          %s514 = smul.u32 %s508, 128
          %s515 = sld [smem:[#allocation6 + %s514]]
          %s516 = smul.addr %s515, 16
          %s517 = scalar_lea.hbm %s1, %s516
          %s518 = smul.u32 %s513, 8
          %s519 = scalar_lea.vmem [#allocation2], %s518
          %s520 = scalar_lea.sflag [#allocation4], %s518
          // Predicated region
          $region113: #{tpu_custom_call.1} parent=111 // pred_check
            _
          $region114: #{tpu_custom_call.1} parent=111 // pred_check_branch
            %522 = sbr.rel target = $region116
          $region115: #{tpu_custom_call.1} parent=111 // pred_region
            %523 = sst [smem:[#allocation23]] [#allocation40]
            %524 = sst [smem:[#allocation24]] [#allocation39]
          $region116: #{tpu_custom_call.1} parent=111 // pred_fallthru
            _
          %526 = shalt.err (0)
          %s528 = sshll.u32 %s519, 4
          %s529 = int_to_ptr.vmem [resolvable:$true] %s528
          %531 = dma.hbm_to_vmem [thread:$0]  %s517, 16, %s529, %s520
          %s532 = sadd.s32 %s514, 1
          %s533 = sld [smem:[#allocation6 + %s532]]
          %s534 = smul.addr %s533, 16
          %s535 = scalar_lea.hbm %s1, %s534
          %s536 = sadd.s32 1, %s518
          %s537 = scalar_lea.vmem [#allocation2], %s536
          %s538 = scalar_lea.sflag [#allocation4], %s536
          // Predicated region
          $region117: #{tpu_custom_call.1} parent=111 // pred_check
            _
          $region118: #{tpu_custom_call.1} parent=111 // pred_check_branch
            %540 = sbr.rel target = $region120
          $region119: #{tpu_custom_call.1} parent=111 // pred_region
            %541 = sst [smem:[#allocation23]] [#allocation42]
            %542 = sst [smem:[#allocation24]] [#allocation41]
          $region120: #{tpu_custom_call.1} parent=111 // pred_fallthru
            _
          %544 = shalt.err (0)
          %s546 = sshll.u32 %s537, 4
          %s547 = int_to_ptr.vmem [resolvable:$true] %s546
          %549 = dma.hbm_to_vmem [thread:$0]  %s535, 16, %s547, %s538
          %s550 = sadd.s32 %s514, 2
          %s551 = sld [smem:[#allocation6 + %s550]]
          %s552 = smul.addr %s551, 16
          %s553 = scalar_lea.hbm %s1, %s552
          %s554 = sadd.s32 2, %s518
          %s555 = scalar_lea.vmem [#allocation2], %s554
          %s556 = scalar_lea.sflag [#allocation4], %s554
          // Predicated region
          $region121: #{tpu_custom_call.1} parent=111 // pred_check
            _
          $region122: #{tpu_custom_call.1} parent=111 // pred_check_branch
            %558 = sbr.rel target = $region124
          $region123: #{tpu_custom_call.1} parent=111 // pred_region
            %559 = sst [smem:[#allocation23]] [#allocation44]
            %560 = sst [smem:[#allocation24]] [#allocation43]
          $region124: #{tpu_custom_call.1} parent=111 // pred_fallthru
            _
          %562 = shalt.err (0)
          %s564 = sshll.u32 %s555, 4
          %s565 = int_to_ptr.vmem [resolvable:$true] %s564
          %567 = dma.hbm_to_vmem [thread:$0]  %s553, 16, %s565, %s556
          %s568 = sadd.s32 %s514, 3
          %s569 = sld [smem:[#allocation6 + %s568]]
          %s570 = smul.addr %s569, 16
          %s571 = scalar_lea.hbm %s1, %s570
          %s572 = sadd.s32 3, %s518
          %s573 = scalar_lea.vmem [#allocation2], %s572
          %s574 = scalar_lea.sflag [#allocation4], %s572
          // Predicated region
          $region125: #{tpu_custom_call.1} parent=111 // pred_check
            _
          $region126: #{tpu_custom_call.1} parent=111 // pred_check_branch
            %576 = sbr.rel target = $region128
          $region127: #{tpu_custom_call.1} parent=111 // pred_region
            %577 = sst [smem:[#allocation23]] [#allocation46]
            %578 = sst [smem:[#allocation24]] [#allocation45]
          $region128: #{tpu_custom_call.1} parent=111 // pred_fallthru
            _
          %580 = shalt.err (0)
          %s582 = sshll.u32 %s573, 4
          %s583 = int_to_ptr.vmem [resolvable:$true] %s582
          %585 = dma.hbm_to_vmem [thread:$0]  %s571, 16, %s583, %s574
          %s586 = sadd.s32 %s514, 4
          %s587 = sld [smem:[#allocation6 + %s586]]
          %s588 = smul.addr %s587, 16
          %s589 = scalar_lea.hbm %s1, %s588
          %s590 = sadd.s32 4, %s518
          %s591 = scalar_lea.vmem [#allocation2], %s590
          %s592 = scalar_lea.sflag [#allocation4], %s590
          // Predicated region
          $region129: #{tpu_custom_call.1} parent=111 // pred_check
            _
          $region130: #{tpu_custom_call.1} parent=111 // pred_check_branch
            %594 = sbr.rel target = $region132
          $region131: #{tpu_custom_call.1} parent=111 // pred_region
            %595 = sst [smem:[#allocation23]] [#allocation48]
            %596 = sst [smem:[#allocation24]] [#allocation47]
          $region132: #{tpu_custom_call.1} parent=111 // pred_fallthru
            _
          %598 = shalt.err (0)
          %s600 = sshll.u32 %s591, 4
          %s601 = int_to_ptr.vmem [resolvable:$true] %s600
          %603 = dma.hbm_to_vmem [thread:$0]  %s589, 16, %s601, %s592
          %s604 = sadd.s32 %s514, 5
          %s605 = sld [smem:[#allocation6 + %s604]]
          %s606 = smul.addr %s605, 16
          %s607 = scalar_lea.hbm %s1, %s606
          %s608 = sadd.s32 5, %s518
          %s609 = scalar_lea.vmem [#allocation2], %s608
          %s610 = scalar_lea.sflag [#allocation4], %s608
          // Predicated region
          $region133: #{tpu_custom_call.1} parent=111 // pred_check
            _
          $region134: #{tpu_custom_call.1} parent=111 // pred_check_branch
            %612 = sbr.rel target = $region136
          $region135: #{tpu_custom_call.1} parent=111 // pred_region
            %613 = sst [smem:[#allocation23]] [#allocation50]
            %614 = sst [smem:[#allocation24]] [#allocation49]
          $region136: #{tpu_custom_call.1} parent=111 // pred_fallthru
            _
          %616 = shalt.err (0)
          %s618 = sshll.u32 %s609, 4
          %s619 = int_to_ptr.vmem [resolvable:$true] %s618
          %621 = dma.hbm_to_vmem [thread:$0]  %s607, 16, %s619, %s610
          %s622 = sadd.s32 %s514, 6
          %s623 = sld [smem:[#allocation6 + %s622]]
          %s624 = smul.addr %s623, 16
          %s625 = scalar_lea.hbm %s1, %s624
          %s626 = sadd.s32 6, %s518
          %s627 = scalar_lea.vmem [#allocation2], %s626
          %s628 = scalar_lea.sflag [#allocation4], %s626
          // Predicated region
          $region137: #{tpu_custom_call.1} parent=111 // pred_check
            _
          $region138: #{tpu_custom_call.1} parent=111 // pred_check_branch
            %630 = sbr.rel target = $region140
          $region139: #{tpu_custom_call.1} parent=111 // pred_region
            %631 = sst [smem:[#allocation23]] [#allocation52]
            %632 = sst [smem:[#allocation24]] [#allocation51]
          $region140: #{tpu_custom_call.1} parent=111 // pred_fallthru
            _
          %634 = shalt.err (0)
          %s636 = sshll.u32 %s627, 4
          %s637 = int_to_ptr.vmem [resolvable:$true] %s636
          %639 = dma.hbm_to_vmem [thread:$0]  %s625, 16, %s637, %s628
          %s640 = sadd.s32 %s514, 7
          %s641 = sld [smem:[#allocation6 + %s640]]
          %s642 = smul.addr %s641, 16
          %s643 = scalar_lea.hbm %s1, %s642
          %s644 = sadd.s32 7, %s518
          %s645 = scalar_lea.vmem [#allocation2], %s644
          %s646 = scalar_lea.sflag [#allocation4], %s644
          // Predicated region
          $region141: #{tpu_custom_call.1} parent=111 // pred_check
            _
          $region142: #{tpu_custom_call.1} parent=111 // pred_check_branch
            %648 = sbr.rel target = $region144
          $region143: #{tpu_custom_call.1} parent=111 // pred_region
            %649 = sst [smem:[#allocation23]] [#allocation54]
            %650 = sst [smem:[#allocation24]] [#allocation53]
          $region144: #{tpu_custom_call.1} parent=111 // pred_fallthru
            _
          %652 = shalt.err (0)
          %s654 = sshll.u32 %s645, 4
          %s655 = int_to_ptr.vmem [resolvable:$true] %s654
          %657 = dma.hbm_to_vmem [thread:$0]  %s643, 16, %s655, %s646
        $region112: #{tpu_custom_call.1} parent=47 // pred_fallthru
          _
        %v658 = vld [vmem:[%s8] sm:$0x7]
        %v659 = vld [vmem:[%s8 + $0x3] sm:$0x7]
        %v660 = vld [vmem:[%s8 + $0x6] sm:$0x1]
        %v661 = vld [vmem:[%s8 + $0x7] sm:$0x1]
        %v662 = vld [vmem:[#allocation3] sm:$0xff]
        %v663 = vpack.c.bf16 %v662, %v662
        %v664 = vld [vmem:[#allocation13] sm:$0xff]
        %v665 = vld [vmem:[#allocation13 + $0x8] sm:$0xf]
        %v666 = vld [vmem:[#allocation13 + $0xc] sm:$0xff]
        %v667 = vld [vmem:[#allocation13 + $0x14] sm:$0xf]
        %v668 = vld [vmem:[#allocation13 + $0x18] sm:$0xff]
        %v669 = vld [vmem:[#allocation13 + $0x20] sm:$0xf]
        %v670 = vld [vmem:[#allocation13 + $0x24] sm:$0xff]
        %v671 = vld [vmem:[#allocation13 + $0x2c] sm:$0xf]
        %v672 = vld [vmem:[#allocation13 + $0x30] sm:$0xff]
        %v673 = vld [vmem:[#allocation13 + $0x38] sm:$0xf]
        %v674 = vld [vmem:[#allocation13 + $0x3c] sm:$0xff]
        %v675 = vld [vmem:[#allocation13 + $0x44] sm:$0xf]
        %v676 = vld [vmem:[#allocation13 + $0x48] sm:$0xff]
        %v677 = vld [vmem:[#allocation13 + $0x50] sm:$0xf]
        %v678 = vld [vmem:[#allocation13 + $0x54] sm:$0xff]
        %v679 = vld [vmem:[#allocation13 + $0x5c] sm:$0xf]
        %v680 = vld [vmem:[#allocation13 + $0x60] sm:$0xff]
        %v681 = vld [vmem:[#allocation13 + $0x68] sm:$0xf]
        %v682 = vld [vmem:[#allocation13 + $0x6c] sm:$0xff]
        %v683 = vld [vmem:[#allocation13 + $0x74] sm:$0xf]
        %v684 = vld [vmem:[#allocation13 + $0x78] sm:$0xff]
        %v685 = vld [vmem:[#allocation13 + $0x80] sm:$0xf]
        %v686 = vld [vmem:[#allocation13 + $0x84] sm:$0xff]
        %v687 = vld [vmem:[#allocation13 + $0x8c] sm:$0xf]
        %v688 = vld [vmem:[#allocation13 + $0x90] sm:$0xff]
        %v689 = vld [vmem:[#allocation13 + $0x98] sm:$0xf]
        %v690 = vld [vmem:[#allocation13 + $0x9c] sm:$0xff]
        %v691 = vld [vmem:[#allocation13 + $0xa4] sm:$0xf]
        %v692 = vld [vmem:[#allocation13 + $0xa8] sm:$0xff]
        %v693 = vld [vmem:[#allocation13 + $0xb0] sm:$0xf]
        %v694 = vld [vmem:[#allocation13 + $0xb4] sm:$0xff]
        %v695 = vld [vmem:[#allocation13 + $0xbc] sm:$0xf]
        %v697 = vlaneseq
        %v698 = vshrl.u32 %v697, 7
        %v699 = vsub.s32 0, %v698
        %v700 = vrot.slane %v659, %v699
        %v701 = vlaneseq
        %v702 = vshrl.u32 %v701, 7
        %v703 = vsub.s32 1, %v702
        %v704 = vrot.slane %v659, %v703
        %v705 = vlaneseq
        %v706 = vshrl.u32 %v705, 7
        %v707 = vsub.s32 2, %v706
        %v708 = vrot.slane %v659, %v707
        %v744 = vunpack.c.l.b16 %v664
        %v745 = vunpack.c.h.b16 %v664
        %v746 = vunpack.c.l.b16 %v665
        %v747 = vunpack.c.l.b16 %v666
        %v748 = vunpack.c.h.b16 %v666
        %v749 = vunpack.c.l.b16 %v667
        %v750 = vunpack.c.l.b16 %v668
        %v751 = vunpack.c.h.b16 %v668
        %v752 = vunpack.c.l.b16 %v669
        %v753 = vunpack.c.l.b16 %v670
        %v754 = vunpack.c.h.b16 %v670
        %v755 = vunpack.c.l.b16 %v671
        %v756 = vunpack.c.l.b16 %v672
        %v757 = vunpack.c.h.b16 %v672
        %v758 = vunpack.c.l.b16 %v673
        %v759 = vunpack.c.l.b16 %v674
        %v760 = vunpack.c.h.b16 %v674
        %v761 = vunpack.c.l.b16 %v675
        %v762 = vunpack.c.l.b16 %v676
        %v763 = vunpack.c.h.b16 %v676
        %v764 = vunpack.c.l.b16 %v677
        %v765 = vunpack.c.l.b16 %v678
        %v766 = vunpack.c.h.b16 %v678
        %v767 = vunpack.c.l.b16 %v679
        %v768 = vunpack.c.l.b16 %v680
        %v769 = vunpack.c.h.b16 %v680
        %v770 = vunpack.c.l.b16 %v681
        %v771 = vunpack.c.l.b16 %v682
        %v772 = vunpack.c.h.b16 %v682
        %v773 = vunpack.c.l.b16 %v683
        %v774 = vunpack.c.l.b16 %v684
        %v775 = vunpack.c.h.b16 %v684
        %v776 = vunpack.c.l.b16 %v685
        %v777 = vunpack.c.l.b16 %v686
        %v778 = vunpack.c.h.b16 %v686
        %v779 = vunpack.c.l.b16 %v687
        %v780 = vunpack.c.l.b16 %v688
        %v781 = vunpack.c.h.b16 %v688
        %v782 = vunpack.c.l.b16 %v689
        %v783 = vunpack.c.l.b16 %v690
        %v784 = vunpack.c.h.b16 %v690
        %v785 = vunpack.c.l.b16 %v691
        %v786 = vunpack.c.l.b16 %v692
        %v787 = vunpack.c.h.b16 %v692
        %v788 = vunpack.c.l.b16 %v693
        %v789 = vunpack.c.l.b16 %v694
        %v790 = vunpack.c.h.b16 %v694
        %v791 = vunpack.c.l.b16 %v695
        %v792 = vpack.c.b16 %v747, %v744
        %v793 = vpack.c.b16 %v748, %v745
        %v794 = vpack.c.b16 %v749, %v746
        %v795 = vpack.c.b16 %v753, %v750
        %v796 = vpack.c.b16 %v754, %v751
        %v797 = vpack.c.b16 %v755, %v752
        %v798 = vpack.c.b16 %v759, %v756
        %v799 = vpack.c.b16 %v760, %v757
        %v800 = vpack.c.b16 %v761, %v758
        %v801 = vpack.c.b16 %v765, %v762
        %v802 = vpack.c.b16 %v766, %v763
        %v803 = vpack.c.b16 %v767, %v764
        %v804 = vpack.c.b16 %v771, %v768
        %v805 = vpack.c.b16 %v772, %v769
        %v806 = vpack.c.b16 %v773, %v770
        %v807 = vpack.c.b16 %v777, %v774
        %v808 = vpack.c.b16 %v778, %v775
        %v809 = vpack.c.b16 %v779, %v776
        %v810 = vpack.c.b16 %v783, %v780
        %v811 = vpack.c.b16 %v784, %v781
        %v812 = vpack.c.b16 %v785, %v782
        %v813 = vpack.c.b16 %v789, %v786
        %v814 = vpack.c.b16 %v790, %v787
        %v815 = vpack.c.b16 %v791, %v788
        %840 = vmatprep.subr.bf16.mxu0 %v814
        %841 = vmatpush1.bf16.msra.mxu0 %v813
        %842 = vmatprep.subr.bf16.mxu0 %v811
        %843 = vmatpush1.bf16.msra.mxu0 %v810
        %844 = vmatprep.subr.bf16.mxu0 %v808
        %845 = vmatpush1.bf16.msra.mxu0 %v807
        %846 = vmatprep.subr.bf16.mxu0 %v805
        %847 = vmatpush1.bf16.msra.mxu0 %v804
        %848 = vmatprep.subr.bf16.mxu0 %v802
        %849 = vmatpush1.bf16.msra.mxu0 %v801
        %850 = vmatprep.subr.bf16.mxu0 %v799
        %851 = vmatpush1.bf16.msra.mxu0 %v798
        %852 = vmatprep.subr.bf16.mxu0 %v796
        %853 = vmatpush1.bf16.msra.mxu0 %v795
        %854 = vmatprep.subr.bf16.mxu0 %v793
        %855 = vmatpush1.bf16.msra.mxu0 %v792
        %856 = vmatprep.subr.bf16.mxu0 0
        %857 = vmatpush2.bf16.msra.mxu0 0
        %858 = vmatprep.subr.bf16.mxu0 0
        %859 = vmatpush2.bf16.msra.mxu0 0
        %860 = vmatprep.subr.bf16.mxu0 0
        %861 = vmatpush2.bf16.msra.mxu0 0
        %862 = vmatprep.subr.bf16.mxu0 0
        %863 = vmatpush2.bf16.msra.mxu0 0
        %864 = vmatprep.subr.bf16.mxu0 0
        %865 = vmatpush2.bf16.msra.mxu0 0
        %866 = vmatprep.subr.bf16.mxu0 0
        %867 = vmatpush2.bf16.msra.mxu0 0
        %868 = vmatprep.subr.bf16.mxu0 0
        %869 = vmatpush2.bf16.msra.mxu0 0
        %870 = vmatprep.subr.bf16.mxu0 0
        %871 = vmatpush2.bf16.msra.mxu0 0
        %872 = vmatprep.mubr.bf16.mxu0 0
        %873 = vmatmul.mubr.bf16.gmra.mxu0 %v663
        %v874 = vpop.f32.mrf.mxu0
        %v875 = vadd.f32 %v700, %v874
        %v876 = vpop.f32.mrf.mxu0
        %v877 = vadd.f32 %v704, %v876
        %v878 = vpop.f32.mrf.mxu0
        %v879 = vpop.f32.mrf.mxu0
        %880 = vdwg.mxu0
        %881 = vmatprep.subr.bf16.mxu0 0
        %882 = vmatpush1.bf16.msra.mxu0 %v815
        %883 = vmatprep.subr.bf16.mxu0 0
        %884 = vmatpush1.bf16.msra.mxu0 %v812
        %885 = vmatprep.subr.bf16.mxu0 0
        %886 = vmatpush1.bf16.msra.mxu0 %v809
        %887 = vmatprep.subr.bf16.mxu0 0
        %888 = vmatpush1.bf16.msra.mxu0 %v806
        %889 = vmatprep.subr.bf16.mxu0 0
        %890 = vmatpush1.bf16.msra.mxu0 %v803
        %891 = vmatprep.subr.bf16.mxu0 0
        %892 = vmatpush1.bf16.msra.mxu0 %v800
        %893 = vmatprep.subr.bf16.mxu0 0
        %894 = vmatpush1.bf16.msra.mxu0 %v797
        %895 = vmatprep.subr.bf16.mxu0 0
        %896 = vmatpush1.bf16.msra.mxu0 %v794
        %897 = vmatprep.subr.bf16.mxu0 0
        %898 = vmatpush2.bf16.msra.mxu0 0
        %899 = vmatprep.subr.bf16.mxu0 0
        %900 = vmatpush2.bf16.msra.mxu0 0
        %901 = vmatprep.subr.bf16.mxu0 0
        %902 = vmatpush2.bf16.msra.mxu0 0
        %903 = vmatprep.subr.bf16.mxu0 0
        %904 = vmatpush2.bf16.msra.mxu0 0
        %905 = vmatprep.subr.bf16.mxu0 0
        %906 = vmatpush2.bf16.msra.mxu0 0
        %907 = vmatprep.subr.bf16.mxu0 0
        %908 = vmatpush2.bf16.msra.mxu0 0
        %909 = vmatprep.subr.bf16.mxu0 0
        %910 = vmatpush2.bf16.msra.mxu0 0
        %911 = vmatprep.subr.bf16.mxu0 0
        %912 = vmatpush2.bf16.msra.mxu0 0
        %913 = vmatprep.mubr.bf16.mxu0 0
        %914 = vmatmul.mubr.bf16.gmra.mxu0 %v663
        %v915 = vpop.f32.mrf.mxu0
        %v916 = vadd.f32 %v708, %v915
        %v917 = vpop.f32.mrf.mxu0
        %v918 = vpop.f32.mrf.mxu0
        %v919 = vpop.f32.mrf.mxu0
        %920 = vdwg.mxu0
        %s921 = sand.u32 %s34, 1
        %s922 = smul.u32 %s921, 8
        %s923 = scalar_lea.sflag [#allocation4], %s922
        %925 = dma.done %s923, 16
        %s926 = sadd.s32 1, %s922
        %s927 = scalar_lea.sflag [#allocation4], %s926
        %929 = dma.done %s927, 16
        %s930 = sadd.s32 2, %s922
        %s931 = scalar_lea.sflag [#allocation4], %s930
        %933 = dma.done %s931, 16
        %s934 = sadd.s32 3, %s922
        %s935 = scalar_lea.sflag [#allocation4], %s934
        %937 = dma.done %s935, 16
        %s938 = sadd.s32 4, %s922
        %s939 = scalar_lea.sflag [#allocation4], %s938
        %941 = dma.done %s939, 16
        %s942 = sadd.s32 5, %s922
        %s943 = scalar_lea.sflag [#allocation4], %s942
        %945 = dma.done %s943, 16
        %s946 = sadd.s32 6, %s922
        %s947 = scalar_lea.sflag [#allocation4], %s946
        %949 = dma.done %s947, 16
        %s950 = sadd.s32 7, %s922
        %s951 = scalar_lea.sflag [#allocation4], %s950
        %953 = dma.done %s951, 16
        %s954 = scalar_lea.vmem [#allocation2], %s922
        %v955 = vld [vmem:[%s954] sm:$0xff]
        %v956 = vpack.c.bf16 %v955, %v955
        %v957 = vld [vmem:[#allocation12] sm:$0xff]
        %v958 = vld [vmem:[#allocation12 + $0x8] sm:$0xf]
        %v959 = vld [vmem:[#allocation12 + $0xc] sm:$0xff]
        %v960 = vld [vmem:[#allocation12 + $0x14] sm:$0xf]
        %v961 = vld [vmem:[#allocation12 + $0x18] sm:$0xff]
        %v962 = vld [vmem:[#allocation12 + $0x20] sm:$0xf]
        %v963 = vld [vmem:[#allocation12 + $0x24] sm:$0xff]
        %v964 = vld [vmem:[#allocation12 + $0x2c] sm:$0xf]
        %v965 = vld [vmem:[#allocation12 + $0x30] sm:$0xff]
        %v966 = vld [vmem:[#allocation12 + $0x38] sm:$0xf]
        %v967 = vld [vmem:[#allocation12 + $0x3c] sm:$0xff]
        %v968 = vld [vmem:[#allocation12 + $0x44] sm:$0xf]
        %v969 = vld [vmem:[#allocation12 + $0x48] sm:$0xff]
        %v970 = vld [vmem:[#allocation12 + $0x50] sm:$0xf]
        %v971 = vld [vmem:[#allocation12 + $0x54] sm:$0xff]
        %v972 = vld [vmem:[#allocation12 + $0x5c] sm:$0xf]
        %v973 = vld [vmem:[#allocation12 + $0x60] sm:$0xff]
        %v974 = vld [vmem:[#allocation12 + $0x68] sm:$0xf]
        %v975 = vld [vmem:[#allocation12 + $0x6c] sm:$0xff]
        %v976 = vld [vmem:[#allocation12 + $0x74] sm:$0xf]
        %v977 = vld [vmem:[#allocation12 + $0x78] sm:$0xff]
        %v978 = vld [vmem:[#allocation12 + $0x80] sm:$0xf]
        %v979 = vld [vmem:[#allocation12 + $0x84] sm:$0xff]
        %v980 = vld [vmem:[#allocation12 + $0x8c] sm:$0xf]
        %v981 = vld [vmem:[#allocation12 + $0x90] sm:$0xff]
        %v982 = vld [vmem:[#allocation12 + $0x98] sm:$0xf]
        %v983 = vld [vmem:[#allocation12 + $0x9c] sm:$0xff]
        %v984 = vld [vmem:[#allocation12 + $0xa4] sm:$0xf]
        %v985 = vld [vmem:[#allocation12 + $0xa8] sm:$0xff]
        %v986 = vld [vmem:[#allocation12 + $0xb0] sm:$0xf]
        %v987 = vld [vmem:[#allocation12 + $0xb4] sm:$0xff]
        %v988 = vld [vmem:[#allocation12 + $0xbc] sm:$0xf]
        %v990 = vlaneseq
        %v991 = vshrl.u32 %v990, 7
        %v992 = vsub.s32 0, %v991
        %v993 = vrot.slane %v658, %v992
        %v994 = vlaneseq
        %v995 = vshrl.u32 %v994, 7
        %v996 = vsub.s32 1, %v995
        %v997 = vrot.slane %v658, %v996
        %v998 = vlaneseq
        %v999 = vshrl.u32 %v998, 7
        %v1000 = vsub.s32 2, %v999
        %v1001 = vrot.slane %v658, %v1000
        %v1037 = vunpack.c.l.b16 %v957
        %v1038 = vunpack.c.h.b16 %v957
        %v1039 = vunpack.c.l.b16 %v958
        %v1040 = vunpack.c.l.b16 %v959
        %v1041 = vunpack.c.h.b16 %v959
        %v1042 = vunpack.c.l.b16 %v960
        %v1043 = vunpack.c.l.b16 %v961
        %v1044 = vunpack.c.h.b16 %v961
        %v1045 = vunpack.c.l.b16 %v962
        %v1046 = vunpack.c.l.b16 %v963
        %v1047 = vunpack.c.h.b16 %v963
        %v1048 = vunpack.c.l.b16 %v964
        %v1049 = vunpack.c.l.b16 %v965
        %v1050 = vunpack.c.h.b16 %v965
        %v1051 = vunpack.c.l.b16 %v966
        %v1052 = vunpack.c.l.b16 %v967
        %v1053 = vunpack.c.h.b16 %v967
        %v1054 = vunpack.c.l.b16 %v968
        %v1055 = vunpack.c.l.b16 %v969
        %v1056 = vunpack.c.h.b16 %v969
        %v1057 = vunpack.c.l.b16 %v970
        %v1058 = vunpack.c.l.b16 %v971
        %v1059 = vunpack.c.h.b16 %v971
        %v1060 = vunpack.c.l.b16 %v972
        %v1061 = vunpack.c.l.b16 %v973
        %v1062 = vunpack.c.h.b16 %v973
        %v1063 = vunpack.c.l.b16 %v974
        %v1064 = vunpack.c.l.b16 %v975
        %v1065 = vunpack.c.h.b16 %v975
        %v1066 = vunpack.c.l.b16 %v976
        %v1067 = vunpack.c.l.b16 %v977
        %v1068 = vunpack.c.h.b16 %v977
        %v1069 = vunpack.c.l.b16 %v978
        %v1070 = vunpack.c.l.b16 %v979
        %v1071 = vunpack.c.h.b16 %v979
        %v1072 = vunpack.c.l.b16 %v980
        %v1073 = vunpack.c.l.b16 %v981
        %v1074 = vunpack.c.h.b16 %v981
        %v1075 = vunpack.c.l.b16 %v982
        %v1076 = vunpack.c.l.b16 %v983
        %v1077 = vunpack.c.h.b16 %v983
        %v1078 = vunpack.c.l.b16 %v984
        %v1079 = vunpack.c.l.b16 %v985
        %v1080 = vunpack.c.h.b16 %v985
        %v1081 = vunpack.c.l.b16 %v986
        %v1082 = vunpack.c.l.b16 %v987
        %v1083 = vunpack.c.h.b16 %v987
        %v1084 = vunpack.c.l.b16 %v988
        %v1085 = vpack.c.b16 %v1040, %v1037
        %v1086 = vpack.c.b16 %v1041, %v1038
        %v1087 = vpack.c.b16 %v1042, %v1039
        %v1088 = vpack.c.b16 %v1046, %v1043
        %v1089 = vpack.c.b16 %v1047, %v1044
        %v1090 = vpack.c.b16 %v1048, %v1045
        %v1091 = vpack.c.b16 %v1052, %v1049
        %v1092 = vpack.c.b16 %v1053, %v1050
        %v1093 = vpack.c.b16 %v1054, %v1051
        %v1094 = vpack.c.b16 %v1058, %v1055
        %v1095 = vpack.c.b16 %v1059, %v1056
        %v1096 = vpack.c.b16 %v1060, %v1057
        %v1097 = vpack.c.b16 %v1064, %v1061
        %v1098 = vpack.c.b16 %v1065, %v1062
        %v1099 = vpack.c.b16 %v1066, %v1063
        %v1100 = vpack.c.b16 %v1070, %v1067
        %v1101 = vpack.c.b16 %v1071, %v1068
        %v1102 = vpack.c.b16 %v1072, %v1069
        %v1103 = vpack.c.b16 %v1076, %v1073
        %v1104 = vpack.c.b16 %v1077, %v1074
        %v1105 = vpack.c.b16 %v1078, %v1075
        %v1106 = vpack.c.b16 %v1082, %v1079
        %v1107 = vpack.c.b16 %v1083, %v1080
        %v1108 = vpack.c.b16 %v1084, %v1081
        %1133 = vmatprep.subr.bf16.mxu0 %v1107
        %1134 = vmatpush1.bf16.msra.mxu0 %v1106
        %1135 = vmatprep.subr.bf16.mxu0 %v1104
        %1136 = vmatpush1.bf16.msra.mxu0 %v1103
        %1137 = vmatprep.subr.bf16.mxu0 %v1101
        %1138 = vmatpush1.bf16.msra.mxu0 %v1100
        %1139 = vmatprep.subr.bf16.mxu0 %v1098
        %1140 = vmatpush1.bf16.msra.mxu0 %v1097
        %1141 = vmatprep.subr.bf16.mxu0 %v1095
        %1142 = vmatpush1.bf16.msra.mxu0 %v1094
        %1143 = vmatprep.subr.bf16.mxu0 %v1092
        %1144 = vmatpush1.bf16.msra.mxu0 %v1091
        %1145 = vmatprep.subr.bf16.mxu0 %v1089
        %1146 = vmatpush1.bf16.msra.mxu0 %v1088
        %1147 = vmatprep.subr.bf16.mxu0 %v1086
        %1148 = vmatpush1.bf16.msra.mxu0 %v1085
        %1149 = vmatprep.subr.bf16.mxu0 0
        %1150 = vmatpush2.bf16.msra.mxu0 0
        %1151 = vmatprep.subr.bf16.mxu0 0
        %1152 = vmatpush2.bf16.msra.mxu0 0
        %1153 = vmatprep.subr.bf16.mxu0 0
        %1154 = vmatpush2.bf16.msra.mxu0 0
        %1155 = vmatprep.subr.bf16.mxu0 0
        %1156 = vmatpush2.bf16.msra.mxu0 0
        %1157 = vmatprep.subr.bf16.mxu0 0
        %1158 = vmatpush2.bf16.msra.mxu0 0
        %1159 = vmatprep.subr.bf16.mxu0 0
        %1160 = vmatpush2.bf16.msra.mxu0 0
        %1161 = vmatprep.subr.bf16.mxu0 0
        %1162 = vmatpush2.bf16.msra.mxu0 0
        %1163 = vmatprep.subr.bf16.mxu0 0
        %1164 = vmatpush2.bf16.msra.mxu0 0
        %1165 = vmatprep.mubr.bf16.mxu0 0
        %1166 = vmatmul.mubr.bf16.gmra.mxu0 %v956
        %v1167 = vpop.f32.mrf.mxu0
        %v1168 = vadd.f32 %v993, %v1167
        %v1169 = vpop.f32.mrf.mxu0
        %v1170 = vadd.f32 %v997, %v1169
        %v1171 = vpop.f32.mrf.mxu0
        %v1172 = vpop.f32.mrf.mxu0
        %1173 = vdwg.mxu0
        %1174 = vmatprep.subr.bf16.mxu0 0
        %1175 = vmatpush1.bf16.msra.mxu0 %v1108
        %1176 = vmatprep.subr.bf16.mxu0 0
        %1177 = vmatpush1.bf16.msra.mxu0 %v1105
        %1178 = vmatprep.subr.bf16.mxu0 0
        %1179 = vmatpush1.bf16.msra.mxu0 %v1102
        %1180 = vmatprep.subr.bf16.mxu0 0
        %1181 = vmatpush1.bf16.msra.mxu0 %v1099
        %1182 = vmatprep.subr.bf16.mxu0 0
        %1183 = vmatpush1.bf16.msra.mxu0 %v1096
        %1184 = vmatprep.subr.bf16.mxu0 0
        %1185 = vmatpush1.bf16.msra.mxu0 %v1093
        %1186 = vmatprep.subr.bf16.mxu0 0
        %1187 = vmatpush1.bf16.msra.mxu0 %v1090
        %1188 = vmatprep.subr.bf16.mxu0 0
        %1189 = vmatpush1.bf16.msra.mxu0 %v1087
        %1190 = vmatprep.subr.bf16.mxu0 0
        %1191 = vmatpush2.bf16.msra.mxu0 0
        %1192 = vmatprep.subr.bf16.mxu0 0
        %1193 = vmatpush2.bf16.msra.mxu0 0
        %1194 = vmatprep.subr.bf16.mxu0 0
        %1195 = vmatpush2.bf16.msra.mxu0 0
        %1196 = vmatprep.subr.bf16.mxu0 0
        %1197 = vmatpush2.bf16.msra.mxu0 0
        %1198 = vmatprep.subr.bf16.mxu0 0
        %1199 = vmatpush2.bf16.msra.mxu0 0
        %1200 = vmatprep.subr.bf16.mxu0 0
        %1201 = vmatpush2.bf16.msra.mxu0 0
        %1202 = vmatprep.subr.bf16.mxu0 0
        %1203 = vmatpush2.bf16.msra.mxu0 0
        %1204 = vmatprep.subr.bf16.mxu0 0
        %1205 = vmatpush2.bf16.msra.mxu0 0
        %1206 = vmatprep.mubr.bf16.mxu0 0
        %1207 = vmatmul.mubr.bf16.gmra.mxu0 %v956
        %v1208 = vpop.f32.mrf.mxu0
        %v1209 = vadd.f32 %v1001, %v1208
        %v1210 = vpop.f32.mrf.mxu0
        %v1211 = vpop.f32.mrf.mxu0
        %v1212 = vpop.f32.mrf.mxu0
        %1213 = vdwg.mxu0
        %v1214 = vadd.f32 %v1168, %v875
        %v1215 = vxor.u32 %v1214, 2147483648
        %v1216 = vmul.f32 %v1215, 1.442695
        %v1217 = vpow.pop %v1216
        %v1218 = vadd.f32 %v1217, 1.0
        %v1219 = vrcp.pop %v1218
        %v1220 = vmul.f32 1.0, %v1219
        %v1221 = vadd.f32 %v1170, %v877
        %v1222 = vxor.u32 %v1221, 2147483648
        %v1223 = vmul.f32 %v1222, 1.442695
        %v1224 = vpow.pop %v1223
        %v1225 = vadd.f32 %v1224, 1.0
        %v1226 = vrcp.pop %v1225
        %v1227 = vmul.f32 1.0, %v1226
        %v1228 = vmul.f32 %v1220, %v916
        %v1229 = vadd.f32 %v1209, %v1228
        %v1230 = vtanh.pop %v1229
        %v1231 = vsub.f32 1.0, %v1227
        %v1232 = vmul.f32 %v1231, %v1230
        %v1233 = vmul.f32 %v1227, %v662
        %v1234 = vadd.f32 %v1232, %v1233
        %v1235 = vld [vmem:[#allocation10] sm:$0xff]
        %v1236 = vld [vmem:[#allocation10 + $0x8] sm:$0xff]
        %v1237 = vld [vmem:[#allocation10 + $0x10] sm:$0xff]
        %v1238 = vld [vmem:[#allocation10 + $0x18] sm:$0xff]
        %v1239 = vld [vmem:[#allocation10 + $0x20] sm:$0xff]
        %v1240 = vld [vmem:[#allocation10 + $0x28] sm:$0xff]
        %v1241 = vld [vmem:[#allocation10 + $0x30] sm:$0xff]
        %v1242 = vld [vmem:[#allocation10 + $0x38] sm:$0xff]
        %v1244 = vcombine.high %v1234, %v1234
        %v1246 = vunpack.c.l.s4 1966171168
        %v1247 = vunpack.c.0.s8 %v1246
        %v1248 = vlaneseq
        %v1249 = vshrl.u32 %v1248, 7
        %v1250 = vsub.s32 %v1247, %v1249
        %v1251 = vrot.slane %v1234, %v1250
        %v1253 = vunpack.c.l.s4 1966171168
        %v1254 = vunpack.c.0.s8 %v1253
        %v1255 = vlaneseq
        %v1256 = vshrl.u32 %v1255, 7
        %v1257 = vsub.s32 %v1254, %v1256
        %v1258 = vrot.slane %v1244, %v1257
        %v1259 = vcombine.high %v1251, %v1251
        %v1260 = vcombine.high %v1258, %v1258
        %v1262 = vunpack.c.l.s4 1966171168
        %v1263 = vunpack.c.0.s8 %v1262
        %v1264 = vlaneseq
        %v1265 = vshrl.u32 %v1264, 7
        %v1266 = vsub.s32 %v1263, %v1265
        %v1267 = vrot.slane %v1251, %v1266
        %v1269 = vunpack.c.l.s4 1966171168
        %v1270 = vunpack.c.0.s8 %v1269
        %v1271 = vlaneseq
        %v1272 = vshrl.u32 %v1271, 7
        %v1273 = vsub.s32 %v1270, %v1272
        %v1274 = vrot.slane %v1258, %v1273
        %v1276 = vunpack.c.l.s4 1966171168
        %v1277 = vunpack.c.0.s8 %v1276
        %v1278 = vlaneseq
        %v1279 = vshrl.u32 %v1278, 7
        %v1280 = vsub.s32 %v1277, %v1279
        %v1281 = vrot.slane %v1259, %v1280
        %v1283 = vunpack.c.l.s4 1966171168
        %v1284 = vunpack.c.0.s8 %v1283
        %v1285 = vlaneseq
        %v1286 = vshrl.u32 %v1285, 7
        %v1287 = vsub.s32 %v1284, %v1286
        %v1288 = vrot.slane %v1260, %v1287
        %v1289 = vcombine.high %v1267, %v1267
        %v1290 = vcombine.high %v1274, %v1274
        %v1291 = vcombine.high %v1281, %v1281
        %v1292 = vcombine.high %v1288, %v1288
        %v1293 = vlaneseq
        %v1294 = vshrl.u32 %v1293, 7
        %v1295 = vsub.s32 0, %v1294
        %v1296 = vrot.slane %v1267, %v1295
        %v1297 = vlaneseq
        %v1298 = vshrl.u32 %v1297, 7
        %v1299 = vsub.s32 0, %v1298
        %v1300 = vrot.slane %v1281, %v1299
        %v1301 = vlaneseq
        %v1302 = vshrl.u32 %v1301, 7
        %v1303 = vsub.s32 0, %v1302
        %v1304 = vrot.slane %v1289, %v1303
        %v1305 = vlaneseq
        %v1306 = vshrl.u32 %v1305, 7
        %v1307 = vsub.s32 0, %v1306
        %v1308 = vrot.slane %v1291, %v1307
        %v1309 = vlaneseq
        %v1310 = vshrl.u32 %v1309, 7
        %v1311 = vsub.s32 0, %v1310
        %v1312 = vrot.slane %v1274, %v1311
        %v1313 = vlaneseq
        %v1314 = vshrl.u32 %v1313, 7
        %v1315 = vsub.s32 0, %v1314
        %v1316 = vrot.slane %v1288, %v1315
        %v1317 = vlaneseq
        %v1318 = vshrl.u32 %v1317, 7
        %v1319 = vsub.s32 0, %v1318
        %v1320 = vrot.slane %v1290, %v1319
        %v1321 = vlaneseq
        %v1322 = vshrl.u32 %v1321, 7
        %v1323 = vsub.s32 0, %v1322
        %v1324 = vrot.slane %v1292, %v1323
        %v1333 = vmul.f32 %v1235, %v1296
        %v1334 = vmul.f32 %v1236, %v1300
        %v1335 = vmul.f32 %v1237, %v1304
        %v1336 = vmul.f32 %v1238, %v1308
        %v1337 = vmul.f32 %v1239, %v1312
        %v1338 = vmul.f32 %v1240, %v1316
        %v1339 = vmul.f32 %v1241, %v1320
        %v1340 = vmul.f32 %v1242, %v1324
        %1341 = vadd.xlane.f32.xlu0 %v1333
        %v1342 = vpop.xlane.xlu0 %1341
        %1343 = vadd.xlane.f32.xlu0 %v1334
        %v1344 = vpop.xlane.xlu0 %1343
        %1345 = vadd.xlane.f32.xlu0 %v1335
        %v1346 = vpop.xlane.xlu0 %1345
        %1347 = vadd.xlane.f32.xlu0 %v1336
        %v1348 = vpop.xlane.xlu0 %1347
        %1349 = vadd.xlane.f32.xlu0 %v1337
        %v1350 = vpop.xlane.xlu0 %1349
        %1351 = vadd.xlane.f32.xlu0 %v1338
        %v1352 = vpop.xlane.xlu0 %1351
        %1353 = vadd.xlane.f32.xlu0 %v1339
        %v1354 = vpop.xlane.xlu0 %1353
        %1355 = vadd.xlane.f32.xlu0 %v1340
        %v1356 = vpop.xlane.xlu0 %1355
        %v1365 = vlaneseq
        %v1366 = vand.u32 %v1365, 127
        %v1367 = vlaneseq
        %v1368 = vshrl.u32 %v1367, 7
        %v1369 = vsub.s32 %v1366, %v1368
        %v1370 = vrot.slane %v1342, %v1369
        %v1371 = vlaneseq
        %v1372 = vshrl.u32 %v1371, 7
        %v1373 = vsub.s32 %v1366, %v1372
        %v1374 = vrot.slane %v1344, %v1373
        %v1375 = vlaneseq
        %v1376 = vshrl.u32 %v1375, 7
        %v1377 = vsub.s32 %v1366, %v1376
        %v1378 = vrot.slane %v1346, %v1377
        %v1379 = vlaneseq
        %v1380 = vshrl.u32 %v1379, 7
        %v1381 = vsub.s32 %v1366, %v1380
        %v1382 = vrot.slane %v1348, %v1381
        %v1383 = vlaneseq
        %v1384 = vshrl.u32 %v1383, 7
        %v1385 = vsub.s32 %v1366, %v1384
        %v1386 = vrot.slane %v1350, %v1385
        %v1387 = vlaneseq
        %v1388 = vshrl.u32 %v1387, 7
        %v1389 = vsub.s32 %v1366, %v1388
        %v1390 = vrot.slane %v1352, %v1389
        %v1391 = vlaneseq
        %v1392 = vshrl.u32 %v1391, 7
        %v1393 = vsub.s32 %v1366, %v1392
        %v1394 = vrot.slane %v1354, %v1393
        %v1395 = vlaneseq
        %v1396 = vshrl.u32 %v1395, 7
        %v1397 = vsub.s32 %v1366, %v1396
        %v1398 = vrot.slane %v1356, %v1397
        %vm1399 = vcmask 1041409
        %v1400 = vsel %vm1399, %v1374, %v1370
        %vm1401 = vcmask 1042434
        %v1402 = vsel %vm1401, %v1378, %v1400
        %vm1403 = vcmask 1043459
        %v1404 = vsel %vm1403, %v1382, %v1402
        %vm1405 = vcmask 1044484
        %v1406 = vsel %vm1405, %v1386, %v1404
        %vm1407 = vcmask 1045509
        %v1408 = vsel %vm1407, %v1390, %v1406
        %vm1409 = vcmask 1046534
        %v1410 = vsel %vm1409, %v1394, %v1408
        %vm1411 = vcmask 1047559
        %v1412 = vsel %vm1411, %v1398, %v1410
        %vm1414 = vcmask 64512
        %v1415 = vsel %vm1414, %v1412, -inf
        %1416 = vmax.xlane.f32.xlu0 %v1415
        %v1417 = vpop.xlane.xlu0 %1416
        %v1419 = vlaneseq
        %v1420 = vshrl.u32 %v1419, 7
        %v1421 = vsub.s32 0, %v1420
        %v1422 = vrot.slane %v1417, %v1421
        %v1423 = vlaneseq
        %v1424 = vshrl.u32 %v1423, 7
        %v1425 = vsub.s32 1, %v1424
        %v1426 = vrot.slane %v1417, %v1425
        %v1427 = vlaneseq
        %v1428 = vshrl.u32 %v1427, 7
        %v1429 = vsub.s32 2, %v1428
        %v1430 = vrot.slane %v1417, %v1429
        %v1431 = vlaneseq
        %v1432 = vshrl.u32 %v1431, 7
        %v1433 = vsub.s32 3, %v1432
        %v1434 = vrot.slane %v1417, %v1433
        %v1435 = vlaneseq
        %v1436 = vshrl.u32 %v1435, 7
        %v1437 = vsub.s32 4, %v1436
        %v1438 = vrot.slane %v1417, %v1437
        %v1439 = vlaneseq
        %v1440 = vshrl.u32 %v1439, 7
        %v1441 = vsub.s32 5, %v1440
        %v1442 = vrot.slane %v1417, %v1441
        %v1443 = vlaneseq
        %v1444 = vshrl.u32 %v1443, 7
        %v1445 = vsub.s32 6, %v1444
        %v1446 = vrot.slane %v1417, %v1445
        %v1447 = vlaneseq
        %v1448 = vshrl.u32 %v1447, 7
        %v1449 = vsub.s32 7, %v1448
        %v1450 = vrot.slane %v1417, %v1449
        %v1459 = vsub.f32 %v1342, %v1422
        %v1460 = vsub.f32 %v1344, %v1426
        %v1461 = vsub.f32 %v1346, %v1430
        %v1462 = vsub.f32 %v1348, %v1434
        %v1463 = vsub.f32 %v1350, %v1438
        %v1464 = vsub.f32 %v1352, %v1442
        %v1465 = vsub.f32 %v1354, %v1446
        %v1466 = vsub.f32 %v1356, %v1450
        %v1467 = vmul.f32 %v1459, 1.442695
        %v1468 = vpow.pop %v1467
        %v1469 = vmul.f32 %v1460, 1.442695
        %v1470 = vpow.pop %v1469
        %v1471 = vmul.f32 %v1461, 1.442695
        %v1472 = vpow.pop %v1471
        %v1473 = vmul.f32 %v1462, 1.442695
        %v1474 = vpow.pop %v1473
        %v1475 = vmul.f32 %v1463, 1.442695
        %v1476 = vpow.pop %v1475
        %v1477 = vmul.f32 %v1464, 1.442695
        %v1478 = vpow.pop %v1477
        %v1479 = vmul.f32 %v1465, 1.442695
        %v1480 = vpow.pop %v1479
        %v1481 = vmul.f32 %v1466, 1.442695
        %v1482 = vpow.pop %v1481
        %1491 = vset.pattern.permute.xlu0 0
        %1492 = vperm.xlu0 %1491, %v1468
        %v1493 = vpop.permute.xlu0 %1492
        %1494 = vset.pattern.permute.xlu0 0
        %1495 = vperm.xlu0 %1494, %v1470
        %v1496 = vpop.permute.xlu0 %1495
        %1497 = vset.pattern.permute.xlu0 0
        %1498 = vperm.xlu0 %1497, %v1472
        %v1499 = vpop.permute.xlu0 %1498
        %1500 = vset.pattern.permute.xlu0 0
        %1501 = vperm.xlu0 %1500, %v1474
        %v1502 = vpop.permute.xlu0 %1501
        %1503 = vset.pattern.permute.xlu0 0
        %1504 = vperm.xlu0 %1503, %v1476
        %v1505 = vpop.permute.xlu0 %1504
        %1506 = vset.pattern.permute.xlu0 0
        %1507 = vperm.xlu0 %1506, %v1478
        %v1508 = vpop.permute.xlu0 %1507
        %1509 = vset.pattern.permute.xlu0 0
        %1510 = vperm.xlu0 %1509, %v1480
        %v1511 = vpop.permute.xlu0 %1510
        %1512 = vset.pattern.permute.xlu0 0
        %1513 = vperm.xlu0 %1512, %v1482
        %v1514 = vpop.permute.xlu0 %1513
        %v1515 = vlaneseq
        %v1516 = vshrl.u32 %v1515, 7
        %v1517 = vsub.s32 %v1366, %v1516
        %v1518 = vrot.slane %v1493, %v1517
        %v1519 = vlaneseq
        %v1520 = vshrl.u32 %v1519, 7
        %v1521 = vsub.s32 %v1366, %v1520
        %v1522 = vrot.slane %v1496, %v1521
        %v1523 = vlaneseq
        %v1524 = vshrl.u32 %v1523, 7
        %v1525 = vsub.s32 %v1366, %v1524
        %v1526 = vrot.slane %v1499, %v1525
        %v1527 = vlaneseq
        %v1528 = vshrl.u32 %v1527, 7
        %v1529 = vsub.s32 %v1366, %v1528
        %v1530 = vrot.slane %v1502, %v1529
        %v1531 = vlaneseq
        %v1532 = vshrl.u32 %v1531, 7
        %v1533 = vsub.s32 %v1366, %v1532
        %v1534 = vrot.slane %v1505, %v1533
        %v1535 = vlaneseq
        %v1536 = vshrl.u32 %v1535, 7
        %v1537 = vsub.s32 %v1366, %v1536
        %v1538 = vrot.slane %v1508, %v1537
        %v1539 = vlaneseq
        %v1540 = vshrl.u32 %v1539, 7
        %v1541 = vsub.s32 %v1366, %v1540
        %v1542 = vrot.slane %v1511, %v1541
        %v1543 = vlaneseq
        %v1544 = vshrl.u32 %v1543, 7
        %v1545 = vsub.s32 %v1366, %v1544
        %v1546 = vrot.slane %v1514, %v1545
        %v1547 = vsel %vm1399, %v1522, %v1518
        %v1548 = vsel %vm1401, %v1526, %v1547
        %v1549 = vsel %vm1403, %v1530, %v1548
        %v1550 = vsel %vm1405, %v1534, %v1549
        %v1551 = vsel %vm1407, %v1538, %v1550
        %v1552 = vsel %vm1409, %v1542, %v1551
        %v1553 = vsel %vm1411, %v1546, %v1552
        %v1555 = vsel %vm1414, %v1553, 0.0
        %1556 = vadd.xlane.f32.xlu0 %v1555
        %v1557 = vpop.xlane.xlu0 %1556
        %v1558 = vrcp.pop %v1557
        %v1560 = vlaneseq
        %v1561 = vshrl.u32 %v1560, 7
        %v1562 = vsub.s32 0, %v1561
        %v1563 = vrot.slane %v1558, %v1562
        %v1564 = vlaneseq
        %v1565 = vshrl.u32 %v1564, 7
        %v1566 = vsub.s32 1, %v1565
        %v1567 = vrot.slane %v1558, %v1566
        %v1568 = vlaneseq
        %v1569 = vshrl.u32 %v1568, 7
        %v1570 = vsub.s32 2, %v1569
        %v1571 = vrot.slane %v1558, %v1570
        %v1572 = vlaneseq
        %v1573 = vshrl.u32 %v1572, 7
        %v1574 = vsub.s32 3, %v1573
        %v1575 = vrot.slane %v1558, %v1574
        %v1576 = vlaneseq
        %v1577 = vshrl.u32 %v1576, 7
        %v1578 = vsub.s32 4, %v1577
        %v1579 = vrot.slane %v1558, %v1578
        %v1580 = vlaneseq
        %v1581 = vshrl.u32 %v1580, 7
        %v1582 = vsub.s32 5, %v1581
        %v1583 = vrot.slane %v1558, %v1582
        %v1584 = vlaneseq
        %v1585 = vshrl.u32 %v1584, 7
        %v1586 = vsub.s32 6, %v1585
        %v1587 = vrot.slane %v1558, %v1586
        %v1588 = vlaneseq
        %v1589 = vshrl.u32 %v1588, 7
        %v1590 = vsub.s32 7, %v1589
        %v1591 = vrot.slane %v1558, %v1590
        %v1600 = vmul.f32 %v1468, %v1563
        %v1601 = vmul.f32 %v1470, %v1567
        %v1602 = vmul.f32 %v1472, %v1571
        %v1603 = vmul.f32 %v1474, %v1575
        %v1604 = vmul.f32 %v1476, %v1579
        %v1605 = vmul.f32 %v1478, %v1583
        %v1606 = vmul.f32 %v1480, %v1587
        %v1607 = vmul.f32 %v1482, %v1591
        %1609 = vset.pattern.permute.xlu0 0
        %1610 = vperm.xlu0 %1609, %v1600
        %v1611 = vpop.permute.xlu0 %1610
        %1614 = vset.pattern.permute.xlu0 0
        %1615 = vperm.xlu0 %1614, %v1601
        %v1616 = vpop.permute.xlu0 %1615
        %1619 = vset.pattern.permute.xlu0 0
        %1620 = vperm.xlu0 %1619, %v1602
        %v1621 = vpop.permute.xlu0 %1620
        %1624 = vset.pattern.permute.xlu0 0
        %1625 = vperm.xlu0 %1624, %v1603
        %v1626 = vpop.permute.xlu0 %1625
        %1629 = vset.pattern.permute.xlu0 0
        %1630 = vperm.xlu0 %1629, %v1604
        %v1631 = vpop.permute.xlu0 %1630
        %1634 = vset.pattern.permute.xlu0 0
        %1635 = vperm.xlu0 %1634, %v1605
        %v1636 = vpop.permute.xlu0 %1635
        %1639 = vset.pattern.permute.xlu0 0
        %1640 = vperm.xlu0 %1639, %v1606
        %v1641 = vpop.permute.xlu0 %1640
        %1644 = vset.pattern.permute.xlu0 0
        %1645 = vperm.xlu0 %1644, %v1607
        %v1646 = vpop.permute.xlu0 %1645
        %v1648 = vmul.f32 %v1611, %v1235
        %v1649 = vmul.f32 %v1616, %v1236
        %v1650 = vmul.f32 %v1621, %v1237
        %v1651 = vmul.f32 %v1626, %v1238
        %v1652 = vmul.f32 %v1631, %v1239
        %v1653 = vmul.f32 %v1636, %v1240
        %v1654 = vmul.f32 %v1641, %v1241
        %v1655 = vmul.f32 %v1646, %v1242
        %v1656 = vrot.slane %v1648, 4
        %v1657 = vadd.f32 %v1648, %v1656
        %v1658 = vrot.slane %v1657, 2
        %v1659 = vadd.f32 %v1657, %v1658
        %v1660 = vrot.slane %v1659, 1
        %v1661 = vadd.f32 %v1659, %v1660
        %v1662 = vrot.slane %v1649, 4
        %v1663 = vadd.f32 %v1649, %v1662
        %v1664 = vrot.slane %v1663, 2
        %v1665 = vadd.f32 %v1663, %v1664
        %v1666 = vrot.slane %v1665, 1
        %v1667 = vadd.f32 %v1665, %v1666
        %v1668 = vrot.slane %v1650, 4
        %v1669 = vadd.f32 %v1650, %v1668
        %v1670 = vrot.slane %v1669, 2
        %v1671 = vadd.f32 %v1669, %v1670
        %v1672 = vrot.slane %v1671, 1
        %v1673 = vadd.f32 %v1671, %v1672
        %v1674 = vrot.slane %v1651, 4
        %v1675 = vadd.f32 %v1651, %v1674
        %v1676 = vrot.slane %v1675, 2
        %v1677 = vadd.f32 %v1675, %v1676
        %v1678 = vrot.slane %v1677, 1
        %v1679 = vadd.f32 %v1677, %v1678
        %v1680 = vrot.slane %v1652, 4
        %v1681 = vadd.f32 %v1652, %v1680
        %v1682 = vrot.slane %v1681, 2
        %v1683 = vadd.f32 %v1681, %v1682
        %v1684 = vrot.slane %v1683, 1
        %v1685 = vadd.f32 %v1683, %v1684
        %v1686 = vrot.slane %v1653, 4
        %v1687 = vadd.f32 %v1653, %v1686
        %v1688 = vrot.slane %v1687, 2
        %v1689 = vadd.f32 %v1687, %v1688
        %v1690 = vrot.slane %v1689, 1
        %v1691 = vadd.f32 %v1689, %v1690
        %v1692 = vrot.slane %v1654, 4
        %v1693 = vadd.f32 %v1654, %v1692
        %v1694 = vrot.slane %v1693, 2
        %v1695 = vadd.f32 %v1693, %v1694
        %v1696 = vrot.slane %v1695, 1
        %v1697 = vadd.f32 %v1695, %v1696
        %v1698 = vrot.slane %v1655, 4
        %v1699 = vadd.f32 %v1655, %v1698
        %v1700 = vrot.slane %v1699, 2
        %v1701 = vadd.f32 %v1699, %v1700
        %v1702 = vrot.slane %v1701, 1
        %v1703 = vadd.f32 %v1701, %v1702
        %v1704 = vpack.c.bf16 %v1234, %v1234
        %v1705 = vld [vmem:[#allocation15] sm:$0xf]
        %v1706 = vld [vmem:[#allocation15 + $0x4] sm:$0xf]
        %v1707 = vld [vmem:[#allocation15 + $0x8] sm:$0xf]
        %v1708 = vld [vmem:[#allocation15 + $0xc] sm:$0xf]
        %v1709 = vld [vmem:[#allocation15 + $0x10] sm:$0xf]
        %v1710 = vld [vmem:[#allocation15 + $0x14] sm:$0xf]
        %v1711 = vld [vmem:[#allocation15 + $0x18] sm:$0xf]
        %v1712 = vld [vmem:[#allocation15 + $0x1c] sm:$0xf]
        %v1713 = vld [vmem:[#allocation15 + $0x20] sm:$0xf]
        %v1714 = vld [vmem:[#allocation15 + $0x24] sm:$0xf]
        %v1715 = vld [vmem:[#allocation15 + $0x28] sm:$0xf]
        %v1716 = vld [vmem:[#allocation15 + $0x2c] sm:$0xf]
        %v1717 = vld [vmem:[#allocation15 + $0x30] sm:$0xf]
        %v1718 = vld [vmem:[#allocation15 + $0x34] sm:$0xf]
        %v1719 = vld [vmem:[#allocation15 + $0x38] sm:$0xf]
        %v1720 = vld [vmem:[#allocation15 + $0x3c] sm:$0xf]
        %v1721 = vpack.c.bf16 %v1661, %v1661
        %v1722 = vpack.c.bf16 %v1667, %v1667
        %v1723 = vpack.c.bf16 %v1673, %v1673
        %v1724 = vpack.c.bf16 %v1679, %v1679
        %v1725 = vpack.c.bf16 %v1685, %v1685
        %v1726 = vpack.c.bf16 %v1691, %v1691
        %v1727 = vpack.c.bf16 %v1697, %v1697
        %v1728 = vpack.c.bf16 %v1703, %v1703
        %v1729 = vld [vmem:[#allocation15 + $0x40] sm:$0xf]
        %v1730 = vld [vmem:[#allocation15 + $0x44] sm:$0xf]
        %v1731 = vld [vmem:[#allocation15 + $0x48] sm:$0xf]
        %v1732 = vld [vmem:[#allocation15 + $0x4c] sm:$0xf]
        %v1733 = vld [vmem:[#allocation15 + $0x50] sm:$0xf]
        %v1734 = vld [vmem:[#allocation15 + $0x54] sm:$0xf]
        %v1735 = vld [vmem:[#allocation15 + $0x58] sm:$0xf]
        %v1736 = vld [vmem:[#allocation15 + $0x5c] sm:$0xf]
        %v1737 = vld [vmem:[#allocation15 + $0x60] sm:$0xf]
        %v1738 = vld [vmem:[#allocation15 + $0x64] sm:$0xf]
        %v1739 = vld [vmem:[#allocation15 + $0x68] sm:$0xf]
        %v1740 = vld [vmem:[#allocation15 + $0x6c] sm:$0xf]
        %v1741 = vld [vmem:[#allocation15 + $0x70] sm:$0xf]
        %v1742 = vld [vmem:[#allocation15 + $0x74] sm:$0xf]
        %v1743 = vld [vmem:[#allocation15 + $0x78] sm:$0xf]
        %v1744 = vld [vmem:[#allocation15 + $0x7c] sm:$0xf]
        %v1753 = vunpack.c.l.b16 %v1721
        %v1754 = vunpack.c.l.b16 %v1722
        %v1755 = vunpack.c.l.b16 %v1723
        %v1756 = vunpack.c.l.b16 %v1724
        %v1757 = vunpack.c.l.b16 %v1725
        %v1758 = vunpack.c.l.b16 %v1726
        %v1759 = vunpack.c.l.b16 %v1727
        %v1760 = vunpack.c.l.b16 %v1728
        %v1761 = vsel %vm1399, %v1754, %v1753
        %v1762 = vsel %vm1401, %v1755, %v1761
        %v1763 = vsel %vm1403, %v1756, %v1762
        %v1764 = vsel %vm1405, %v1757, %v1763
        %v1765 = vsel %vm1407, %v1758, %v1764
        %v1766 = vsel %vm1409, %v1759, %v1765
        %v1767 = vsel %vm1411, %v1760, %v1766
        %v1768 = vpack.c.b16 %v1767, %v1767
        %v1786 = vunpack.c.l.b16 %v1729
        %v1787 = vunpack.c.l.b16 %v1730
        %v1788 = vunpack.c.l.b16 %v1731
        %v1789 = vunpack.c.l.b16 %v1732
        %v1790 = vunpack.c.l.b16 %v1733
        %v1791 = vunpack.c.l.b16 %v1734
        %v1792 = vunpack.c.l.b16 %v1735
        %v1793 = vunpack.c.l.b16 %v1736
        %v1794 = vunpack.c.l.b16 %v1737
        %v1795 = vunpack.c.l.b16 %v1738
        %v1796 = vunpack.c.l.b16 %v1739
        %v1797 = vunpack.c.l.b16 %v1740
        %v1798 = vunpack.c.l.b16 %v1741
        %v1799 = vunpack.c.l.b16 %v1742
        %v1800 = vunpack.c.l.b16 %v1743
        %v1801 = vunpack.c.l.b16 %v1744
        %v1802 = vpack.c.b16 %v1787, %v1786
        %v1803 = vpack.c.b16 %v1789, %v1788
        %v1804 = vpack.c.b16 %v1791, %v1790
        %v1805 = vpack.c.b16 %v1793, %v1792
        %v1806 = vpack.c.b16 %v1795, %v1794
        %v1807 = vpack.c.b16 %v1797, %v1796
        %v1808 = vpack.c.b16 %v1799, %v1798
        %v1809 = vpack.c.b16 %v1801, %v1800
        %1818 = vmatprep.subr.bf16.mxu0 0
        %1819 = vmatpush1.bf16.msra.mxu0 %v1809
        %1820 = vmatprep.subr.bf16.mxu0 0
        %1821 = vmatpush1.bf16.msra.mxu0 %v1808
        %1822 = vmatprep.subr.bf16.mxu0 0
        %1823 = vmatpush1.bf16.msra.mxu0 %v1807
        %1824 = vmatprep.subr.bf16.mxu0 0
        %1825 = vmatpush1.bf16.msra.mxu0 %v1806
        %1826 = vmatprep.subr.bf16.mxu0 0
        %1827 = vmatpush1.bf16.msra.mxu0 %v1805
        %1828 = vmatprep.subr.bf16.mxu0 0
        %1829 = vmatpush1.bf16.msra.mxu0 %v1804
        %1830 = vmatprep.subr.bf16.mxu0 0
        %1831 = vmatpush1.bf16.msra.mxu0 %v1803
        %1832 = vmatprep.subr.bf16.mxu0 0
        %1833 = vmatpush1.bf16.msra.mxu0 %v1802
        %1834 = vmatprep.subr.bf16.mxu0 0
        %1835 = vmatpush2.bf16.msra.mxu0 0
        %1836 = vmatprep.subr.bf16.mxu0 0
        %1837 = vmatpush2.bf16.msra.mxu0 0
        %1838 = vmatprep.subr.bf16.mxu0 0
        %1839 = vmatpush2.bf16.msra.mxu0 0
        %1840 = vmatprep.subr.bf16.mxu0 0
        %1841 = vmatpush2.bf16.msra.mxu0 0
        %1842 = vmatprep.subr.bf16.mxu0 0
        %1843 = vmatpush2.bf16.msra.mxu0 0
        %1844 = vmatprep.subr.bf16.mxu0 0
        %1845 = vmatpush2.bf16.msra.mxu0 0
        %1846 = vmatprep.subr.bf16.mxu0 0
        %1847 = vmatpush2.bf16.msra.mxu0 0
        %1848 = vmatprep.subr.bf16.mxu0 0
        %1849 = vmatpush2.bf16.msra.mxu0 0
        %1850 = vmatprep.mubr.bf16.mxu0 0
        %1851 = vmatmul.mubr.bf16.gmra.mxu0 %v1768
        %v1852 = vpop.f32.mrf.mxu0
        %v1853 = vadd.f32 0.0, %v1852
        %v1854 = vpop.f32.mrf.mxu0
        %v1855 = vpop.f32.mrf.mxu0
        %v1856 = vpop.f32.mrf.mxu0
        %1857 = vdwg.mxu0
        %v1874 = vunpack.c.l.b16 %v1705
        %v1875 = vunpack.c.l.b16 %v1706
        %v1876 = vunpack.c.l.b16 %v1707
        %v1877 = vunpack.c.l.b16 %v1708
        %v1878 = vunpack.c.l.b16 %v1709
        %v1879 = vunpack.c.l.b16 %v1710
        %v1880 = vunpack.c.l.b16 %v1711
        %v1881 = vunpack.c.l.b16 %v1712
        %v1882 = vunpack.c.l.b16 %v1713
        %v1883 = vunpack.c.l.b16 %v1714
        %v1884 = vunpack.c.l.b16 %v1715
        %v1885 = vunpack.c.l.b16 %v1716
        %v1886 = vunpack.c.l.b16 %v1717
        %v1887 = vunpack.c.l.b16 %v1718
        %v1888 = vunpack.c.l.b16 %v1719
        %v1889 = vunpack.c.l.b16 %v1720
        %v1890 = vpack.c.b16 %v1875, %v1874
        %v1891 = vpack.c.b16 %v1877, %v1876
        %v1892 = vpack.c.b16 %v1879, %v1878
        %v1893 = vpack.c.b16 %v1881, %v1880
        %v1894 = vpack.c.b16 %v1883, %v1882
        %v1895 = vpack.c.b16 %v1885, %v1884
        %v1896 = vpack.c.b16 %v1887, %v1886
        %v1897 = vpack.c.b16 %v1889, %v1888
        %1906 = vmatprep.subr.bf16.mxu0 0
        %1907 = vmatpush1.bf16.msra.mxu0 %v1897
        %1908 = vmatprep.subr.bf16.mxu0 0
        %1909 = vmatpush1.bf16.msra.mxu0 %v1896
        %1910 = vmatprep.subr.bf16.mxu0 0
        %1911 = vmatpush1.bf16.msra.mxu0 %v1895
        %1912 = vmatprep.subr.bf16.mxu0 0
        %1913 = vmatpush1.bf16.msra.mxu0 %v1894
        %1914 = vmatprep.subr.bf16.mxu0 0
        %1915 = vmatpush1.bf16.msra.mxu0 %v1893
        %1916 = vmatprep.subr.bf16.mxu0 0
        %1917 = vmatpush1.bf16.msra.mxu0 %v1892
        %1918 = vmatprep.subr.bf16.mxu0 0
        %1919 = vmatpush1.bf16.msra.mxu0 %v1891
        %1920 = vmatprep.subr.bf16.mxu0 0
        %1921 = vmatpush1.bf16.msra.mxu0 %v1890
        %1922 = vmatprep.subr.bf16.mxu0 0
        %1923 = vmatpush2.bf16.msra.mxu0 0
        %1924 = vmatprep.subr.bf16.mxu0 0
        %1925 = vmatpush2.bf16.msra.mxu0 0
        %1926 = vmatprep.subr.bf16.mxu0 0
        %1927 = vmatpush2.bf16.msra.mxu0 0
        %1928 = vmatprep.subr.bf16.mxu0 0
        %1929 = vmatpush2.bf16.msra.mxu0 0
        %1930 = vmatprep.subr.bf16.mxu0 0
        %1931 = vmatpush2.bf16.msra.mxu0 0
        %1932 = vmatprep.subr.bf16.mxu0 0
        %1933 = vmatpush2.bf16.msra.mxu0 0
        %1934 = vmatprep.subr.bf16.mxu0 0
        %1935 = vmatpush2.bf16.msra.mxu0 0
        %1936 = vmatprep.subr.bf16.mxu0 0
        %1937 = vmatpush2.bf16.msra.mxu0 0
        %1938 = vmatprep.mubr.bf16.mxu0 0
        %1939 = vmatmul.mubr.bf16.gmra.mxu0 %v1704
        %v1940 = vpop.f32.mrf.mxu0
        %v1941 = vadd.f32 %v1853, %v1940
        %v1942 = vpop.f32.mrf.mxu0
        %v1943 = vpop.f32.mrf.mxu0
        %v1944 = vpop.f32.mrf.mxu0
        %1945 = vdwg.mxu0
        %v1947 = vlaneseq
        %v1948 = vshrl.u32 %v1947, 7
        %v1949 = vsub.s32 0, %v1948
        %v1950 = vrot.slane %v660, %v1949
        %v1952 = vadd.f32 %v1941, %v1950
        %v1953 = vtanh.pop %v1952
        %v1954 = vld [vmem:[#allocation16] sm:$0xff]
        %v1955 = vld [vmem:[#allocation16 + $0x8] sm:$0xff]
        %v1956 = vld [vmem:[#allocation16 + $0x10] sm:$0xff]
        %v1957 = vld [vmem:[#allocation16 + $0x18] sm:$0xff]
        %v1958 = vld [vmem:[#allocation16 + $0x20] sm:$0xff]
        %v1959 = vld [vmem:[#allocation16 + $0x28] sm:$0xff]
        %v1960 = vld [vmem:[#allocation16 + $0x30] sm:$0xff]
        %v1961 = vld [vmem:[#allocation16 + $0x38] sm:$0xff]
        %v1962 = vld [vmem:[#allocation16 + $0x40] sm:$0xff]
        %v1963 = vld [vmem:[#allocation16 + $0x48] sm:$0xff]
        %v1964 = vld [vmem:[#allocation16 + $0x50] sm:$0xff]
        %v1965 = vld [vmem:[#allocation16 + $0x58] sm:$0xff]
        %v1966 = vld [vmem:[#allocation16 + $0x60] sm:$0xff]
        %v1967 = vld [vmem:[#allocation16 + $0x68] sm:$0xff]
        %v1968 = vld [vmem:[#allocation16 + $0x70] sm:$0xff]
        %v1969 = vld [vmem:[#allocation16 + $0x78] sm:$0xff]
        %v1971 = vlaneseq
        %v1972 = vshrl.u32 %v1971, 7
        %v1973 = vsub.s32 0, %v1972
        %v1974 = vrot.slane %v661, %v1973
        %1976 = vmatprep.subr.mxu0 0.0
        %1977 = vmatpush1.msra.mxu0 %v1969
        %1978 = vmatprep.subr.mxu0 0.0
        %1979 = vmatpush1.msra.mxu0 %v1968
        %1980 = vmatprep.subr.mxu0 0.0
        %1981 = vmatpush1.msra.mxu0 %v1967
        %1982 = vmatprep.subr.mxu0 0.0
        %1983 = vmatpush1.msra.mxu0 %v1966
        %1984 = vmatprep.subr.mxu0 0.0
        %1985 = vmatpush1.msra.mxu0 %v1965
        %1986 = vmatprep.subr.mxu0 0.0
        %1987 = vmatpush1.msra.mxu0 %v1964
        %1988 = vmatprep.subr.mxu0 0.0
        %1989 = vmatpush1.msra.mxu0 %v1963
        %1990 = vmatprep.subr.mxu0 0.0
        %1991 = vmatpush1.msra.mxu0 %v1962
        %1992 = vmatprep.subr.mxu0 0.0
        %1993 = vmatpush1.msra.mxu0 %v1961
        %1994 = vmatprep.subr.mxu0 0.0
        %1995 = vmatpush1.msra.mxu0 %v1960
        %1996 = vmatprep.subr.mxu0 0.0
        %1997 = vmatpush1.msra.mxu0 %v1959
        %1998 = vmatprep.subr.mxu0 0.0
        %1999 = vmatpush1.msra.mxu0 %v1958
        %2000 = vmatprep.subr.mxu0 0.0
        %2001 = vmatpush1.msra.mxu0 %v1957
        %2002 = vmatprep.subr.mxu0 0.0
        %2003 = vmatpush1.msra.mxu0 %v1956
        %2004 = vmatprep.subr.mxu0 0.0
        %2005 = vmatpush1.msra.mxu0 %v1955
        %2006 = vmatprep.subr.mxu0 0.0
        %2007 = vmatpush1.msra.mxu0 %v1954
        %2008 = vmatprep.subr.mxu0 0.0
        %2009 = vmatpush2.msra.mxu0 0.0
        %2010 = vmatprep.subr.mxu0 0.0
        %2011 = vmatpush2.msra.mxu0 0.0
        %2012 = vmatprep.subr.mxu0 0.0
        %2013 = vmatpush2.msra.mxu0 0.0
        %2014 = vmatprep.subr.mxu0 0.0
        %2015 = vmatpush2.msra.mxu0 0.0
        %2016 = vmatprep.subr.mxu0 0.0
        %2017 = vmatpush2.msra.mxu0 0.0
        %2018 = vmatprep.subr.mxu0 0.0
        %2019 = vmatpush2.msra.mxu0 0.0
        %2020 = vmatprep.subr.mxu0 0.0
        %2021 = vmatpush2.msra.mxu0 0.0
        %2022 = vmatprep.subr.mxu0 0.0
        %2023 = vmatpush2.msra.mxu0 0.0
        %2024 = vmatprep.subr.mxu0 0.0
        %2025 = vmatpush2.msra.mxu0 0.0
        %2026 = vmatprep.subr.mxu0 0.0
        %2027 = vmatpush2.msra.mxu0 0.0
        %2028 = vmatprep.subr.mxu0 0.0
        %2029 = vmatpush2.msra.mxu0 0.0
        %2030 = vmatprep.subr.mxu0 0.0
        %2031 = vmatpush2.msra.mxu0 0.0
        %2032 = vmatprep.subr.mxu0 0.0
        %2033 = vmatpush2.msra.mxu0 0.0
        %2034 = vmatprep.subr.mxu0 0.0
        %2035 = vmatpush2.msra.mxu0 0.0
        %2036 = vmatprep.subr.mxu0 0.0
        %2037 = vmatpush2.msra.mxu0 0.0
        %2038 = vmatprep.subr.mxu0 0.0
        %2039 = vmatpush2.msra.mxu0 0.0
        %2040 = vmatprep.mubr.f32.mxu0 0.0
        %2041 = vmatmul.mubr.f32.gmra.mxu0 %v1953
        %v2042 = vpop.f32.mrf.mxu0
        %v2043 = vadd.f32 %v1974, %v2042
        %v2044 = vpop.f32.mrf.mxu0
        %2045 = vdwg.mxu0
        %vm2046 = vcmp.lt.s32.totalorder %v1366, 16
        %v2047 = vsel %vm2046, 1, 0
        %vm2048 = vcmp.eq.s32.totalorder %v2047, 1
        %v2049 = vsel %vm2048, %v2043, -1e+30
        %2050 = vmax.xlane.f32.xlu0 %v2049
        %v2051 = vpop.xlane.xlu0 %2050
        %v2052 = vsub.f32 %v2049, %v2051
        %v2053 = vmul.f32 %v2052, 1.442695
        %v2054 = vpow.pop %v2053
        %2055 = vadd.xlane.f32.xlu0 %v2054
        %v2056 = vpop.xlane.xlu0 %2055
        %v2057 = vrcp.pop %v2056
        %v2058 = vmul.f32 %v2054, %v2057
        %2059 = vst [vmem:[%s372] sm:$0xff] %v2058
        %2060 = vst [vmem:[#allocation3] sm:$0xff] %v1234
        %2061 = vst [vmem:[#allocation19] sm:$0xff] %v1234
        %s2062 = sand.u32 %s189, 1
        %s2063 = scalar_lea.sflag [#allocation9], %s2062
        %s2064 = sand.u32 %s189, 1
        %s2065 = smul.addr %s2064, 8
        %s2066 = scalar_lea.vmem [#allocation18], %s2065
        // Predicated region
        $region145: #{tpu_custom_call.1} parent=47 // pred_check
          %p2067 = pneg %p199
        $region146: #{tpu_custom_call.1} parent=47 // pred_check_branch
          %2069 = sbr.rel (%p2067) target = $region148
        $region147: #{tpu_custom_call.1} parent=47 // pred_region
          %s2071 = ssub.s32 128, 128
          %2072 = vsyncadd %s2063, %s2071
          %s2073 = smul.addr %s34, 128
          %s2074 = scalar_lea.hbm %s9, %s2073
          %s2076 = sshll.u32 %s2066, 4
          %s2077 = int_to_ptr.vmem [resolvable:$true] %s2076
          %2079 = dma.vmem_to_hbm [thread:$0]  %s2077, 128, %s2074, %s2063
        $region148: #{tpu_custom_call.1} parent=47 // pred_fallthru
          _
        // Predicated region
        $region149: #{tpu_custom_call.1} parent=47 // pred_check
          %p2080 = pneg %p220
        $region150: #{tpu_custom_call.1} parent=47 // pred_check_branch
          %2082 = sbr.rel (%p2080) target = $region152
        $region151: #{tpu_custom_call.1} parent=47 // pred_region
          %s2084 = ssub.s32 128, 128
          %2085 = vsyncadd [#allocation20], %s2084
          %s2087 = sshll.u32 [#allocation19], 4
          %s2088 = int_to_ptr.vmem [resolvable:$true] %s2087
          %2090 = dma.vmem_to_hbm [thread:$0]  %s2088, 128, %s10, [#allocation20]
        $region152: #{tpu_custom_call.1} parent=47 // pred_fallthru
          _
        // Predicated region
        $region153: #{tpu_custom_call.1} parent=47 // pred_check
          %p2091 = pneg %p220
        $region154: #{tpu_custom_call.1} parent=47 // pred_check_branch
          %2093 = sbr.rel (%p2091) target = $region156
        $region155: #{tpu_custom_call.1} parent=47 // pred_region
          %2094 = dma.done [#allocation20], 128
        $region156: #{tpu_custom_call.1} parent=47 // pred_fallthru
          _
      $region48: #{tpu_custom_call.1} parent=5 // pred_fallthru
        _
      %p2095 = scmp.le.s32.totalorder 2, %s29
      // Predicated region
      $region157: #{tpu_custom_call.1} parent=5 // pred_check
        %p2096 = pneg %p2095
      $region158: #{tpu_custom_call.1} parent=5 // pred_check_branch
        %2098 = sbr.rel (%p2096) target = $region160
      $region159: #{tpu_custom_call.1} parent=5 // pred_region
        %s2099 = ssub.s32 %s29, 2
        // Predicated region
        $region161: #{tpu_custom_call.1} parent=159 // pred_check
          %p2100 = pneg %p205
        $region162: #{tpu_custom_call.1} parent=159 // pred_check_branch
          %2102 = sbr.rel (%p2100) target = $region164
        $region163: #{tpu_custom_call.1} parent=159 // pred_region
          %s2103 = sand.u32 %s190, 1
          %s2104 = scalar_lea.sflag [#allocation9], %s2103
          %s2105 = sand.u32 %s190, 1
          %s2106 = smul.addr %s2105, 8
          %s2107 = scalar_lea.vmem [#allocation18], %s2106
          %2108 = dma.done %s2104, 128
        $region164: #{tpu_custom_call.1} parent=159 // pred_fallthru
          _
      $region160: #{tpu_custom_call.1} parent=5 // pred_fallthru
        _
    $region6: #{tpu_custom_call.1} parent=1 // loop_footer
      %s33 = sadd.s32 1, %s29
    $region7: #{tpu_custom_call.1} parent=1 // loop_footer_branch
      %28 = sbr.rel target = $region3
    $region8: #{tpu_custom_call.1} parent=1 // loop_exit
      _
    %2109 = vsyncpa [#allocation8], 1
    %s2110 = scalar_lea.sflag [#allocation8], 1
    %2111 = vsyncpa %s2110, 1
    %2112 = vsyncpa [#allocation11], 1
    %2113 = vsyncpa [#allocation14], 1
    %2114 = vsyncpa [#allocation17], 1
    %2115 = vsyncpa [#allocation9], 1
    %s2116 = scalar_lea.sflag [#allocation9], 1
    %2117 = vsyncpa %s2116, 1
    %2118 = vsyncpa [#allocation20], 1
  %2119 = vsyncmov [#allocation4]
  %s2120 = vpop.sfrf %2119
  %p2121 = scmp.eq.s32.totalorder %s2120, 0
  %p2122 = pneg %p2121
  %2124 = shalt.err (%p2122)
  %s2125 = scalar_lea.sflag [#allocation4], 1
  %2126 = vsyncmov %s2125
  %s2127 = vpop.sfrf %2126
  %p2128 = scmp.eq.s32.totalorder %s2127, 0
  %p2129 = pneg %p2128
  %2131 = shalt.err (%p2129)
  %s2132 = scalar_lea.sflag [#allocation4], 2
  %2133 = vsyncmov %s2132
  %s2134 = vpop.sfrf %2133
  %p2135 = scmp.eq.s32.totalorder %s2134, 0
  %p2136 = pneg %p2135
  %2138 = shalt.err (%p2136)
  %s2139 = scalar_lea.sflag [#allocation4], 3
  %2140 = vsyncmov %s2139
  %s2141 = vpop.sfrf %2140
  %p2142 = scmp.eq.s32.totalorder %s2141, 0
  %p2143 = pneg %p2142
  %2145 = shalt.err (%p2143)
  %s2146 = scalar_lea.sflag [#allocation4], 4
  %2147 = vsyncmov %s2146
  %s2148 = vpop.sfrf %2147
  %p2149 = scmp.eq.s32.totalorder %s2148, 0
  %p2150 = pneg %p2149
  %2152 = shalt.err (%p2150)
  %s2153 = scalar_lea.sflag [#allocation4], 5
  %2154 = vsyncmov %s2153
  %s2155 = vpop.sfrf %2154
  %p2156 = scmp.eq.s32.totalorder %s2155, 0
  %p2157 = pneg %p2156
  %2159 = shalt.err (%p2157)
  %s2160 = scalar_lea.sflag [#allocation4], 6
  %2161 = vsyncmov %s2160
  %s2162 = vpop.sfrf %2161
  %p2163 = scmp.eq.s32.totalorder %s2162, 0
  %p2164 = pneg %p2163
  %2166 = shalt.err (%p2164)
  %s2167 = scalar_lea.sflag [#allocation4], 7
  %2168 = vsyncmov %s2167
  %s2169 = vpop.sfrf %2168
  %p2170 = scmp.eq.s32.totalorder %s2169, 0
  %p2171 = pneg %p2170
  %2173 = shalt.err (%p2171)
  %s2174 = scalar_lea.sflag [#allocation4], 8
  %2175 = vsyncmov %s2174
  %s2176 = vpop.sfrf %2175
  %p2177 = scmp.eq.s32.totalorder %s2176, 0
  %p2178 = pneg %p2177
  %2180 = shalt.err (%p2178)
  %s2181 = scalar_lea.sflag [#allocation4], 9
  %2182 = vsyncmov %s2181
  %s2183 = vpop.sfrf %2182
  %p2184 = scmp.eq.s32.totalorder %s2183, 0
  %p2185 = pneg %p2184
  %2187 = shalt.err (%p2185)
  %s2188 = scalar_lea.sflag [#allocation4], 10
  %2189 = vsyncmov %s2188
  %s2190 = vpop.sfrf %2189
  %p2191 = scmp.eq.s32.totalorder %s2190, 0
  %p2192 = pneg %p2191
  %2194 = shalt.err (%p2192)
  %s2195 = scalar_lea.sflag [#allocation4], 11
  %2196 = vsyncmov %s2195
  %s2197 = vpop.sfrf %2196
  %p2198 = scmp.eq.s32.totalorder %s2197, 0
  %p2199 = pneg %p2198
  %2201 = shalt.err (%p2199)
  %s2202 = scalar_lea.sflag [#allocation4], 12
  %2203 = vsyncmov %s2202
  %s2204 = vpop.sfrf %2203
  %p2205 = scmp.eq.s32.totalorder %s2204, 0
  %p2206 = pneg %p2205
  %2208 = shalt.err (%p2206)
  %s2209 = scalar_lea.sflag [#allocation4], 13
  %2210 = vsyncmov %s2209
  %s2211 = vpop.sfrf %2210
  %p2212 = scmp.eq.s32.totalorder %s2211, 0
  %p2213 = pneg %p2212
  %2215 = shalt.err (%p2213)
  %s2216 = scalar_lea.sflag [#allocation4], 14
  %2217 = vsyncmov %s2216
  %s2218 = vpop.sfrf %2217
  %p2219 = scmp.eq.s32.totalorder %s2218, 0
  %p2220 = pneg %p2219
  %2222 = shalt.err (%p2220)
  %s2223 = scalar_lea.sflag [#allocation4], 15
  %2224 = vsyncmov %s2223
  %s2225 = vpop.sfrf %2224
  %p2226 = scmp.eq.s32.totalorder %s2225, 0
  %p2227 = pneg %p2226
  %2229 = shalt.err (%p2227)

</llo_original>
